<compile_context>
chip_gen: v7x
topology: tpu7x:2x2x1
jax: 0.10.0
libtpu: 0.0.40
codegen_flags: <defaults>
</compile_context>

<pallas_src>
import functools

import jax
import jax.numpy as jnp
from jax.experimental import pallas as pl
from jax.experimental.pallas import tpu as pltpu

LANES = 128
# Architectural constants of the torch module (conv output channels; conv3
# output spatial 8x8 feeds the fixed fc1 = Linear(1536, 384)).
C1_OUT, C2_OUT, C3_OUT = 6, 12, 24
CONV_GRID = 2  # M-blocks per conv GEMM (>= 2 so both v7x TensorCores get work)


def _round_up(x, m):
    return ((x + m - 1) // m) * m


def _pad_to(a, shape):
    pads = [(0, t - s) for s, t in zip(a.shape, shape)]
    if all(p == (0, 0) for p in pads):
        return a
    return jnp.pad(a, pads)


# ----------------------------------------------------------------------------
# Pallas kernel 1: conv GEMM (im2col patches) + bias + ReLU, M-tiled grid
# ----------------------------------------------------------------------------
def _gemm_bias_relu_kernel(x_ref, w_ref, b_ref, o_ref):
    acc = jnp.dot(x_ref[...], w_ref[...], preferred_element_type=jnp.float32)
    acc = acc + b_ref[...]                        # (1, N) f32 bias broadcast
    o_ref[...] = jnp.maximum(acc, 0.0).astype(o_ref.dtype)


def conv_gemm_relu(patches, w2, b2, tm):
    """relu(patches @ w2 + b2); patches:(Mp,Kp) bf16, w2:(Kp,128) bf16."""
    Mp, K = patches.shape
    Kw, N = w2.shape
    assert K == Kw and Mp % tm == 0, (patches.shape, w2.shape, tm)
    return pl.pallas_call(
        _gemm_bias_relu_kernel,
        out_shape=jax.ShapeDtypeStruct((Mp, N), jnp.bfloat16),
        grid=(Mp // tm,),
        in_specs=[
            pl.BlockSpec((tm, K), lambda i: (i, 0)),
            pl.BlockSpec((K, N), lambda i: (0, 0)),
            pl.BlockSpec((1, N), lambda i: (0, 0)),
        ],
        out_specs=pl.BlockSpec((tm, N), lambda i: (i, 0)),
        compiler_params=pltpu.CompilerParams(
            dimension_semantics=("parallel",)),
    )(patches, w2, b2)


# ----------------------------------------------------------------------------
# Pallas kernel 2: fused fc1 + fc2 + fc3 + masked softmax (single launch)
# ----------------------------------------------------------------------------
def _fc_stack_kernel(x_ref, w1_ref, b1_ref, w2_ref, b2_ref, w3_ref, b3_ref,
                     o_ref, *, n_actions):
    h = jnp.dot(x_ref[...], w1_ref[...], preferred_element_type=jnp.float32)
    h = jnp.maximum(h + b1_ref[...], 0.0)
    h = jnp.dot(h.astype(w2_ref.dtype), w2_ref[...],
                preferred_element_type=jnp.float32)
    h = jnp.maximum(h + b2_ref[...], 0.0)
    logits = jnp.dot(h.astype(w3_ref.dtype), w3_ref[...],
                     preferred_element_type=jnp.float32)
    logits = logits + b3_ref[...]
    # Mask padded action lanes so they don't pollute the softmax max / sum.
    lane = jax.lax.broadcasted_iota(jnp.int32, logits.shape, 1)
    logits = jnp.where(lane < n_actions, logits, jnp.float32(-1e30))
    m = jnp.max(logits, axis=-1, keepdims=True)
    e = jnp.exp(logits - m)
    denom = jnp.sum(e, axis=-1, keepdims=True)
    o_ref[...] = (e / denom).astype(o_ref.dtype)   # exact divide (prob output)


def fc_stack_softmax(x, w1, b1, w2, b2, w3, b3, n_actions):
    Mp = x.shape[0]
    N = w3.shape[1]
    kern = functools.partial(_fc_stack_kernel, n_actions=n_actions)
    vmem = pl.BlockSpec(memory_space=pltpu.MemorySpace.VMEM)
    # M = batch rows (tiny); all weights (<1.4 MB bf16) live in VMEM at once.
    return pl.pallas_call(
        kern,
        out_shape=jax.ShapeDtypeStruct((Mp, N), jnp.float32),
        in_specs=[vmem] * 7,
        out_specs=vmem,
    )(x, w1, b1, w2, b2, w3, b3)


# ----------------------------------------------------------------------------
# Conv2d (stride 2, k=3, no padding) via real-channel NHWC im2col + Pallas GEMM
# ----------------------------------------------------------------------------
def _im2col_nhwc(x, k, s):
    """x:(B,H,W,Cin real) -> patches:(B*Ho*Wo, k*k*Cin), K-order (kh, kw, c)."""
    B, H, W, C = x.shape
    Ho = (H - k) // s + 1
    Wo = (W - k) // s + 1
    cols = []
    for i in range(k):
        for j in range(k):
            cols.append(
                x[:, i: i + s * (Ho - 1) + 1: s, j: j + s * (Wo - 1) + 1: s, :])
    patches = jnp.stack(cols, axis=3)             # (B, Ho, Wo, k*k, C)
    return patches.reshape(B * Ho * Wo, k * k * C), Ho, Wo


def conv2d_relu_nhwc(x, w2, b2, stride=2, ksize=3):
    """x:(B,H,W,Cin) bf16 with REAL channels only; w2:(Kp,128) bf16 repacked."""
    B = x.shape[0]
    patches, Ho, Wo = _im2col_nhwc(x, ksize, stride)   # (M, 9*Cin) bf16
    M, _ = patches.shape
    Kp, N = w2.shape
    tm = _round_up(-(-M // CONV_GRID), 8)              # grid of exactly 2
    Mp = CONV_GRID * tm
    patches = _pad_to(patches, (Mp, Kp))               # small now (<= 0.7 MB)
    y = conv_gemm_relu(patches, w2, b2, tm)            # (Mp, 128) bf16
    return y[:M].reshape(B, Ho, Wo, N)                 # lane-dense, padded cout


# ----------------------------------------------------------------------------
# Parameters (deterministic, PyTorch-default-style uniform init) + repacking
# ----------------------------------------------------------------------------
def init_params(key, state_size, action_size):
    def uinit(k, shape, fan_in):
        bound = 1.0 / (fan_in ** 0.5)
        return jax.random.uniform(k, shape, jnp.float32, -bound, bound)

    ks = jax.random.split(key, 12)
    p = {}
    p["conv1_w"] = uinit(ks[0], (C1_OUT, state_size, 3, 3), state_size * 9)
    p["conv1_b"] = uinit(ks[1], (C1_OUT,), state_size * 9)
    p["conv2_w"] = uinit(ks[2], (C2_OUT, C1_OUT, 3, 3), C1_OUT * 9)
    p["conv2_b"] = uinit(ks[3], (C2_OUT,), C1_OUT * 9)
    p["conv3_w"] = uinit(ks[4], (C3_OUT, C2_OUT, 3, 3), C2_OUT * 9)
    p["conv3_b"] = uinit(ks[5], (C3_OUT,), C2_OUT * 9)
    # FC weights stored as (in, out) for direct x @ w
    p["fc1_w"] = uinit(ks[6], (1536, 384), 1536)
    p["fc1_b"] = uinit(ks[7], (384,), 1536)
    p["fc2_w"] = uinit(ks[8], (384, 96), 384)
    p["fc2_b"] = uinit(ks[9], (96,), 384)
    p["fc3_w"] = uinit(ks[10], (96, action_size), 96)
    p["fc3_b"] = uinit(ks[11], (action_size,), 96)
    return p


def prepare_params(p):
    """One-time repack into bf16, lane-dense, real-channel-K layouts."""
    def prep_conv(w, b):
        Cout, Cin, k, _ = w.shape
        wt = jnp.transpose(w, (2, 3, 1, 0))                 # (k, k, Cin, Cout)
        w2 = wt.reshape(k * k * Cin, Cout)                  # K order (kh,kw,c)
        Kp = _round_up(k * k * Cin, LANES)                  # 36/54/108 -> 128
        w2 = _pad_to(w2, (Kp, LANES)).astype(jnp.bfloat16)
        b2 = _pad_to(b.reshape(1, Cout), (1, LANES)).astype(jnp.float32)
        return w2, b2

    q = {}
    q["c1_w"], q["c1_b"] = prep_conv(p["conv1_w"], p["conv1_b"])
    q["c2_w"], q["c2_b"] = prep_conv(p["conv2_w"], p["conv2_b"])
    q["c3_w"], q["c3_b"] = prep_conv(p["conv3_w"], p["conv3_b"])

    # fc1: torch flattens NCHW (c=24, h=8, w=8); our activations flatten (h,w,c).
    C3, Hf, Wf = C3_OUT, 8, 8
    w1 = p["fc1_w"].reshape(C3, Hf, Wf, 384).transpose(1, 2, 0, 3)
    q["fc1_w"] = w1.reshape(C3 * Hf * Wf, 384).astype(jnp.bfloat16)   # (1536,384)
    q["fc1_b"] = p["fc1_b"].reshape(1, 384).astype(jnp.float32)
    q["fc2_w"] = _pad_to(p["fc2_w"], (384, LANES)).astype(jnp.bfloat16)
    q["fc2_b"] = _pad_to(p["fc2_b"].reshape(1, 96), (1, LANES)).astype(jnp.float32)
    n_act = p["fc3_w"].shape[1]
    q["fc3_w"] = _pad_to(p["fc3_w"], (LANES, LANES)).astype(jnp.bfloat16)
    q["fc3_b"] = _pad_to(p["fc3_b"].reshape(1, n_act), (1, LANES)).astype(jnp.float32)
    return q


# ----------------------------------------------------------------------------
# Forward pass (mirrors CONV.forward)
# ----------------------------------------------------------------------------
@functools.partial(jax.jit, static_argnums=(2,))
def conv_net_forward(prep, x_nchw, action_size):
    # Single NCHW -> NHWC transpose + bf16 cast on the network input.
    x = jnp.transpose(x_nchw, (0, 2, 3, 1)).astype(jnp.bfloat16)
    # Real-channel slices before each im2col (padded lanes never enter K).
    x = conv2d_relu_nhwc(x, prep["c1_w"], prep["c1_b"])                 # (B,35,35,128)
    x = conv2d_relu_nhwc(x[..., :C1_OUT], prep["c2_w"], prep["c2_b"])   # (B,17,17,128)
    x = conv2d_relu_nhwc(x[..., :C2_OUT], prep["c3_w"], prep["c3_b"])   # (B, 8, 8,128)
    B = x.shape[0]
    x = x[..., :C3_OUT].reshape(B, -1)                 # (B, 1536), (h,w,c) order
    Mp = _round_up(max(B, 8), 8)                       # sublane-align rows
    x = _pad_to(x, (Mp, x.shape[1]))
    y = fc_stack_softmax(x, prep["fc1_w"], prep["fc1_b"],
                         prep["fc2_w"], prep["fc2_b"],
                         prep["fc3_w"], prep["fc3_b"], action_size)
    return y[:B, :action_size]


if __name__ == "__main__":
    # Spatial size 71 makes the conv stack produce 24 x 8 x 8 = 1536 features,
    # matching the fixed fc1 input size in the PyTorch module.
    state_size = 4      # input channels
    action_size = 6
    batch = 2
    H = W = 71

    key = jax.random.PRNGKey(0)
    k_param, k_x = jax.random.split(key)
    params = init_params(k_param, state_size, action_size)
    prep = prepare_params(params)   # one-time bf16 padded / permuted layouts
    x = jax.random.normal(k_x, (batch, state_size, H, W), dtype=jnp.float32)

    out = jax.block_until_ready(conv_net_forward(prep, x, action_size))

    assert out.shape == (batch, action_size), out.shape
    assert bool(jnp.all(jnp.isfinite(out)))
    # softmax rows sum to 1 (exact division in-kernel)
    assert bool(jnp.allclose(jnp.sum(out, axis=1), 1.0, atol=1e-3))
    print("KERNEL_OK")
</pallas_src>

<mosaic_0001>
module attributes {stable_mosaic.version = 11 : i64} {
  func.func @_gemm_bias_relu_kernel(%arg0: i32, %arg1: memref<1232x128xbf16, #tpu.memory_space<vmem>>, %arg2: memref<128x128xbf16, #tpu.memory_space<vmem>>, %arg3: memref<1x128xf32, #tpu.memory_space<vmem>>, %arg4: memref<1232x128xbf16, #tpu.memory_space<vmem>>) attributes {dimension_semantics = [#tpu.dimension_semantics<parallel>], iteration_bounds = array<i64: 2>, scalar_prefetch = 0 : i64, scratch_operands = 0 : i64, tpu.core_type = #tpu.core_type<tc>, window_params = [{transform_indices = @transform_0, window_bounds = array<i64: 1232, 128>}, {pipeline_mode = #tpu.pipeline_mode<synchronous>, transform_indices = @transform_1, window_bounds = array<i64: 128, 128>}, {pipeline_mode = #tpu.pipeline_mode<synchronous>, transform_indices = @transform_2, window_bounds = array<i64: 1, 128>}, {transform_indices = @transform_3, window_bounds = array<i64: 1232, 128>}]} {
    %c0 = arith.constant 0 : index
    %c0_0 = arith.constant 0 : index
    %0 = vector.load %arg1[%c0, %c0_0] : memref<1232x128xbf16, #tpu.memory_space<vmem>>, vector<1232x128xbf16>
    %c0_1 = arith.constant 0 : index
    %c0_2 = arith.constant 0 : index
    %1 = vector.load %arg2[%c0_1, %c0_2] : memref<128x128xbf16, #tpu.memory_space<vmem>>, vector<128x128xbf16>
    %cst = arith.constant dense<0.000000e+00> : vector<1232x128xf32>
    %2 = tpu.matmul %0, %1, %cst {dimension_numbers = #tpu.dot_dimension_numbers<[1], [0], [0], [1], [0, 0, 1, 1], [], []>} : vector<1232x128xbf16>, vector<128x128xbf16>, vector<1232x128xf32> -> vector<1232x128xf32>
    %c0_3 = arith.constant 0 : index
    %c0_4 = arith.constant 0 : index
    %3 = vector.load %arg3[%c0_3, %c0_4] : memref<1x128xf32, #tpu.memory_space<vmem>>, vector<1x128xf32>
    %4 = vector.broadcast %3 : vector<1x128xf32> to vector<1232x128xf32>
    %5 = arith.addf %2, %4 : vector<1232x128xf32>
    %cst_5 = arith.constant 0.000000e+00 : f32
    %6 = vector.broadcast %cst_5 : f32 to vector<1232x128xf32>
    %7 = arith.maximumf %5, %6 : vector<1232x128xf32>
    %8 = arith.truncf %7 : vector<1232x128xf32> to vector<1232x128xbf16>
    %c0_6 = arith.constant 0 : index
    %c0_7 = arith.constant 0 : index
    %9 = vector.load %arg4[%c0_6, %c0_7] : memref<1232x128xbf16, #tpu.memory_space<vmem>>, vector<1232x128xbf16>
    tpu.vector_store %arg4[%c0_6, %c0_7], %8 {strides = array<i32>} : memref<1232x128xbf16, #tpu.memory_space<vmem>>, vector<1232x128xbf16>,
    return
  }
  func.func @transform_0(%arg0: i32) -> (i32, i32) {
    %c0_i32 = arith.constant 0 : i32
    %c0_i32_0 = arith.constant 0 : i32
    return %arg0, %c0_i32 : i32, i32
  }
  func.func @transform_1(%arg0: i32) -> (i32, i32) {
    %c0_i32 = arith.constant 0 : i32
    %c0_i32_0 = arith.constant 0 : i32
    %c0_i32_1 = arith.constant 0 : i32
    return %c0_i32, %c0_i32_0 : i32, i32
  }
  func.func @transform_2(%arg0: i32) -> (i32, i32) {
    %c0_i32 = arith.constant 0 : i32
    %c0_i32_0 = arith.constant 0 : i32
    %c0_i32_1 = arith.constant 0 : i32
    return %c0_i32, %c0_i32_0 : i32, i32
  }
  func.func @transform_3(%arg0: i32) -> (i32, i32) {
    %c0_i32 = arith.constant 0 : i32
    %c0_i32_0 = arith.constant 0 : i32
    return %arg0, %c0_i32 : i32, i32
  }
}

module attributes {stable_mosaic.version = 11 : i64} {
  func.func @_gemm_bias_relu_kernel(%arg0: i32, %arg1: memref<296x128xbf16, #tpu.memory_space<vmem>>, %arg2: memref<128x128xbf16, #tpu.memory_space<vmem>>, %arg3: memref<1x128xf32, #tpu.memory_space<vmem>>, %arg4: memref<296x128xbf16, #tpu.memory_space<vmem>>) attributes {dimension_semantics = [#tpu.dimension_semantics<parallel>], iteration_bounds = array<i64: 2>, scalar_prefetch = 0 : i64, scratch_operands = 0 : i64, tpu.core_type = #tpu.core_type<tc>, window_params = [{transform_indices = @transform_0, window_bounds = array<i64: 296, 128>}, {pipeline_mode = #tpu.pipeline_mode<synchronous>, transform_indices = @transform_1, window_bounds = array<i64: 128, 128>}, {pipeline_mode = #tpu.pipeline_mode<synchronous>, transform_indices = @transform_2, window_bounds = array<i64: 1, 128>}, {transform_indices = @transform_3, window_bounds = array<i64: 296, 128>}]} {
    %c0 = arith.constant 0 : index
    %c0_0 = arith.constant 0 : index
    %0 = vector.load %arg1[%c0, %c0_0] : memref<296x128xbf16, #tpu.memory_space<vmem>>, vector<296x128xbf16>
    %c0_1 = arith.constant 0 : index
    %c0_2 = arith.constant 0 : index
    %1 = vector.load %arg2[%c0_1, %c0_2] : memref<128x128xbf16, #tpu.memory_space<vmem>>, vector<128x128xbf16>
    %cst = arith.constant dense<0.000000e+00> : vector<296x128xf32>
    %2 = tpu.matmul %0, %1, %cst {dimension_numbers = #tpu.dot_dimension_numbers<[1], [0], [0], [1], [0, 0, 1, 1], [], []>} : vector<296x128xbf16>, vector<128x128xbf16>, vector<296x128xf32> -> vector<296x128xf32>
    %c0_3 = arith.constant 0 : index
    %c0_4 = arith.constant 0 : index
    %3 = vector.load %arg3[%c0_3, %c0_4] : memref<1x128xf32, #tpu.memory_space<vmem>>, vector<1x128xf32>
    %4 = vector.broadcast %3 : vector<1x128xf32> to vector<296x128xf32>
    %5 = arith.addf %2, %4 : vector<296x128xf32>
    %cst_5 = arith.constant 0.000000e+00 : f32
    %6 = vector.broadcast %cst_5 : f32 to vector<296x128xf32>
    %7 = arith.maximumf %5, %6 : vector<296x128xf32>
    %8 = arith.truncf %7 : vector<296x128xf32> to vector<296x128xbf16>
    %c0_6 = arith.constant 0 : index
    %c0_7 = arith.constant 0 : index
    %9 = vector.load %arg4[%c0_6, %c0_7] : memref<296x128xbf16, #tpu.memory_space<vmem>>, vector<296x128xbf16>
    tpu.vector_store %arg4[%c0_6, %c0_7], %8 {strides = array<i32>} : memref<296x128xbf16, #tpu.memory_space<vmem>>, vector<296x128xbf16>,
    return
  }
  func.func @transform_0(%arg0: i32) -> (i32, i32) {
    %c0_i32 = arith.constant 0 : i32
    %c0_i32_0 = arith.constant 0 : i32
    return %arg0, %c0_i32 : i32, i32
  }
  func.func @transform_1(%arg0: i32) -> (i32, i32) {
    %c0_i32 = arith.constant 0 : i32
    %c0_i32_0 = arith.constant 0 : i32
    %c0_i32_1 = arith.constant 0 : i32
    return %c0_i32, %c0_i32_0 : i32, i32
  }
  func.func @transform_2(%arg0: i32) -> (i32, i32) {
    %c0_i32 = arith.constant 0 : i32
    %c0_i32_0 = arith.constant 0 : i32
    %c0_i32_1 = arith.constant 0 : i32
    return %c0_i32, %c0_i32_0 : i32, i32
  }
  func.func @transform_3(%arg0: i32) -> (i32, i32) {
    %c0_i32 = arith.constant 0 : i32
    %c0_i32_0 = arith.constant 0 : i32
    return %arg0, %c0_i32 : i32, i32
  }
}

module attributes {stable_mosaic.version = 11 : i64} {
  func.func @_gemm_bias_relu_kernel(%arg0: i32, %arg1: memref<64x128xbf16, #tpu.memory_space<vmem>>, %arg2: memref<128x128xbf16, #tpu.memory_space<vmem>>, %arg3: memref<1x128xf32, #tpu.memory_space<vmem>>, %arg4: memref<64x128xbf16, #tpu.memory_space<vmem>>) attributes {dimension_semantics = [#tpu.dimension_semantics<parallel>], iteration_bounds = array<i64: 2>, scalar_prefetch = 0 : i64, scratch_operands = 0 : i64, tpu.core_type = #tpu.core_type<tc>, window_params = [{transform_indices = @transform_0, window_bounds = array<i64: 64, 128>}, {pipeline_mode = #tpu.pipeline_mode<synchronous>, transform_indices = @transform_1, window_bounds = array<i64: 128, 128>}, {pipeline_mode = #tpu.pipeline_mode<synchronous>, transform_indices = @transform_2, window_bounds = array<i64: 1, 128>}, {transform_indices = @transform_3, window_bounds = array<i64: 64, 128>}]} {
    %c0 = arith.constant 0 : index
    %c0_0 = arith.constant 0 : index
    %0 = vector.load %arg1[%c0, %c0_0] : memref<64x128xbf16, #tpu.memory_space<vmem>>, vector<64x128xbf16>
    %c0_1 = arith.constant 0 : index
    %c0_2 = arith.constant 0 : index
    %1 = vector.load %arg2[%c0_1, %c0_2] : memref<128x128xbf16, #tpu.memory_space<vmem>>, vector<128x128xbf16>
    %cst = arith.constant dense<0.000000e+00> : vector<64x128xf32>
    %2 = tpu.matmul %0, %1, %cst {dimension_numbers = #tpu.dot_dimension_numbers<[1], [0], [0], [1], [0, 0, 1, 1], [], []>} : vector<64x128xbf16>, vector<128x128xbf16>, vector<64x128xf32> -> vector<64x128xf32>
    %c0_3 = arith.constant 0 : index
    %c0_4 = arith.constant 0 : index
    %3 = vector.load %arg3[%c0_3, %c0_4] : memref<1x128xf32, #tpu.memory_space<vmem>>, vector<1x128xf32>
    %4 = vector.broadcast %3 : vector<1x128xf32> to vector<64x128xf32>
    %5 = arith.addf %2, %4 : vector<64x128xf32>
    %cst_5 = arith.constant 0.000000e+00 : f32
    %6 = vector.broadcast %cst_5 : f32 to vector<64x128xf32>
    %7 = arith.maximumf %5, %6 : vector<64x128xf32>
    %8 = arith.truncf %7 : vector<64x128xf32> to vector<64x128xbf16>
    %c0_6 = arith.constant 0 : index
    %c0_7 = arith.constant 0 : index
    %9 = vector.load %arg4[%c0_6, %c0_7] : memref<64x128xbf16, #tpu.memory_space<vmem>>, vector<64x128xbf16>
    tpu.vector_store %arg4[%c0_6, %c0_7], %8 {strides = array<i32>} : memref<64x128xbf16, #tpu.memory_space<vmem>>, vector<64x128xbf16>,
    return
  }
  func.func @transform_0(%arg0: i32) -> (i32, i32) {
    %c0_i32 = arith.constant 0 : i32
    %c0_i32_0 = arith.constant 0 : i32
    return %arg0, %c0_i32 : i32, i32
  }
  func.func @transform_1(%arg0: i32) -> (i32, i32) {
    %c0_i32 = arith.constant 0 : i32
    %c0_i32_0 = arith.constant 0 : i32
    %c0_i32_1 = arith.constant 0 : i32
    return %c0_i32, %c0_i32_0 : i32, i32
  }
  func.func @transform_2(%arg0: i32) -> (i32, i32) {
    %c0_i32 = arith.constant 0 : i32
    %c0_i32_0 = arith.constant 0 : i32
    %c0_i32_1 = arith.constant 0 : i32
    return %c0_i32, %c0_i32_0 : i32, i32
  }
  func.func @transform_3(%arg0: i32) -> (i32, i32) {
    %c0_i32 = arith.constant 0 : i32
    %c0_i32_0 = arith.constant 0 : i32
    return %arg0, %c0_i32 : i32, i32
  }
}

module attributes {stable_mosaic.version = 11 : i64} {
  func.func @_fc_stack_kernel(%arg0: memref<8x1536xbf16, #tpu.memory_space<vmem>>, %arg1: memref<1536x384xbf16, #tpu.memory_space<vmem>>, %arg2: memref<1x384xf32, #tpu.memory_space<vmem>>, %arg3: memref<384x128xbf16, #tpu.memory_space<vmem>>, %arg4: memref<1x128xf32, #tpu.memory_space<vmem>>, %arg5: memref<128x128xbf16, #tpu.memory_space<vmem>>, %arg6: memref<1x128xf32, #tpu.memory_space<vmem>>, %arg7: memref<8x128xf32, #tpu.memory_space<vmem>>) attributes {dimension_semantics = [], scalar_prefetch = 0 : i64, scratch_operands = 0 : i64, tpu.core_type = #tpu.core_type<tc>} {
    %c0 = arith.constant 0 : index
    %c0_0 = arith.constant 0 : index
    %0 = vector.load %arg0[%c0, %c0_0] : memref<8x1536xbf16, #tpu.memory_space<vmem>>, vector<8x1536xbf16>
    %c0_1 = arith.constant 0 : index
    %c0_2 = arith.constant 0 : index
    %1 = vector.load %arg1[%c0_1, %c0_2] : memref<1536x384xbf16, #tpu.memory_space<vmem>>, vector<1536x384xbf16>
    %cst = arith.constant dense<0.000000e+00> : vector<8x384xf32>
    %2 = tpu.matmul %0, %1, %cst {dimension_numbers = #tpu.dot_dimension_numbers<[1], [0], [0], [1], [0, 0, 1, 1], [], []>} : vector<8x1536xbf16>, vector<1536x384xbf16>, vector<8x384xf32> -> vector<8x384xf32>
    %c0_3 = arith.constant 0 : index
    %c0_4 = arith.constant 0 : index
    %3 = vector.load %arg2[%c0_3, %c0_4] : memref<1x384xf32, #tpu.memory_space<vmem>>, vector<1x384xf32>
    %4 = vector.broadcast %3 : vector<1x384xf32> to vector<8x384xf32>
    %5 = arith.addf %2, %4 : vector<8x384xf32>
    %cst_5 = arith.constant 0.000000e+00 : f32
    %6 = vector.broadcast %cst_5 : f32 to vector<8x384xf32>
    %7 = arith.maximumf %5, %6 : vector<8x384xf32>
    %8 = arith.truncf %7 : vector<8x384xf32> to vector<8x384xbf16>
    %c0_6 = arith.constant 0 : index
    %c0_7 = arith.constant 0 : index
    %9 = vector.load %arg3[%c0_6, %c0_7] : memref<384x128xbf16, #tpu.memory_space<vmem>>, vector<384x128xbf16>
    %cst_8 = arith.constant dense<0.000000e+00> : vector<8x128xf32>
    %10 = tpu.matmul %8, %9, %cst_8 {dimension_numbers = #tpu.dot_dimension_numbers<[1], [0], [0], [1], [0, 0, 1, 1], [], []>} : vector<8x384xbf16>, vector<384x128xbf16>, vector<8x128xf32> -> vector<8x128xf32>
    %c0_9 = arith.constant 0 : index
    %c0_10 = arith.constant 0 : index
    %11 = vector.load %arg4[%c0_9, %c0_10] : memref<1x128xf32, #tpu.memory_space<vmem>>, vector<1x128xf32>
    %12 = vector.broadcast %11 : vector<1x128xf32> to vector<8x128xf32>
    %13 = arith.addf %10, %12 : vector<8x128xf32>
    %cst_11 = arith.constant 0.000000e+00 : f32
    %14 = vector.broadcast %cst_11 : f32 to vector<8x128xf32>
    %15 = arith.maximumf %13, %14 : vector<8x128xf32>
    %16 = arith.truncf %15 : vector<8x128xf32> to vector<8x128xbf16>
    %c0_12 = arith.constant 0 : index
    %c0_13 = arith.constant 0 : index
    %17 = vector.load %arg5[%c0_12, %c0_13] : memref<128x128xbf16, #tpu.memory_space<vmem>>, vector<128x128xbf16>
    %cst_14 = arith.constant dense<0.000000e+00> : vector<8x128xf32>
    %18 = tpu.matmul %16, %17, %cst_14 {dimension_numbers = #tpu.dot_dimension_numbers<[1], [0], [0], [1], [0, 0, 1, 1], [], []>} : vector<8x128xbf16>, vector<128x128xbf16>, vector<8x128xf32> -> vector<8x128xf32>
    %c0_15 = arith.constant 0 : index
    %c0_16 = arith.constant 0 : index
    %19 = vector.load %arg6[%c0_15, %c0_16] : memref<1x128xf32, #tpu.memory_space<vmem>>, vector<1x128xf32>
    %20 = vector.broadcast %19 : vector<1x128xf32> to vector<8x128xf32>
    %21 = arith.addf %18, %20 : vector<8x128xf32>
    %22 = tpu.iota {dimensions = array<i32: 1>} : vector<8x128xi32>
    %c6_i32 = arith.constant 6 : i32
    %23 = vector.broadcast %c6_i32 : i32 to vector<8x128xi32>
    %24 = arith.cmpi slt, %22, %23 : vector<8x128xi32>
    %cst_17 = arith.constant -1.000000e+30 : f32
    %25 = vector.broadcast %cst_17 : f32 to vector<8x128xf32>
    %26 = arith.select %24, %21, %25 : vector<8x128xi1>, vector<8x128xf32>
    %cst_18 = arith.constant dense<0xFF800000> : vector<8xf32>
    %27 = vector.multi_reduction <maximumf>, %26, %cst_18 [1] : vector<8x128xf32> to vector<8xf32>
    %28 = vector.shape_cast %27 : vector<8xf32> to vector<8x1xf32>
    %29 = vector.broadcast %28 : vector<8x1xf32> to vector<8x128xf32>
    %30 = arith.subf %26, %29 : vector<8x128xf32>
    %31 = math.exp %30 : vector<8x128xf32>
    %cst_19 = arith.constant dense<0.000000e+00> : vector<8xf32>
    %32 = vector.multi_reduction <add>, %31, %cst_19 [1] : vector<8x128xf32> to vector<8xf32>
    %33 = vector.shape_cast %32 : vector<8xf32> to vector<8x1xf32>
    %34 = vector.broadcast %33 : vector<8x1xf32> to vector<8x128xf32>
    %35 = arith.divf %31, %34 : vector<8x128xf32>
    %c0_20 = arith.constant 0 : index
    %c0_21 = arith.constant 0 : index
    %36 = vector.load %arg7[%c0_20, %c0_21] : memref<8x128xf32, #tpu.memory_space<vmem>>, vector<8x128xf32>
    tpu.vector_store %arg7[%c0_20, %c0_21], %35 {strides = array<i32>} : memref<8x128xf32, #tpu.memory_space<vmem>>, vector<8x128xf32>,
    return
  }
}

</mosaic_0001>

<llo_original>
// kernel: conv_net_forward.4
$region0: #{conv_net_forward.4}
  #allocation0 [shape = 'u32[]', space=smem, size = 0x4, offset = 0x4, fixed_abs, tag = 'smem constant byte address 0x4 - core index']
  #allocation1 [shape = 'u32[144,128]{1,0:T(1,128)}', space=vmem, size = 0x12000, scoped, tag = 'internal scratch']
  %s0 = inlined_call_operand.vmem [shape: bf16[2464,128], index: 0, kind: input, shape index: {}]
  %s1 = inlined_call_operand.vmem [shape: bf16[128,128], index: 1, kind: input, shape index: {}]
  %s2 = inlined_call_operand.vmem [shape: f32[1,128], index: 2, kind: input, shape index: {}]
  %s3 = inlined_call_operand.vmem [shape: bf16[2464,128], index: 3, kind: output, shape index: {}]
  %s4 = sld [smem:[#allocation0]]
  $region45: #{conv_net_forward.4} parent=0
    _
  %s6 = ssub.s32 1, %s4
  %s7 = scalar_select 0, %s6, %s4
  loop: start=0, step=1, limit=4
  $region2: #{conv_net_forward.4} parent=0 // loop_pre_header
    _
  $region3: #{conv_net_forward.4} parent=0 // loop_header
    %s9 = sphi 0, %s13
    %p10 = scmp.ge.s32.totalorder %s9, 4
    %s19 = sphi 0, %s21
    %s22 = sphi 0, %s19
    %s23 = sphi 0, %s22
    %s39 = sphi 0, %s23
    %s43 = sphi 0, %s43
    %s45 = sphi 0, %s43
    %s46 = sphi 0, %s45
    %s60 = sphi 0, %s46
    %s64 = sphi 0, %s64
    %s66 = sphi 0, %s64
    %s67 = sphi 0, %s66
    %s81 = sphi 0, %s67
    %s87 = sphi 0, %s89
    %s90 = sphi 0, %s87
    %s91 = sphi 0, %s90
    %s107 = sphi 0, %s91
  $region4: #{conv_net_forward.4} parent=0 // loop_header_branch
    %12 = sbr.rel (%p10) target = $region8
  $region5: #{conv_net_forward.4} parent=0 // loop_body
    %s14 = ssub.s32 %s9, 1
    %s15 = ssub.s32 %s9, 2
    %s16 = sadd.s32 %s9, 1
    %s17 = ssub.s32 %s9, %s16
    %p18 = scmp.eq.s32.totalorder %s17, 0
    %s20 = sadd.s32 %s19, 1
    %s21 = scalar_select %p18, %s19, %s20
    %p24 = pneg %p18
    %p25 = scmp.eq.s32.totalorder %s9, 1
    %p26 = por %p24, %p25
    %p27 = scmp.ne.s32.totalorder %s19, %s22
    %p28 = scmp.eq.s32.totalorder %s9, 0
    %p29 = por %p27, %p28
    %p30 = scmp.ne.s32.totalorder %s19, %s22
    %p31 = scmp.eq.s32.totalorder %s14, 1
    %p32 = por %p30, %p31
    %p33 = scmp.ne.s32.totalorder %s22, %s23
    %p34 = scmp.eq.s32.totalorder %s14, 0
    %p35 = por %p33, %p34
    %p36 = scmp.ne.s32.totalorder %s22, %s23
    %p37 = scmp.eq.s32.totalorder %s15, 1
    %p38 = por %p36, %p37
    %p40 = scmp.ne.s32.totalorder %s23, %s39
    %p41 = scmp.eq.s32.totalorder %s15, 0
    %p42 = por %p40, %p41
    %s44 = sadd.s32 %s43, 1
    %p47 = scmp.eq.s32.totalorder %s9, 1
    %p48 = scmp.ne.s32.totalorder %s43, %s45
    %p49 = scmp.eq.s32.totalorder %s9, 0
    %p50 = por %p48, %p49
    %p51 = scmp.ne.s32.totalorder %s43, %s45
    %p52 = scmp.eq.s32.totalorder %s14, 1
    %p53 = por %p51, %p52
    %p54 = scmp.ne.s32.totalorder %s45, %s46
    %p55 = scmp.eq.s32.totalorder %s14, 0
    %p56 = por %p54, %p55
    %p57 = scmp.ne.s32.totalorder %s45, %s46
    %p58 = scmp.eq.s32.totalorder %s15, 1
    %p59 = por %p57, %p58
    %p61 = scmp.ne.s32.totalorder %s46, %s60
    %p62 = scmp.eq.s32.totalorder %s15, 0
    %p63 = por %p61, %p62
    %s65 = sadd.s32 %s64, 1
    %p68 = scmp.eq.s32.totalorder %s9, 1
    %p69 = scmp.ne.s32.totalorder %s64, %s66
    %p70 = scmp.eq.s32.totalorder %s9, 0
    %p71 = por %p69, %p70
    %p72 = scmp.ne.s32.totalorder %s64, %s66
    %p73 = scmp.eq.s32.totalorder %s14, 1
    %p74 = por %p72, %p73
    %p75 = scmp.ne.s32.totalorder %s66, %s67
    %p76 = scmp.eq.s32.totalorder %s14, 0
    %p77 = por %p75, %p76
    %p78 = scmp.ne.s32.totalorder %s66, %s67
    %p79 = scmp.eq.s32.totalorder %s15, 1
    %p80 = por %p78, %p79
    %p82 = scmp.ne.s32.totalorder %s67, %s81
    %p83 = scmp.eq.s32.totalorder %s15, 0
    %p84 = por %p82, %p83
    %s85 = ssub.s32 %s9, %s16
    %p86 = scmp.eq.s32.totalorder %s85, 0
    %s88 = sadd.s32 %s87, 1
    %s89 = scalar_select %p86, %s87, %s88
    %p92 = pneg %p86
    %p93 = scmp.eq.s32.totalorder %s9, 1
    %p94 = por %p92, %p93
    %p95 = scmp.ne.s32.totalorder %s87, %s90
    %p96 = scmp.eq.s32.totalorder %s9, 0
    %p97 = por %p95, %p96
    %p98 = scmp.ne.s32.totalorder %s87, %s90
    %p99 = scmp.eq.s32.totalorder %s14, 1
    %p100 = por %p98, %p99
    %p101 = scmp.ne.s32.totalorder %s90, %s91
    %p102 = scmp.eq.s32.totalorder %s14, 0
    %p103 = por %p101, %p102
    %p104 = scmp.ne.s32.totalorder %s90, %s91
    %p105 = scmp.eq.s32.totalorder %s15, 1
    %p106 = por %p104, %p105
    %p108 = scmp.ne.s32.totalorder %s91, %s107
    %p109 = scmp.eq.s32.totalorder %s15, 0
    %p110 = por %p108, %p109
    %p111 = scmp.le.s32.totalorder 1, %s9
    %p112 = scmp.lt.s32.totalorder %s9, 3
    %p113 = pnand %p111, %p112
    %p114 = pneg %p113
    // Predicated region
    $region9: #{conv_net_forward.4} parent=5 // pred_check
      _
    $region10: #{conv_net_forward.4} parent=5 // pred_check_branch
      %116 = sbr.rel (%p113) target = $region12
    $region11: #{conv_net_forward.4} parent=5 // pred_region
      %s117 = ssub.s32 %s9, 1
      // Predicated region
      $region13: #{conv_net_forward.4} parent=11 // pred_check
        %p118 = pneg %p56
      $region14: #{conv_net_forward.4} parent=11 // pred_check_branch
        %120 = sbr.rel (%p118) target = $region16
      $region15: #{conv_net_forward.4} parent=11 // pred_region
        _
      $region16: #{conv_net_forward.4} parent=11 // pred_fallthru
        _
      // Predicated region
      $region17: #{conv_net_forward.4} parent=11 // pred_check
        %p121 = pneg %p77
      $region18: #{conv_net_forward.4} parent=11 // pred_check_branch
        %123 = sbr.rel (%p121) target = $region20
      $region19: #{conv_net_forward.4} parent=11 // pred_region
        _
      $region20: #{conv_net_forward.4} parent=11 // pred_fallthru
        _
    $region12: #{conv_net_forward.4} parent=5 // pred_fallthru
      _
    %p124 = scmp.lt.s32.totalorder %s9, 2
    // Predicated region
    $region21: #{conv_net_forward.4} parent=5 // pred_check
      %p125 = pneg %p124
    $region22: #{conv_net_forward.4} parent=5 // pred_check_branch
      %127 = sbr.rel (%p125) target = $region24
    $region23: #{conv_net_forward.4} parent=5 // pred_region
      // Predicated region
      $region25: #{conv_net_forward.4} parent=23 // pred_check
        %p128 = pneg %p29
      $region26: #{conv_net_forward.4} parent=23 // pred_check_branch
        %130 = sbr.rel (%p128) target = $region28
      $region27: #{conv_net_forward.4} parent=23 // pred_region
        %s131 = smul.u32 154, %s9
        %p132 = scmp.lt.s32.totalorder %s131, 307
        %s133 = scalar_select %p132, %s131, 307
        %s134 = smul.addr %s133, 4
        %s135 = scalar_lea.vmem %s0, %s134
        %s136 = smul.u32 154, %s9
      $region28: #{conv_net_forward.4} parent=23 // pred_fallthru
        _
    $region24: #{conv_net_forward.4} parent=5 // pred_fallthru
      _
    %p137 = scmp.le.s32.totalorder 1, %s9
    %p138 = scmp.lt.s32.totalorder %s9, 3
    %p139 = pnand %p137, %p138
    %p140 = pneg %p139
    // Predicated region
    $region29: #{conv_net_forward.4} parent=5 // pred_check
      _
    $region30: #{conv_net_forward.4} parent=5 // pred_check_branch
      %142 = sbr.rel (%p139) target = $region32
    $region31: #{conv_net_forward.4} parent=5 // pred_region
      %s143 = ssub.s32 %s9, 1
      %s144 = smul.u32 154, %s14
      %p145 = scmp.lt.s32.totalorder %s144, 307
      %s146 = scalar_select %p145, %s144, 307
      %s147 = smul.addr %s146, 4
      %s148 = scalar_lea.vmem %s0, %s147
      %p149 = pneg %p35
      %p150 = pneg %p32
      %p151 = pneg %p56
      %p152 = pneg %p53
      %p153 = pneg %p77
      %p154 = pneg %p74
      %p155 = pneg %p103
      %p156 = pneg %p100
      %s157 = smul.u32 154, %s14
      %p158 = scmp.lt.s32.totalorder %s157, 307
      %s159 = scalar_select %p158, %s157, 307
      %s160 = smul.addr %s159, 4
      %s161 = scalar_lea.vmem %s3, %s160
      %s162 = smul.u32 154, %s14
      %p163 = scmp.lt.s32.totalorder %s162, 307
      %s164 = scalar_select %p163, %s162, 307
      %s165 = smul.addr %s164, 4
      %s166 = scalar_lea.vmem %s0, %s165
      %s167 = smul.u32 154, %s14
      %s168 = smul.u32 154, %s14
      %p169 = scmp.lt.s32.totalorder %s168, 307
      %s170 = scalar_select %p169, %s168, 307
      %s171 = smul.addr %s170, 4
      %s172 = scalar_lea.vmem %s3, %s171
      %s173 = smul.u32 154, %s14
      %v175 = vld [vmem:[%s166] sm:$0xf]
      %v176 = vld [vmem:[%s166 + $0x4] sm:$0xf]
      %v177 = vld [vmem:[%s166 + $0x8] sm:$0xf]
      %v178 = vld [vmem:[%s166 + $0xc] sm:$0xf]
      %v179 = vld [vmem:[%s166 + $0x10] sm:$0xf]
      %v180 = vld [vmem:[%s166 + $0x14] sm:$0xf]
      %v181 = vld [vmem:[%s166 + $0x18] sm:$0xf]
      %v182 = vld [vmem:[%s166 + $0x1c] sm:$0xf]
      %v183 = vld [vmem:[%s166 + $0x20] sm:$0xf]
      %v184 = vld [vmem:[%s166 + $0x24] sm:$0xf]
      %v185 = vld [vmem:[%s166 + $0x28] sm:$0xf]
      %v186 = vld [vmem:[%s166 + $0x2c] sm:$0xf]
      %v187 = vld [vmem:[%s166 + $0x30] sm:$0xf]
      %v188 = vld [vmem:[%s166 + $0x34] sm:$0xf]
      %v189 = vld [vmem:[%s166 + $0x38] sm:$0xf]
      %v190 = vld [vmem:[%s166 + $0x3c] sm:$0xf]
      %v191 = vld [vmem:[%s166 + $0x40] sm:$0xf]
      %v192 = vld [vmem:[%s166 + $0x44] sm:$0xf]
      %v193 = vld [vmem:[%s166 + $0x48] sm:$0xf]
      %v194 = vld [vmem:[%s166 + $0x4c] sm:$0xf]
      %v195 = vld [vmem:[%s166 + $0x50] sm:$0xf]
      %v196 = vld [vmem:[%s166 + $0x54] sm:$0xf]
      %v197 = vld [vmem:[%s166 + $0x58] sm:$0xf]
      %v198 = vld [vmem:[%s166 + $0x5c] sm:$0xf]
      %v199 = vld [vmem:[%s166 + $0x60] sm:$0xf]
      %v200 = vld [vmem:[%s166 + $0x64] sm:$0xf]
      %v201 = vld [vmem:[%s166 + $0x68] sm:$0xf]
      %v202 = vld [vmem:[%s166 + $0x6c] sm:$0xf]
      %v203 = vld [vmem:[%s166 + $0x70] sm:$0xf]
      %v204 = vld [vmem:[%s166 + $0x74] sm:$0xf]
      %v205 = vld [vmem:[%s166 + $0x78] sm:$0xf]
      %v206 = vld [vmem:[%s166 + $0x7c] sm:$0xf]
      %v207 = vld [vmem:[%s166 + $0x80] sm:$0xf]
      %v208 = vld [vmem:[%s166 + $0x84] sm:$0xf]
      %v209 = vld [vmem:[%s166 + $0x88] sm:$0xf]
      %v210 = vld [vmem:[%s166 + $0x8c] sm:$0xf]
      %v211 = vld [vmem:[%s166 + $0x90] sm:$0xf]
      %v212 = vld [vmem:[%s166 + $0x94] sm:$0xf]
      %v213 = vld [vmem:[%s166 + $0x98] sm:$0xf]
      %v214 = vld [vmem:[%s166 + $0x9c] sm:$0xf]
      %v215 = vld [vmem:[%s166 + $0xa0] sm:$0xf]
      %v216 = vld [vmem:[%s166 + $0xa4] sm:$0xf]
      %v217 = vld [vmem:[%s166 + $0xa8] sm:$0xf]
      %v218 = vld [vmem:[%s166 + $0xac] sm:$0xf]
      %v219 = vld [vmem:[%s166 + $0xb0] sm:$0xf]
      %v220 = vld [vmem:[%s166 + $0xb4] sm:$0xf]
      %v221 = vld [vmem:[%s166 + $0xb8] sm:$0xf]
      %v222 = vld [vmem:[%s166 + $0xbc] sm:$0xf]
      %v223 = vld [vmem:[%s166 + $0xc0] sm:$0xf]
      %v224 = vld [vmem:[%s166 + $0xc4] sm:$0xf]
      %v225 = vld [vmem:[%s166 + $0xc8] sm:$0xf]
      %v226 = vld [vmem:[%s166 + $0xcc] sm:$0xf]
      %v227 = vld [vmem:[%s166 + $0xd0] sm:$0xf]
      %v228 = vld [vmem:[%s166 + $0xd4] sm:$0xf]
      %v229 = vld [vmem:[%s166 + $0xd8] sm:$0xf]
      %v230 = vld [vmem:[%s166 + $0xdc] sm:$0xf]
      %v231 = vld [vmem:[%s166 + $0xe0] sm:$0xf]
      %v232 = vld [vmem:[%s166 + $0xe4] sm:$0xf]
      %v233 = vld [vmem:[%s166 + $0xe8] sm:$0xf]
      %v234 = vld [vmem:[%s166 + $0xec] sm:$0xf]
      %v235 = vld [vmem:[%s166 + $0xf0] sm:$0xf]
      %v236 = vld [vmem:[%s166 + $0xf4] sm:$0xf]
      %v237 = vld [vmem:[%s166 + $0xf8] sm:$0xf]
      %v238 = vld [vmem:[%s166 + $0xfc] sm:$0xf]
      %v239 = vld [vmem:[%s166 + $0x100] sm:$0xf]
      %v240 = vld [vmem:[%s166 + $0x104] sm:$0xf]
      %v241 = vld [vmem:[%s166 + $0x108] sm:$0xf]
      %v242 = vld [vmem:[%s166 + $0x10c] sm:$0xf]
      %v243 = vld [vmem:[%s166 + $0x110] sm:$0xf]
      %v244 = vld [vmem:[%s166 + $0x114] sm:$0xf]
      %v245 = vld [vmem:[%s166 + $0x118] sm:$0xf]
      %v246 = vld [vmem:[%s166 + $0x11c] sm:$0xf]
      %v247 = vld [vmem:[%s166 + $0x120] sm:$0xf]
      %v248 = vld [vmem:[%s166 + $0x124] sm:$0xf]
      %v249 = vld [vmem:[%s166 + $0x128] sm:$0xf]
      %v250 = vld [vmem:[%s166 + $0x12c] sm:$0xf]
      %v251 = vld [vmem:[%s166 + $0x130] sm:$0xf]
      %v252 = vld [vmem:[%s166 + $0x134] sm:$0xf]
      %v253 = vld [vmem:[%s166 + $0x138] sm:$0xf]
      %v254 = vld [vmem:[%s166 + $0x13c] sm:$0xf]
      %v255 = vld [vmem:[%s166 + $0x140] sm:$0xf]
      %v256 = vld [vmem:[%s166 + $0x144] sm:$0xf]
      %v257 = vld [vmem:[%s166 + $0x148] sm:$0xf]
      %v258 = vld [vmem:[%s166 + $0x14c] sm:$0xf]
      %v259 = vld [vmem:[%s166 + $0x150] sm:$0xf]
      %v260 = vld [vmem:[%s166 + $0x154] sm:$0xf]
      %v261 = vld [vmem:[%s166 + $0x158] sm:$0xf]
      %v262 = vld [vmem:[%s166 + $0x15c] sm:$0xf]
      %v263 = vld [vmem:[%s166 + $0x160] sm:$0xf]
      %v264 = vld [vmem:[%s166 + $0x164] sm:$0xf]
      %v265 = vld [vmem:[%s166 + $0x168] sm:$0xf]
      %v266 = vld [vmem:[%s166 + $0x16c] sm:$0xf]
      %v267 = vld [vmem:[%s166 + $0x170] sm:$0xf]
      %v268 = vld [vmem:[%s166 + $0x174] sm:$0xf]
      %v269 = vld [vmem:[%s166 + $0x178] sm:$0xf]
      %v270 = vld [vmem:[%s166 + $0x17c] sm:$0xf]
      %v271 = vld [vmem:[%s166 + $0x180] sm:$0xf]
      %v272 = vld [vmem:[%s166 + $0x184] sm:$0xf]
      %v273 = vld [vmem:[%s166 + $0x188] sm:$0xf]
      %v274 = vld [vmem:[%s166 + $0x18c] sm:$0xf]
      %v275 = vld [vmem:[%s166 + $0x190] sm:$0xf]
      %v276 = vld [vmem:[%s166 + $0x194] sm:$0xf]
      %v277 = vld [vmem:[%s166 + $0x198] sm:$0xf]
      %v278 = vld [vmem:[%s166 + $0x19c] sm:$0xf]
      %v279 = vld [vmem:[%s166 + $0x1a0] sm:$0xf]
      %v280 = vld [vmem:[%s166 + $0x1a4] sm:$0xf]
      %v281 = vld [vmem:[%s166 + $0x1a8] sm:$0xf]
      %v282 = vld [vmem:[%s166 + $0x1ac] sm:$0xf]
      %v283 = vld [vmem:[%s166 + $0x1b0] sm:$0xf]
      %v284 = vld [vmem:[%s166 + $0x1b4] sm:$0xf]
      %v285 = vld [vmem:[%s166 + $0x1b8] sm:$0xf]
      %v286 = vld [vmem:[%s166 + $0x1bc] sm:$0xf]
      %v287 = vld [vmem:[%s166 + $0x1c0] sm:$0xf]
      %v288 = vld [vmem:[%s166 + $0x1c4] sm:$0xf]
      %v289 = vld [vmem:[%s166 + $0x1c8] sm:$0xf]
      %v290 = vld [vmem:[%s166 + $0x1cc] sm:$0xf]
      %v291 = vld [vmem:[%s166 + $0x1d0] sm:$0xf]
      %v292 = vld [vmem:[%s166 + $0x1d4] sm:$0xf]
      %v293 = vld [vmem:[%s166 + $0x1d8] sm:$0xf]
      %v294 = vld [vmem:[%s166 + $0x1dc] sm:$0xf]
      %v295 = vld [vmem:[%s166 + $0x1e0] sm:$0xf]
      %v296 = vld [vmem:[%s166 + $0x1e4] sm:$0xf]
      %v297 = vld [vmem:[%s166 + $0x1e8] sm:$0xf]
      %v298 = vld [vmem:[%s166 + $0x1ec] sm:$0xf]
      %v299 = vld [vmem:[%s166 + $0x1f0] sm:$0xf]
      %v300 = vld [vmem:[%s166 + $0x1f4] sm:$0xf]
      %v301 = vld [vmem:[%s166 + $0x1f8] sm:$0xf]
      %v302 = vld [vmem:[%s166 + $0x1fc] sm:$0xf]
      %v303 = vld [vmem:[%s166 + $0x200] sm:$0xf]
      %v304 = vld [vmem:[%s166 + $0x204] sm:$0xf]
      %v305 = vld [vmem:[%s166 + $0x208] sm:$0xf]
      %v306 = vld [vmem:[%s166 + $0x20c] sm:$0xf]
      %v307 = vld [vmem:[%s166 + $0x210] sm:$0xf]
      %v308 = vld [vmem:[%s166 + $0x214] sm:$0xf]
      %v309 = vld [vmem:[%s166 + $0x218] sm:$0xf]
      %v310 = vld [vmem:[%s166 + $0x21c] sm:$0xf]
      %v311 = vld [vmem:[%s166 + $0x220] sm:$0xf]
      %v312 = vld [vmem:[%s166 + $0x224] sm:$0xf]
      %v313 = vld [vmem:[%s166 + $0x228] sm:$0xf]
      %v314 = vld [vmem:[%s166 + $0x22c] sm:$0xf]
      %v315 = vld [vmem:[%s166 + $0x230] sm:$0xf]
      %v316 = vld [vmem:[%s166 + $0x234] sm:$0xf]
      %v317 = vld [vmem:[%s166 + $0x238] sm:$0xf]
      %v318 = vld [vmem:[%s166 + $0x23c] sm:$0xf]
      %v319 = vld [vmem:[%s166 + $0x240] sm:$0xf]
      %v320 = vld [vmem:[%s166 + $0x244] sm:$0xf]
      %v321 = vld [vmem:[%s166 + $0x248] sm:$0xf]
      %v322 = vld [vmem:[%s166 + $0x24c] sm:$0xf]
      %v323 = vld [vmem:[%s166 + $0x250] sm:$0xf]
      %v324 = vld [vmem:[%s166 + $0x254] sm:$0xf]
      %v325 = vld [vmem:[%s166 + $0x258] sm:$0xf]
      %v326 = vld [vmem:[%s166 + $0x25c] sm:$0xf]
      %v327 = vld [vmem:[%s166 + $0x260] sm:$0xf]
      %v328 = vld [vmem:[%s166 + $0x264] sm:$0xf]
      %v329 = vld [vmem:[%s1] sm:$0xf]
      %v330 = vld [vmem:[%s1 + $0x4] sm:$0xf]
      %v331 = vld [vmem:[%s1 + $0x8] sm:$0xf]
      %v332 = vld [vmem:[%s1 + $0xc] sm:$0xf]
      %v333 = vld [vmem:[%s1 + $0x10] sm:$0xf]
      %v334 = vld [vmem:[%s1 + $0x14] sm:$0xf]
      %v335 = vld [vmem:[%s1 + $0x18] sm:$0xf]
      %v336 = vld [vmem:[%s1 + $0x1c] sm:$0xf]
      %v337 = vld [vmem:[%s1 + $0x20] sm:$0xf]
      %v338 = vld [vmem:[%s1 + $0x24] sm:$0xf]
      %v339 = vld [vmem:[%s1 + $0x28] sm:$0xf]
      %v340 = vld [vmem:[%s1 + $0x2c] sm:$0xf]
      %v341 = vld [vmem:[%s1 + $0x30] sm:$0xf]
      %v342 = vld [vmem:[%s1 + $0x34] sm:$0xf]
      %v343 = vld [vmem:[%s1 + $0x38] sm:$0xf]
      %v344 = vld [vmem:[%s1 + $0x3c] sm:$0xf]
      %v345 = vld [vmem:[%s2] sm:$0x1]
      %v347 = vlaneseq
      %v348 = vshrl.u32 %v347, 7
      %v349 = vsub.s32 0, %v348
      %v350 = vrot.slane %v345, %v349
      %v506 = vunpack.c.l.b16 %v175
      %v507 = vunpack.c.l.b16 %v176
      %v508 = vunpack.c.l.b16 %v177
      %v509 = vunpack.c.l.b16 %v178
      %v510 = vunpack.c.l.b16 %v179
      %v511 = vunpack.c.l.b16 %v180
      %v512 = vunpack.c.l.b16 %v181
      %v513 = vunpack.c.l.b16 %v182
      %v514 = vunpack.c.l.b16 %v183
      %v515 = vunpack.c.l.b16 %v184
      %v516 = vunpack.c.l.b16 %v185
      %v517 = vunpack.c.l.b16 %v186
      %v518 = vunpack.c.l.b16 %v187
      %v519 = vunpack.c.l.b16 %v188
      %v520 = vunpack.c.l.b16 %v189
      %v521 = vunpack.c.l.b16 %v190
      %v522 = vunpack.c.l.b16 %v191
      %v523 = vunpack.c.l.b16 %v192
      %v524 = vunpack.c.l.b16 %v193
      %v525 = vunpack.c.l.b16 %v194
      %v526 = vunpack.c.l.b16 %v195
      %v527 = vunpack.c.l.b16 %v196
      %v528 = vunpack.c.l.b16 %v197
      %v529 = vunpack.c.l.b16 %v198
      %v530 = vunpack.c.l.b16 %v199
      %v531 = vunpack.c.l.b16 %v200
      %v532 = vunpack.c.l.b16 %v201
      %v533 = vunpack.c.l.b16 %v202
      %v534 = vunpack.c.l.b16 %v203
      %v535 = vunpack.c.l.b16 %v204
      %v536 = vunpack.c.l.b16 %v205
      %v537 = vunpack.c.l.b16 %v206
      %v538 = vunpack.c.l.b16 %v207
      %v539 = vunpack.c.l.b16 %v208
      %v540 = vunpack.c.l.b16 %v209
      %v541 = vunpack.c.l.b16 %v210
      %v542 = vunpack.c.l.b16 %v211
      %v543 = vunpack.c.l.b16 %v212
      %v544 = vunpack.c.l.b16 %v213
      %v545 = vunpack.c.l.b16 %v214
      %v546 = vunpack.c.l.b16 %v215
      %v547 = vunpack.c.l.b16 %v216
      %v548 = vunpack.c.l.b16 %v217
      %v549 = vunpack.c.l.b16 %v218
      %v550 = vunpack.c.l.b16 %v219
      %v551 = vunpack.c.l.b16 %v220
      %v552 = vunpack.c.l.b16 %v221
      %v553 = vunpack.c.l.b16 %v222
      %v554 = vunpack.c.l.b16 %v223
      %v555 = vunpack.c.l.b16 %v224
      %v556 = vunpack.c.l.b16 %v225
      %v557 = vunpack.c.l.b16 %v226
      %v558 = vunpack.c.l.b16 %v227
      %v559 = vunpack.c.l.b16 %v228
      %v560 = vunpack.c.l.b16 %v229
      %v561 = vunpack.c.l.b16 %v230
      %v562 = vunpack.c.l.b16 %v231
      %v563 = vunpack.c.l.b16 %v232
      %v564 = vunpack.c.l.b16 %v233
      %v565 = vunpack.c.l.b16 %v234
      %v566 = vunpack.c.l.b16 %v235
      %v567 = vunpack.c.l.b16 %v236
      %v568 = vunpack.c.l.b16 %v237
      %v569 = vunpack.c.l.b16 %v238
      %v570 = vunpack.c.l.b16 %v239
      %v571 = vunpack.c.l.b16 %v240
      %v572 = vunpack.c.l.b16 %v241
      %v573 = vunpack.c.l.b16 %v242
      %v574 = vunpack.c.l.b16 %v243
      %v575 = vunpack.c.l.b16 %v244
      %v576 = vunpack.c.l.b16 %v245
      %v577 = vunpack.c.l.b16 %v246
      %v578 = vunpack.c.l.b16 %v247
      %v579 = vunpack.c.l.b16 %v248
      %v580 = vunpack.c.l.b16 %v249
      %v581 = vunpack.c.l.b16 %v250
      %v582 = vunpack.c.l.b16 %v251
      %v583 = vunpack.c.l.b16 %v252
      %v584 = vunpack.c.l.b16 %v253
      %v585 = vunpack.c.l.b16 %v254
      %v586 = vunpack.c.l.b16 %v255
      %v587 = vunpack.c.l.b16 %v256
      %v588 = vunpack.c.l.b16 %v257
      %v589 = vunpack.c.l.b16 %v258
      %v590 = vunpack.c.l.b16 %v259
      %v591 = vunpack.c.l.b16 %v260
      %v592 = vunpack.c.l.b16 %v261
      %v593 = vunpack.c.l.b16 %v262
      %v594 = vunpack.c.l.b16 %v263
      %v595 = vunpack.c.l.b16 %v264
      %v596 = vunpack.c.l.b16 %v265
      %v597 = vunpack.c.l.b16 %v266
      %v598 = vunpack.c.l.b16 %v267
      %v599 = vunpack.c.l.b16 %v268
      %v600 = vunpack.c.l.b16 %v269
      %v601 = vunpack.c.l.b16 %v270
      %v602 = vunpack.c.l.b16 %v271
      %v603 = vunpack.c.l.b16 %v272
      %v604 = vunpack.c.l.b16 %v273
      %v605 = vunpack.c.l.b16 %v274
      %v606 = vunpack.c.l.b16 %v275
      %v607 = vunpack.c.l.b16 %v276
      %v608 = vunpack.c.l.b16 %v277
      %v609 = vunpack.c.l.b16 %v278
      %v610 = vunpack.c.l.b16 %v279
      %v611 = vunpack.c.l.b16 %v280
      %v612 = vunpack.c.l.b16 %v281
      %v613 = vunpack.c.l.b16 %v282
      %v614 = vunpack.c.l.b16 %v283
      %v615 = vunpack.c.l.b16 %v284
      %v616 = vunpack.c.l.b16 %v285
      %v617 = vunpack.c.l.b16 %v286
      %v618 = vunpack.c.l.b16 %v287
      %v619 = vunpack.c.l.b16 %v288
      %v620 = vunpack.c.l.b16 %v289
      %v621 = vunpack.c.l.b16 %v290
      %v622 = vunpack.c.l.b16 %v291
      %v623 = vunpack.c.l.b16 %v292
      %v624 = vunpack.c.l.b16 %v293
      %v625 = vunpack.c.l.b16 %v294
      %v626 = vunpack.c.l.b16 %v295
      %v627 = vunpack.c.l.b16 %v296
      %v628 = vunpack.c.l.b16 %v297
      %v629 = vunpack.c.l.b16 %v298
      %v630 = vunpack.c.l.b16 %v299
      %v631 = vunpack.c.l.b16 %v300
      %v632 = vunpack.c.l.b16 %v301
      %v633 = vunpack.c.l.b16 %v302
      %v634 = vunpack.c.l.b16 %v303
      %v635 = vunpack.c.l.b16 %v304
      %v636 = vunpack.c.l.b16 %v305
      %v637 = vunpack.c.l.b16 %v306
      %v638 = vunpack.c.l.b16 %v307
      %v639 = vunpack.c.l.b16 %v308
      %v640 = vunpack.c.l.b16 %v309
      %v641 = vunpack.c.l.b16 %v310
      %v642 = vunpack.c.l.b16 %v311
      %v643 = vunpack.c.l.b16 %v312
      %v644 = vunpack.c.l.b16 %v313
      %v645 = vunpack.c.l.b16 %v314
      %v646 = vunpack.c.l.b16 %v315
      %v647 = vunpack.c.l.b16 %v316
      %v648 = vunpack.c.l.b16 %v317
      %v649 = vunpack.c.l.b16 %v318
      %v650 = vunpack.c.l.b16 %v319
      %v651 = vunpack.c.l.b16 %v320
      %v652 = vunpack.c.l.b16 %v321
      %v653 = vunpack.c.l.b16 %v322
      %v654 = vunpack.c.l.b16 %v323
      %v655 = vunpack.c.l.b16 %v324
      %v656 = vunpack.c.l.b16 %v325
      %v657 = vunpack.c.l.b16 %v326
      %v658 = vunpack.c.l.b16 %v327
      %v659 = vunpack.c.l.b16 %v328
      %v660 = vpack.c.b16 %v507, %v506
      %v661 = vpack.c.b16 %v509, %v508
      %v662 = vpack.c.b16 %v511, %v510
      %v663 = vpack.c.b16 %v513, %v512
      %v664 = vpack.c.b16 %v515, %v514
      %v665 = vpack.c.b16 %v517, %v516
      %v666 = vpack.c.b16 %v519, %v518
      %v667 = vpack.c.b16 %v521, %v520
      %v668 = vpack.c.b16 %v523, %v522
      %v669 = vpack.c.b16 %v525, %v524
      %v670 = vpack.c.b16 %v527, %v526
      %v671 = vpack.c.b16 %v529, %v528
      %v672 = vpack.c.b16 %v531, %v530
      %v673 = vpack.c.b16 %v533, %v532
      %v674 = vpack.c.b16 %v535, %v534
      %v675 = vpack.c.b16 %v537, %v536
      %v676 = vpack.c.b16 %v539, %v538
      %v677 = vpack.c.b16 %v541, %v540
      %v678 = vpack.c.b16 %v543, %v542
      %v679 = vpack.c.b16 %v545, %v544
      %v680 = vpack.c.b16 %v547, %v546
      %v681 = vpack.c.b16 %v549, %v548
      %v682 = vpack.c.b16 %v551, %v550
      %v683 = vpack.c.b16 %v553, %v552
      %v684 = vpack.c.b16 %v555, %v554
      %v685 = vpack.c.b16 %v557, %v556
      %v686 = vpack.c.b16 %v559, %v558
      %v687 = vpack.c.b16 %v561, %v560
      %v688 = vpack.c.b16 %v563, %v562
      %v689 = vpack.c.b16 %v565, %v564
      %v690 = vpack.c.b16 %v567, %v566
      %v691 = vpack.c.b16 %v569, %v568
      %v692 = vpack.c.b16 %v571, %v570
      %v693 = vpack.c.b16 %v573, %v572
      %v694 = vpack.c.b16 %v575, %v574
      %v695 = vpack.c.b16 %v577, %v576
      %v696 = vpack.c.b16 %v579, %v578
      %v697 = vpack.c.b16 %v581, %v580
      %v698 = vpack.c.b16 %v583, %v582
      %v699 = vpack.c.b16 %v585, %v584
      %v700 = vpack.c.b16 %v587, %v586
      %v701 = vpack.c.b16 %v589, %v588
      %v702 = vpack.c.b16 %v591, %v590
      %v703 = vpack.c.b16 %v593, %v592
      %v704 = vpack.c.b16 %v595, %v594
      %v705 = vpack.c.b16 %v597, %v596
      %v706 = vpack.c.b16 %v599, %v598
      %v707 = vpack.c.b16 %v601, %v600
      %v708 = vpack.c.b16 %v603, %v602
      %v709 = vpack.c.b16 %v605, %v604
      %v710 = vpack.c.b16 %v607, %v606
      %v711 = vpack.c.b16 %v609, %v608
      %v712 = vpack.c.b16 %v611, %v610
      %v713 = vpack.c.b16 %v613, %v612
      %v714 = vpack.c.b16 %v615, %v614
      %v715 = vpack.c.b16 %v617, %v616
      %v716 = vpack.c.b16 %v619, %v618
      %v717 = vpack.c.b16 %v621, %v620
      %v718 = vpack.c.b16 %v623, %v622
      %v719 = vpack.c.b16 %v625, %v624
      %v720 = vpack.c.b16 %v627, %v626
      %v721 = vpack.c.b16 %v629, %v628
      %v722 = vpack.c.b16 %v631, %v630
      %v723 = vpack.c.b16 %v633, %v632
      %v724 = vpack.c.b16 %v635, %v634
      %v725 = vpack.c.b16 %v637, %v636
      %v726 = vpack.c.b16 %v639, %v638
      %v727 = vpack.c.b16 %v641, %v640
      %v728 = vpack.c.b16 %v643, %v642
      %v729 = vpack.c.b16 %v645, %v644
      %v730 = vpack.c.b16 %v647, %v646
      %v731 = vpack.c.b16 %v649, %v648
      %v732 = vpack.c.b16 %v651, %v650
      %v733 = vpack.c.b16 %v653, %v652
      %v734 = vpack.c.b16 %v655, %v654
      %v735 = vpack.c.b16 %v657, %v656
      %v736 = vpack.c.b16 %v659, %v658
      %v830 = vunpack.c.l.b16 %v329
      %v831 = vunpack.c.l.b16 %v330
      %v832 = vunpack.c.l.b16 %v331
      %v833 = vunpack.c.l.b16 %v332
      %v834 = vunpack.c.l.b16 %v333
      %v835 = vunpack.c.l.b16 %v334
      %v836 = vunpack.c.l.b16 %v335
      %v837 = vunpack.c.l.b16 %v336
      %v838 = vunpack.c.l.b16 %v337
      %v839 = vunpack.c.l.b16 %v338
      %v840 = vunpack.c.l.b16 %v339
      %v841 = vunpack.c.l.b16 %v340
      %v842 = vunpack.c.l.b16 %v341
      %v843 = vunpack.c.l.b16 %v342
      %v844 = vunpack.c.l.b16 %v343
      %v845 = vunpack.c.l.b16 %v344
      %v846 = vpack.c.b16 %v831, %v830
      %v847 = vpack.c.b16 %v833, %v832
      %v848 = vpack.c.b16 %v835, %v834
      %v849 = vpack.c.b16 %v837, %v836
      %v850 = vpack.c.b16 %v839, %v838
      %v851 = vpack.c.b16 %v841, %v840
      %v852 = vpack.c.b16 %v843, %v842
      %v853 = vpack.c.b16 %v845, %v844
      %862 = vmatprep.subr.bf16.mxu0 0
      %863 = vmatpush1.bf16.msra.mxu0 %v846
      %864 = vmatprep.subr.bf16.mxu0 0
      %865 = vmatpush1.bf16.msra.mxu0 %v847
      %866 = vmatprep.subr.bf16.mxu0 0
      %867 = vmatpush1.bf16.msra.mxu0 %v848
      %868 = vmatprep.subr.bf16.mxu0 0
      %869 = vmatpush1.bf16.msra.mxu0 %v849
      %870 = vmatprep.subr.bf16.mxu0 0
      %871 = vmatpush1.bf16.msra.mxu0 %v850
      %872 = vmatprep.subr.bf16.mxu0 0
      %873 = vmatpush1.bf16.msra.mxu0 %v851
      %874 = vmatprep.subr.bf16.mxu0 0
      %875 = vmatpush1.bf16.msra.mxu0 %v852
      %876 = vmatprep.subr.bf16.mxu0 0
      %877 = vmatpush1.bf16.msra.mxu0 %v853
      %878 = vmatprep.subr.bf16.mxu0 0
      %879 = vmatpush1.bf16.msra.mxu0 0
      %880 = vmatprep.subr.bf16.mxu0 0
      %881 = vmatpush1.bf16.msra.mxu0 0
      %882 = vmatprep.subr.bf16.mxu0 0
      %883 = vmatpush1.bf16.msra.mxu0 0
      %884 = vmatprep.subr.bf16.mxu0 0
      %885 = vmatpush1.bf16.msra.mxu0 0
      %886 = vmatprep.subr.bf16.mxu0 0
      %887 = vmatpush1.bf16.msra.mxu0 0
      %888 = vmatprep.subr.bf16.mxu0 0
      %889 = vmatpush1.bf16.msra.mxu0 0
      %890 = vmatprep.subr.bf16.mxu0 0
      %891 = vmatpush1.bf16.msra.mxu0 0
      %892 = vmatprep.subr.bf16.mxu0 0
      %893 = vmatpush1.bf16.msra.mxu0 0
      %894 = vmatprep.mubr.bf16.mxu0 0
      %895 = vmatmul.mubr.bf16.gmra.mrb[0].mxu0 %v660
      %v896 = vpop.f32.mrb[0].mxu0
      %v897 = vadd.f32 %v350, %v896
      %v898 = vpop.f32.mrb[0].mxu0
      %v899 = vpop.f32.mrb[0].mxu0
      %v900 = vadd.f32 %v350, %v899
      %v901 = vpop.f32.mrb[0].mxu0
      %902 = vmatprep.mubr.bf16.mxu0 0
      %903 = vmatmul.mubr.bf16.gmra.mrb[0].mxu0 %v661
      %v904 = vpop.f32.mrb[0].mxu0
      %v905 = vadd.f32 %v350, %v904
      %v906 = vpop.f32.mrb[0].mxu0
      %v907 = vpop.f32.mrb[0].mxu0
      %v908 = vadd.f32 %v350, %v907
      %v909 = vpop.f32.mrb[0].mxu0
      %910 = vmatprep.mubr.bf16.mxu0 0
      %911 = vmatmul.mubr.bf16.gmra.mrb[0].mxu0 %v662
      %v912 = vpop.f32.mrb[0].mxu0
      %v913 = vadd.f32 %v350, %v912
      %v914 = vpop.f32.mrb[0].mxu0
      %v915 = vpop.f32.mrb[0].mxu0
      %v916 = vadd.f32 %v350, %v915
      %v917 = vpop.f32.mrb[0].mxu0
      %918 = vmatprep.mubr.bf16.mxu0 0
      %919 = vmatmul.mubr.bf16.gmra.mrb[0].mxu0 %v663
      %v920 = vpop.f32.mrb[0].mxu0
      %v921 = vadd.f32 %v350, %v920
      %v922 = vpop.f32.mrb[0].mxu0
      %v923 = vpop.f32.mrb[0].mxu0
      %v924 = vadd.f32 %v350, %v923
      %v925 = vpop.f32.mrb[0].mxu0
      %926 = vmatprep.mubr.bf16.mxu0 0
      %927 = vmatmul.mubr.bf16.gmra.mrb[0].mxu0 %v664
      %v928 = vpop.f32.mrb[0].mxu0
      %v929 = vadd.f32 %v350, %v928
      %v930 = vpop.f32.mrb[0].mxu0
      %v931 = vpop.f32.mrb[0].mxu0
      %v932 = vadd.f32 %v350, %v931
      %v933 = vpop.f32.mrb[0].mxu0
      %934 = vmatprep.mubr.bf16.mxu0 0
      %935 = vmatmul.mubr.bf16.gmra.mrb[0].mxu0 %v665
      %v936 = vpop.f32.mrb[0].mxu0
      %v937 = vadd.f32 %v350, %v936
      %v938 = vpop.f32.mrb[0].mxu0
      %v939 = vpop.f32.mrb[0].mxu0
      %v940 = vadd.f32 %v350, %v939
      %v941 = vpop.f32.mrb[0].mxu0
      %942 = vmatprep.mubr.bf16.mxu0 0
      %943 = vmatmul.mubr.bf16.gmra.mrb[0].mxu0 %v666
      %v944 = vpop.f32.mrb[0].mxu0
      %v945 = vadd.f32 %v350, %v944
      %v946 = vpop.f32.mrb[0].mxu0
      %v947 = vpop.f32.mrb[0].mxu0
      %v948 = vadd.f32 %v350, %v947
      %v949 = vpop.f32.mrb[0].mxu0
      %950 = vmatprep.mubr.bf16.mxu0 0
      %951 = vmatmul.mubr.bf16.gmra.mrb[0].mxu0 %v667
      %v952 = vpop.f32.mrb[0].mxu0
      %v953 = vadd.f32 %v350, %v952
      %v954 = vpop.f32.mrb[0].mxu0
      %v955 = vpop.f32.mrb[0].mxu0
      %v956 = vadd.f32 %v350, %v955
      %v957 = vpop.f32.mrb[0].mxu0
      %958 = vmatprep.mubr.bf16.mxu0 0
      %959 = vmatmul.mubr.bf16.gmra.mrb[0].mxu0 %v668
      %v960 = vpop.f32.mrb[0].mxu0
      %v961 = vadd.f32 %v350, %v960
      %v962 = vpop.f32.mrb[0].mxu0
      %v963 = vpop.f32.mrb[0].mxu0
      %v964 = vadd.f32 %v350, %v963
      %v965 = vpop.f32.mrb[0].mxu0
      %966 = vmatprep.mubr.bf16.mxu0 0
      %967 = vmatmul.mubr.bf16.gmra.mrb[0].mxu0 %v669
      %v968 = vpop.f32.mrb[0].mxu0
      %v969 = vadd.f32 %v350, %v968
      %v970 = vpop.f32.mrb[0].mxu0
      %v971 = vpop.f32.mrb[0].mxu0
      %v972 = vadd.f32 %v350, %v971
      %v973 = vpop.f32.mrb[0].mxu0
      %974 = vmatprep.mubr.bf16.mxu0 0
      %975 = vmatmul.mubr.bf16.gmra.mrb[0].mxu0 %v670
      %v976 = vpop.f32.mrb[0].mxu0
      %v977 = vadd.f32 %v350, %v976
      %v978 = vpop.f32.mrb[0].mxu0
      %v979 = vpop.f32.mrb[0].mxu0
      %v980 = vadd.f32 %v350, %v979
      %v981 = vpop.f32.mrb[0].mxu0
      %982 = vmatprep.mubr.bf16.mxu0 0
      %983 = vmatmul.mubr.bf16.gmra.mrb[0].mxu0 %v671
      %v984 = vpop.f32.mrb[0].mxu0
      %v985 = vadd.f32 %v350, %v984
      %v986 = vpop.f32.mrb[0].mxu0
      %v987 = vpop.f32.mrb[0].mxu0
      %v988 = vadd.f32 %v350, %v987
      %v989 = vpop.f32.mrb[0].mxu0
      %990 = vmatprep.mubr.bf16.mxu0 0
      %991 = vmatmul.mubr.bf16.gmra.mrb[0].mxu0 %v672
      %v992 = vpop.f32.mrb[0].mxu0
      %v993 = vadd.f32 %v350, %v992
      %v994 = vpop.f32.mrb[0].mxu0
      %v995 = vpop.f32.mrb[0].mxu0
      %v996 = vadd.f32 %v350, %v995
      %v997 = vpop.f32.mrb[0].mxu0
      %998 = vmatprep.mubr.bf16.mxu0 0
      %999 = vmatmul.mubr.bf16.gmra.mrb[0].mxu0 %v673
      %v1000 = vpop.f32.mrb[0].mxu0
      %v1001 = vadd.f32 %v350, %v1000
      %v1002 = vpop.f32.mrb[0].mxu0
      %v1003 = vpop.f32.mrb[0].mxu0
      %v1004 = vadd.f32 %v350, %v1003
      %v1005 = vpop.f32.mrb[0].mxu0
      %1006 = vmatprep.mubr.bf16.mxu0 0
      %1007 = vmatmul.mubr.bf16.gmra.mrb[0].mxu0 %v674
      %v1008 = vpop.f32.mrb[0].mxu0
      %v1009 = vadd.f32 %v350, %v1008
      %v1010 = vpop.f32.mrb[0].mxu0
      %v1011 = vpop.f32.mrb[0].mxu0
      %v1012 = vadd.f32 %v350, %v1011
      %v1013 = vpop.f32.mrb[0].mxu0
      %1014 = vmatprep.mubr.bf16.mxu0 0
      %1015 = vmatmul.mubr.bf16.gmra.mrb[0].mxu0 %v675
      %v1016 = vpop.f32.mrb[0].mxu0
      %v1017 = vadd.f32 %v350, %v1016
      %v1018 = vpop.f32.mrb[0].mxu0
      %v1019 = vpop.f32.mrb[0].mxu0
      %v1020 = vadd.f32 %v350, %v1019
      %v1021 = vpop.f32.mrb[0].mxu0
      %1022 = vmatprep.mubr.bf16.mxu0 0
      %1023 = vmatmul.mubr.bf16.gmra.mrb[0].mxu0 %v676
      %v1024 = vpop.f32.mrb[0].mxu0
      %v1025 = vadd.f32 %v350, %v1024
      %v1026 = vpop.f32.mrb[0].mxu0
      %v1027 = vpop.f32.mrb[0].mxu0
      %v1028 = vadd.f32 %v350, %v1027
      %v1029 = vpop.f32.mrb[0].mxu0
      %1030 = vmatprep.mubr.bf16.mxu0 0
      %1031 = vmatmul.mubr.bf16.gmra.mrb[0].mxu0 %v677
      %v1032 = vpop.f32.mrb[0].mxu0
      %v1033 = vadd.f32 %v350, %v1032
      %v1034 = vpop.f32.mrb[0].mxu0
      %v1035 = vpop.f32.mrb[0].mxu0
      %v1036 = vadd.f32 %v350, %v1035
      %v1037 = vpop.f32.mrb[0].mxu0
      %1038 = vmatprep.mubr.bf16.mxu0 0
      %1039 = vmatmul.mubr.bf16.gmra.mrb[0].mxu0 %v678
      %v1040 = vpop.f32.mrb[0].mxu0
      %v1041 = vadd.f32 %v350, %v1040
      %v1042 = vpop.f32.mrb[0].mxu0
      %v1043 = vpop.f32.mrb[0].mxu0
      %v1044 = vadd.f32 %v350, %v1043
      %v1045 = vpop.f32.mrb[0].mxu0
      %1046 = vmatprep.mubr.bf16.mxu0 0
      %1047 = vmatmul.mubr.bf16.gmra.mrb[0].mxu0 %v679
      %v1048 = vpop.f32.mrb[0].mxu0
      %v1049 = vadd.f32 %v350, %v1048
      %v1050 = vpop.f32.mrb[0].mxu0
      %v1051 = vpop.f32.mrb[0].mxu0
      %v1052 = vadd.f32 %v350, %v1051
      %v1053 = vpop.f32.mrb[0].mxu0
      %1054 = vmatprep.mubr.bf16.mxu0 0
      %1055 = vmatmul.mubr.bf16.gmra.mrb[0].mxu0 %v680
      %v1056 = vpop.f32.mrb[0].mxu0
      %v1057 = vadd.f32 %v350, %v1056
      %v1058 = vpop.f32.mrb[0].mxu0
      %v1059 = vpop.f32.mrb[0].mxu0
      %v1060 = vadd.f32 %v350, %v1059
      %v1061 = vpop.f32.mrb[0].mxu0
      %1062 = vmatprep.mubr.bf16.mxu0 0
      %1063 = vmatmul.mubr.bf16.gmra.mrb[0].mxu0 %v681
      %v1064 = vpop.f32.mrb[0].mxu0
      %v1065 = vadd.f32 %v350, %v1064
      %v1066 = vpop.f32.mrb[0].mxu0
      %v1067 = vpop.f32.mrb[0].mxu0
      %v1068 = vadd.f32 %v350, %v1067
      %v1069 = vpop.f32.mrb[0].mxu0
      %1070 = vmatprep.mubr.bf16.mxu0 0
      %1071 = vmatmul.mubr.bf16.gmra.mrb[0].mxu0 %v682
      %v1072 = vpop.f32.mrb[0].mxu0
      %v1073 = vadd.f32 %v350, %v1072
      %v1074 = vpop.f32.mrb[0].mxu0
      %v1075 = vpop.f32.mrb[0].mxu0
      %v1076 = vadd.f32 %v350, %v1075
      %v1077 = vpop.f32.mrb[0].mxu0
      %1078 = vmatprep.mubr.bf16.mxu0 0
      %1079 = vmatmul.mubr.bf16.gmra.mrb[0].mxu0 %v683
      %v1080 = vpop.f32.mrb[0].mxu0
      %v1081 = vadd.f32 %v350, %v1080
      %v1082 = vpop.f32.mrb[0].mxu0
      %v1083 = vpop.f32.mrb[0].mxu0
      %v1084 = vadd.f32 %v350, %v1083
      %v1085 = vpop.f32.mrb[0].mxu0
      %1086 = vmatprep.mubr.bf16.mxu0 0
      %1087 = vmatmul.mubr.bf16.gmra.mrb[0].mxu0 %v684
      %v1088 = vpop.f32.mrb[0].mxu0
      %v1089 = vadd.f32 %v350, %v1088
      %v1090 = vpop.f32.mrb[0].mxu0
      %v1091 = vpop.f32.mrb[0].mxu0
      %v1092 = vadd.f32 %v350, %v1091
      %v1093 = vpop.f32.mrb[0].mxu0
      %1094 = vmatprep.mubr.bf16.mxu0 0
      %1095 = vmatmul.mubr.bf16.gmra.mrb[0].mxu0 %v685
      %v1096 = vpop.f32.mrb[0].mxu0
      %v1097 = vadd.f32 %v350, %v1096
      %v1098 = vpop.f32.mrb[0].mxu0
      %v1099 = vpop.f32.mrb[0].mxu0
      %v1100 = vadd.f32 %v350, %v1099
      %v1101 = vpop.f32.mrb[0].mxu0
      %1102 = vmatprep.mubr.bf16.mxu0 0
      %1103 = vmatmul.mubr.bf16.gmra.mrb[0].mxu0 %v686
      %v1104 = vpop.f32.mrb[0].mxu0
      %v1105 = vadd.f32 %v350, %v1104
      %v1106 = vpop.f32.mrb[0].mxu0
      %v1107 = vpop.f32.mrb[0].mxu0
      %v1108 = vadd.f32 %v350, %v1107
      %v1109 = vpop.f32.mrb[0].mxu0
      %1110 = vmatprep.mubr.bf16.mxu0 0
      %1111 = vmatmul.mubr.bf16.gmra.mrb[0].mxu0 %v687
      %v1112 = vpop.f32.mrb[0].mxu0
      %v1113 = vadd.f32 %v350, %v1112
      %v1114 = vpop.f32.mrb[0].mxu0
      %v1115 = vpop.f32.mrb[0].mxu0
      %v1116 = vadd.f32 %v350, %v1115
      %v1117 = vpop.f32.mrb[0].mxu0
      %1118 = vmatprep.mubr.bf16.mxu0 0
      %1119 = vmatmul.mubr.bf16.gmra.mrb[0].mxu0 %v688
      %v1120 = vpop.f32.mrb[0].mxu0
      %v1121 = vadd.f32 %v350, %v1120
      %v1122 = vpop.f32.mrb[0].mxu0
      %v1123 = vpop.f32.mrb[0].mxu0
      %v1124 = vadd.f32 %v350, %v1123
      %v1125 = vpop.f32.mrb[0].mxu0
      %1126 = vmatprep.mubr.bf16.mxu0 0
      %1127 = vmatmul.mubr.bf16.gmra.mrb[0].mxu0 %v689
      %v1128 = vpop.f32.mrb[0].mxu0
      %v1129 = vadd.f32 %v350, %v1128
      %v1130 = vpop.f32.mrb[0].mxu0
      %v1131 = vpop.f32.mrb[0].mxu0
      %v1132 = vadd.f32 %v350, %v1131
      %v1133 = vpop.f32.mrb[0].mxu0
      %1134 = vmatprep.mubr.bf16.mxu0 0
      %1135 = vmatmul.mubr.bf16.gmra.mrb[0].mxu0 %v690
      %v1136 = vpop.f32.mrb[0].mxu0
      %v1137 = vadd.f32 %v350, %v1136
      %v1138 = vpop.f32.mrb[0].mxu0
      %v1139 = vpop.f32.mrb[0].mxu0
      %v1140 = vadd.f32 %v350, %v1139
      %v1141 = vpop.f32.mrb[0].mxu0
      %1142 = vmatprep.mubr.bf16.mxu0 0
      %1143 = vmatmul.mubr.bf16.gmra.mrb[0].mxu0 %v691
      %v1144 = vpop.f32.mrb[0].mxu0
      %v1145 = vadd.f32 %v350, %v1144
      %v1146 = vpop.f32.mrb[0].mxu0
      %v1147 = vpop.f32.mrb[0].mxu0
      %v1148 = vadd.f32 %v350, %v1147
      %v1149 = vpop.f32.mrb[0].mxu0
      %1150 = vmatprep.mubr.bf16.mxu0 0
      %1151 = vmatmul.mubr.bf16.gmra.mrb[0].mxu0 %v692
      %v1152 = vpop.f32.mrb[0].mxu0
      %v1153 = vadd.f32 %v350, %v1152
      %v1154 = vpop.f32.mrb[0].mxu0
      %v1155 = vpop.f32.mrb[0].mxu0
      %v1156 = vadd.f32 %v350, %v1155
      %v1157 = vpop.f32.mrb[0].mxu0
      %1158 = vmatprep.mubr.bf16.mxu0 0
      %1159 = vmatmul.mubr.bf16.gmra.mrb[0].mxu0 %v693
      %v1160 = vpop.f32.mrb[0].mxu0
      %v1161 = vadd.f32 %v350, %v1160
      %v1162 = vpop.f32.mrb[0].mxu0
      %v1163 = vpop.f32.mrb[0].mxu0
      %v1164 = vadd.f32 %v350, %v1163
      %v1165 = vpop.f32.mrb[0].mxu0
      %1166 = vmatprep.mubr.bf16.mxu0 0
      %1167 = vmatmul.mubr.bf16.gmra.mrb[0].mxu0 %v694
      %v1168 = vpop.f32.mrb[0].mxu0
      %v1169 = vadd.f32 %v350, %v1168
      %v1170 = vpop.f32.mrb[0].mxu0
      %v1171 = vpop.f32.mrb[0].mxu0
      %v1172 = vadd.f32 %v350, %v1171
      %v1173 = vpop.f32.mrb[0].mxu0
      %1174 = vmatprep.mubr.bf16.mxu0 0
      %1175 = vmatmul.mubr.bf16.gmra.mrb[0].mxu0 %v695
      %v1176 = vpop.f32.mrb[0].mxu0
      %v1177 = vadd.f32 %v350, %v1176
      %v1178 = vpop.f32.mrb[0].mxu0
      %v1179 = vpop.f32.mrb[0].mxu0
      %v1180 = vadd.f32 %v350, %v1179
      %v1181 = vpop.f32.mrb[0].mxu0
      %1182 = vmatprep.mubr.bf16.mxu0 0
      %1183 = vmatmul.mubr.bf16.gmra.mrb[0].mxu0 %v696
      %v1184 = vpop.f32.mrb[0].mxu0
      %v1185 = vadd.f32 %v350, %v1184
      %v1186 = vpop.f32.mrb[0].mxu0
      %v1187 = vpop.f32.mrb[0].mxu0
      %v1188 = vadd.f32 %v350, %v1187
      %v1189 = vpop.f32.mrb[0].mxu0
      %1190 = vmatprep.mubr.bf16.mxu0 0
      %1191 = vmatmul.mubr.bf16.gmra.mrb[0].mxu0 %v697
      %v1192 = vpop.f32.mrb[0].mxu0
      %v1193 = vadd.f32 %v350, %v1192
      %v1194 = vpop.f32.mrb[0].mxu0
      %v1195 = vpop.f32.mrb[0].mxu0
      %v1196 = vadd.f32 %v350, %v1195
      %v1197 = vpop.f32.mrb[0].mxu0
      %1198 = vmatprep.mubr.bf16.mxu0 0
      %1199 = vmatmul.mubr.bf16.gmra.mrb[0].mxu0 %v698
      %v1200 = vpop.f32.mrb[0].mxu0
      %v1201 = vadd.f32 %v350, %v1200
      %v1202 = vpop.f32.mrb[0].mxu0
      %v1203 = vpop.f32.mrb[0].mxu0
      %v1204 = vadd.f32 %v350, %v1203
      %v1205 = vpop.f32.mrb[0].mxu0
      %1206 = vmatprep.mubr.bf16.mxu0 0
      %1207 = vmatmul.mubr.bf16.gmra.mrb[0].mxu0 %v699
      %v1208 = vpop.f32.mrb[0].mxu0
      %v1209 = vadd.f32 %v350, %v1208
      %v1210 = vpop.f32.mrb[0].mxu0
      %v1211 = vpop.f32.mrb[0].mxu0
      %v1212 = vadd.f32 %v350, %v1211
      %v1213 = vpop.f32.mrb[0].mxu0
      %1214 = vmatprep.mubr.bf16.mxu0 0
      %1215 = vmatmul.mubr.bf16.gmra.mrb[0].mxu0 %v700
      %v1216 = vpop.f32.mrb[0].mxu0
      %v1217 = vadd.f32 %v350, %v1216
      %v1218 = vpop.f32.mrb[0].mxu0
      %v1219 = vpop.f32.mrb[0].mxu0
      %v1220 = vadd.f32 %v350, %v1219
      %v1221 = vpop.f32.mrb[0].mxu0
      %1222 = vmatprep.mubr.bf16.mxu0 0
      %1223 = vmatmul.mubr.bf16.gmra.mrb[0].mxu0 %v701
      %v1224 = vpop.f32.mrb[0].mxu0
      %v1225 = vadd.f32 %v350, %v1224
      %v1226 = vpop.f32.mrb[0].mxu0
      %v1227 = vpop.f32.mrb[0].mxu0
      %v1228 = vadd.f32 %v350, %v1227
      %v1229 = vpop.f32.mrb[0].mxu0
      %1230 = vmatprep.mubr.bf16.mxu0 0
      %1231 = vmatmul.mubr.bf16.gmra.mrb[0].mxu0 %v702
      %v1232 = vpop.f32.mrb[0].mxu0
      %v1233 = vadd.f32 %v350, %v1232
      %v1234 = vpop.f32.mrb[0].mxu0
      %v1235 = vpop.f32.mrb[0].mxu0
      %v1236 = vadd.f32 %v350, %v1235
      %v1237 = vpop.f32.mrb[0].mxu0
      %1238 = vmatprep.mubr.bf16.mxu0 0
      %1239 = vmatmul.mubr.bf16.gmra.mrb[0].mxu0 %v703
      %v1240 = vpop.f32.mrb[0].mxu0
      %v1241 = vadd.f32 %v350, %v1240
      %v1242 = vpop.f32.mrb[0].mxu0
      %v1243 = vpop.f32.mrb[0].mxu0
      %v1244 = vadd.f32 %v350, %v1243
      %v1245 = vpop.f32.mrb[0].mxu0
      %1246 = vmatprep.mubr.bf16.mxu0 0
      %1247 = vmatmul.mubr.bf16.gmra.mrb[0].mxu0 %v704
      %v1248 = vpop.f32.mrb[0].mxu0
      %v1249 = vadd.f32 %v350, %v1248
      %v1250 = vpop.f32.mrb[0].mxu0
      %v1251 = vpop.f32.mrb[0].mxu0
      %v1252 = vadd.f32 %v350, %v1251
      %v1253 = vpop.f32.mrb[0].mxu0
      %1254 = vmatprep.mubr.bf16.mxu0 0
      %1255 = vmatmul.mubr.bf16.gmra.mrb[0].mxu0 %v705
      %v1256 = vpop.f32.mrb[0].mxu0
      %v1257 = vadd.f32 %v350, %v1256
      %v1258 = vpop.f32.mrb[0].mxu0
      %v1259 = vpop.f32.mrb[0].mxu0
      %v1260 = vadd.f32 %v350, %v1259
      %v1261 = vpop.f32.mrb[0].mxu0
      %1262 = vmatprep.mubr.bf16.mxu0 0
      %1263 = vmatmul.mubr.bf16.gmra.mrb[0].mxu0 %v706
      %v1264 = vpop.f32.mrb[0].mxu0
      %v1265 = vadd.f32 %v350, %v1264
      %v1266 = vpop.f32.mrb[0].mxu0
      %v1267 = vpop.f32.mrb[0].mxu0
      %v1268 = vadd.f32 %v350, %v1267
      %v1269 = vpop.f32.mrb[0].mxu0
      %1270 = vmatprep.mubr.bf16.mxu0 0
      %1271 = vmatmul.mubr.bf16.gmra.mrb[0].mxu0 %v707
      %v1272 = vpop.f32.mrb[0].mxu0
      %v1273 = vadd.f32 %v350, %v1272
      %v1274 = vpop.f32.mrb[0].mxu0
      %v1275 = vpop.f32.mrb[0].mxu0
      %v1276 = vadd.f32 %v350, %v1275
      %v1277 = vpop.f32.mrb[0].mxu0
      %1278 = vmatprep.mubr.bf16.mxu0 0
      %1279 = vmatmul.mubr.bf16.gmra.mrb[0].mxu0 %v708
      %v1280 = vpop.f32.mrb[0].mxu0
      %v1281 = vadd.f32 %v350, %v1280
      %v1282 = vpop.f32.mrb[0].mxu0
      %v1283 = vpop.f32.mrb[0].mxu0
      %v1284 = vadd.f32 %v350, %v1283
      %v1285 = vpop.f32.mrb[0].mxu0
      %1286 = vmatprep.mubr.bf16.mxu0 0
      %1287 = vmatmul.mubr.bf16.gmra.mrb[0].mxu0 %v709
      %v1288 = vpop.f32.mrb[0].mxu0
      %v1289 = vadd.f32 %v350, %v1288
      %v1290 = vpop.f32.mrb[0].mxu0
      %v1291 = vpop.f32.mrb[0].mxu0
      %v1292 = vadd.f32 %v350, %v1291
      %v1293 = vpop.f32.mrb[0].mxu0
      %1294 = vmatprep.mubr.bf16.mxu0 0
      %1295 = vmatmul.mubr.bf16.gmra.mrb[0].mxu0 %v710
      %v1296 = vpop.f32.mrb[0].mxu0
      %v1297 = vadd.f32 %v350, %v1296
      %v1298 = vpop.f32.mrb[0].mxu0
      %v1299 = vpop.f32.mrb[0].mxu0
      %v1300 = vadd.f32 %v350, %v1299
      %v1301 = vpop.f32.mrb[0].mxu0
      %1302 = vmatprep.mubr.bf16.mxu0 0
      %1303 = vmatmul.mubr.bf16.gmra.mrb[0].mxu0 %v711
      %v1304 = vpop.f32.mrb[0].mxu0
      %v1305 = vadd.f32 %v350, %v1304
      %v1306 = vpop.f32.mrb[0].mxu0
      %v1307 = vpop.f32.mrb[0].mxu0
      %v1308 = vadd.f32 %v350, %v1307
      %v1309 = vpop.f32.mrb[0].mxu0
      %1310 = vmatprep.mubr.bf16.mxu0 0
      %1311 = vmatmul.mubr.bf16.gmra.mrb[0].mxu0 %v712
      %v1312 = vpop.f32.mrb[0].mxu0
      %v1313 = vadd.f32 %v350, %v1312
      %v1314 = vpop.f32.mrb[0].mxu0
      %v1315 = vpop.f32.mrb[0].mxu0
      %v1316 = vadd.f32 %v350, %v1315
      %v1317 = vpop.f32.mrb[0].mxu0
      %1318 = vmatprep.mubr.bf16.mxu0 0
      %1319 = vmatmul.mubr.bf16.gmra.mrb[0].mxu0 %v713
      %v1320 = vpop.f32.mrb[0].mxu0
      %v1321 = vadd.f32 %v350, %v1320
      %v1322 = vpop.f32.mrb[0].mxu0
      %v1323 = vpop.f32.mrb[0].mxu0
      %v1324 = vadd.f32 %v350, %v1323
      %v1325 = vpop.f32.mrb[0].mxu0
      %1326 = vmatprep.mubr.bf16.mxu0 0
      %1327 = vmatmul.mubr.bf16.gmra.mrb[0].mxu0 %v714
      %v1328 = vpop.f32.mrb[0].mxu0
      %v1329 = vadd.f32 %v350, %v1328
      %v1330 = vpop.f32.mrb[0].mxu0
      %v1331 = vpop.f32.mrb[0].mxu0
      %v1332 = vadd.f32 %v350, %v1331
      %v1333 = vpop.f32.mrb[0].mxu0
      %1334 = vmatprep.mubr.bf16.mxu0 0
      %1335 = vmatmul.mubr.bf16.gmra.mrb[0].mxu0 %v715
      %v1336 = vpop.f32.mrb[0].mxu0
      %v1337 = vadd.f32 %v350, %v1336
      %v1338 = vpop.f32.mrb[0].mxu0
      %v1339 = vpop.f32.mrb[0].mxu0
      %v1340 = vadd.f32 %v350, %v1339
      %v1341 = vpop.f32.mrb[0].mxu0
      %1342 = vmatprep.mubr.bf16.mxu0 0
      %1343 = vmatmul.mubr.bf16.gmra.mrb[0].mxu0 %v716
      %v1344 = vpop.f32.mrb[0].mxu0
      %v1345 = vadd.f32 %v350, %v1344
      %v1346 = vpop.f32.mrb[0].mxu0
      %v1347 = vpop.f32.mrb[0].mxu0
      %v1348 = vadd.f32 %v350, %v1347
      %v1349 = vpop.f32.mrb[0].mxu0
      %1350 = vmatprep.mubr.bf16.mxu0 0
      %1351 = vmatmul.mubr.bf16.gmra.mrb[0].mxu0 %v717
      %v1352 = vpop.f32.mrb[0].mxu0
      %v1353 = vadd.f32 %v350, %v1352
      %v1354 = vpop.f32.mrb[0].mxu0
      %v1355 = vpop.f32.mrb[0].mxu0
      %v1356 = vadd.f32 %v350, %v1355
      %v1357 = vpop.f32.mrb[0].mxu0
      %1358 = vmatprep.mubr.bf16.mxu0 0
      %1359 = vmatmul.mubr.bf16.gmra.mrb[0].mxu0 %v718
      %v1360 = vpop.f32.mrb[0].mxu0
      %v1361 = vadd.f32 %v350, %v1360
      %v1362 = vpop.f32.mrb[0].mxu0
      %v1363 = vpop.f32.mrb[0].mxu0
      %v1364 = vadd.f32 %v350, %v1363
      %v1365 = vpop.f32.mrb[0].mxu0
      %1366 = vmatprep.mubr.bf16.mxu0 0
      %1367 = vmatmul.mubr.bf16.gmra.mrb[0].mxu0 %v719
      %v1368 = vpop.f32.mrb[0].mxu0
      %v1369 = vadd.f32 %v350, %v1368
      %v1370 = vpop.f32.mrb[0].mxu0
      %v1371 = vpop.f32.mrb[0].mxu0
      %v1372 = vadd.f32 %v350, %v1371
      %v1373 = vpop.f32.mrb[0].mxu0
      %1374 = vmatprep.mubr.bf16.mxu0 0
      %1375 = vmatmul.mubr.bf16.gmra.mrb[0].mxu0 %v720
      %v1376 = vpop.f32.mrb[0].mxu0
      %v1377 = vadd.f32 %v350, %v1376
      %v1378 = vpop.f32.mrb[0].mxu0
      %v1379 = vpop.f32.mrb[0].mxu0
      %v1380 = vadd.f32 %v350, %v1379
      %v1381 = vpop.f32.mrb[0].mxu0
      %1382 = vmatprep.mubr.bf16.mxu0 0
      %1383 = vmatmul.mubr.bf16.gmra.mrb[0].mxu0 %v721
      %v1384 = vpop.f32.mrb[0].mxu0
      %v1385 = vadd.f32 %v350, %v1384
      %v1386 = vpop.f32.mrb[0].mxu0
      %v1387 = vpop.f32.mrb[0].mxu0
      %v1388 = vadd.f32 %v350, %v1387
      %v1389 = vpop.f32.mrb[0].mxu0
      %1390 = vmatprep.mubr.bf16.mxu0 0
      %1391 = vmatmul.mubr.bf16.gmra.mrb[0].mxu0 %v722
      %v1392 = vpop.f32.mrb[0].mxu0
      %v1393 = vadd.f32 %v350, %v1392
      %v1394 = vpop.f32.mrb[0].mxu0
      %v1395 = vpop.f32.mrb[0].mxu0
      %v1396 = vadd.f32 %v350, %v1395
      %v1397 = vpop.f32.mrb[0].mxu0
      %1398 = vmatprep.mubr.bf16.mxu0 0
      %1399 = vmatmul.mubr.bf16.gmra.mrb[0].mxu0 %v723
      %v1400 = vpop.f32.mrb[0].mxu0
      %v1401 = vadd.f32 %v350, %v1400
      %v1402 = vpop.f32.mrb[0].mxu0
      %v1403 = vpop.f32.mrb[0].mxu0
      %v1404 = vadd.f32 %v350, %v1403
      %v1405 = vpop.f32.mrb[0].mxu0
      %1406 = vmatprep.mubr.bf16.mxu0 0
      %1407 = vmatmul.mubr.bf16.gmra.mrb[0].mxu0 %v724
      %v1408 = vpop.f32.mrb[0].mxu0
      %v1409 = vadd.f32 %v350, %v1408
      %v1410 = vpop.f32.mrb[0].mxu0
      %v1411 = vpop.f32.mrb[0].mxu0
      %v1412 = vadd.f32 %v350, %v1411
      %v1413 = vpop.f32.mrb[0].mxu0
      %1414 = vmatprep.mubr.bf16.mxu0 0
      %1415 = vmatmul.mubr.bf16.gmra.mrb[0].mxu0 %v725
      %v1416 = vpop.f32.mrb[0].mxu0
      %v1417 = vadd.f32 %v350, %v1416
      %v1418 = vpop.f32.mrb[0].mxu0
      %v1419 = vpop.f32.mrb[0].mxu0
      %v1420 = vadd.f32 %v350, %v1419
      %v1421 = vpop.f32.mrb[0].mxu0
      %1422 = vmatprep.mubr.bf16.mxu0 0
      %1423 = vmatmul.mubr.bf16.gmra.mrb[0].mxu0 %v726
      %v1424 = vpop.f32.mrb[0].mxu0
      %v1425 = vadd.f32 %v350, %v1424
      %v1426 = vpop.f32.mrb[0].mxu0
      %v1427 = vpop.f32.mrb[0].mxu0
      %v1428 = vadd.f32 %v350, %v1427
      %v1429 = vpop.f32.mrb[0].mxu0
      %1430 = vmatprep.mubr.bf16.mxu0 0
      %1431 = vmatmul.mubr.bf16.gmra.mrb[0].mxu0 %v727
      %v1432 = vpop.f32.mrb[0].mxu0
      %v1433 = vadd.f32 %v350, %v1432
      %v1434 = vpop.f32.mrb[0].mxu0
      %v1435 = vpop.f32.mrb[0].mxu0
      %v1436 = vadd.f32 %v350, %v1435
      %v1437 = vpop.f32.mrb[0].mxu0
      %1438 = vmatprep.mubr.bf16.mxu0 0
      %1439 = vmatmul.mubr.bf16.gmra.mrb[0].mxu0 %v728
      %v1440 = vpop.f32.mrb[0].mxu0
      %v1441 = vadd.f32 %v350, %v1440
      %v1442 = vpop.f32.mrb[0].mxu0
      %v1443 = vpop.f32.mrb[0].mxu0
      %v1444 = vadd.f32 %v350, %v1443
      %v1445 = vpop.f32.mrb[0].mxu0
      %1446 = vmatprep.mubr.bf16.mxu0 0
      %1447 = vmatmul.mubr.bf16.gmra.mrb[0].mxu0 %v729
      %v1448 = vpop.f32.mrb[0].mxu0
      %v1449 = vadd.f32 %v350, %v1448
      %v1450 = vpop.f32.mrb[0].mxu0
      %v1451 = vpop.f32.mrb[0].mxu0
      %v1452 = vadd.f32 %v350, %v1451
      %v1453 = vpop.f32.mrb[0].mxu0
      %1454 = vmatprep.mubr.bf16.mxu0 0
      %1455 = vmatmul.mubr.bf16.gmra.mrb[0].mxu0 %v730
      %v1456 = vpop.f32.mrb[0].mxu0
      %v1457 = vadd.f32 %v350, %v1456
      %v1458 = vpop.f32.mrb[0].mxu0
      %v1459 = vpop.f32.mrb[0].mxu0
      %v1460 = vadd.f32 %v350, %v1459
      %v1461 = vpop.f32.mrb[0].mxu0
      %1462 = vmatprep.mubr.bf16.mxu0 0
      %1463 = vmatmul.mubr.bf16.gmra.mrb[0].mxu0 %v731
      %v1464 = vpop.f32.mrb[0].mxu0
      %v1465 = vadd.f32 %v350, %v1464
      %v1466 = vpop.f32.mrb[0].mxu0
      %v1467 = vpop.f32.mrb[0].mxu0
      %v1468 = vadd.f32 %v350, %v1467
      %v1469 = vpop.f32.mrb[0].mxu0
      %1470 = vmatprep.mubr.bf16.mxu0 0
      %1471 = vmatmul.mubr.bf16.gmra.mrb[0].mxu0 %v732
      %v1472 = vpop.f32.mrb[0].mxu0
      %v1473 = vadd.f32 %v350, %v1472
      %v1474 = vpop.f32.mrb[0].mxu0
      %v1475 = vpop.f32.mrb[0].mxu0
      %v1476 = vadd.f32 %v350, %v1475
      %v1477 = vpop.f32.mrb[0].mxu0
      %1478 = vmatprep.mubr.bf16.mxu0 0
      %1479 = vmatmul.mubr.bf16.gmra.mrb[0].mxu0 %v733
      %v1480 = vpop.f32.mrb[0].mxu0
      %v1481 = vadd.f32 %v350, %v1480
      %v1482 = vpop.f32.mrb[0].mxu0
      %v1483 = vpop.f32.mrb[0].mxu0
      %v1484 = vadd.f32 %v350, %v1483
      %v1485 = vpop.f32.mrb[0].mxu0
      %1486 = vmatprep.mubr.bf16.mxu0 0
      %1487 = vmatmul.mubr.bf16.gmra.mrb[0].mxu0 %v734
      %v1488 = vpop.f32.mrb[0].mxu0
      %v1489 = vadd.f32 %v350, %v1488
      %v1490 = vpop.f32.mrb[0].mxu0
      %v1491 = vpop.f32.mrb[0].mxu0
      %v1492 = vadd.f32 %v350, %v1491
      %v1493 = vpop.f32.mrb[0].mxu0
      %1494 = vmatprep.mubr.bf16.mxu0 0
      %1495 = vmatmul.mubr.bf16.gmra.mrb[0].mxu0 %v735
      %v1496 = vpop.f32.mrb[0].mxu0
      %v1497 = vadd.f32 %v350, %v1496
      %v1498 = vpop.f32.mrb[0].mxu0
      %v1499 = vpop.f32.mrb[0].mxu0
      %v1500 = vadd.f32 %v350, %v1499
      %v1501 = vpop.f32.mrb[0].mxu0
      %1502 = vmatprep.mubr.bf16.mxu0 0
      %1503 = vmatmul.mubr.bf16.gmra.mrb[0].mxu0 %v736
      %v1504 = vpop.f32.mrb[0].mxu0
      %v1505 = vadd.f32 %v350, %v1504
      %v1506 = vpop.f32.mrb[0].mxu0
      %v1507 = vpop.f32.mrb[0].mxu0
      %v1508 = vadd.f32 %v350, %v1507
      %v1509 = vpop.f32.mrb[0].mxu0
      %1510 = vdwg.mxu0
      %v1511 = vmax.f32 %v897, 0.0
      %v1512 = vmax.f32 %v900, 0.0
      %v1513 = vmax.f32 %v905, 0.0
      %v1514 = vmax.f32 %v908, 0.0
      %v1515 = vmax.f32 %v913, 0.0
      %v1516 = vmax.f32 %v916, 0.0
      %v1517 = vmax.f32 %v921, 0.0
      %v1518 = vmax.f32 %v924, 0.0
      %v1519 = vmax.f32 %v929, 0.0
      %v1520 = vmax.f32 %v932, 0.0
      %v1521 = vmax.f32 %v937, 0.0
      %v1522 = vmax.f32 %v940, 0.0
      %v1523 = vmax.f32 %v945, 0.0
      %v1524 = vmax.f32 %v948, 0.0
      %v1525 = vmax.f32 %v953, 0.0
      %v1526 = vmax.f32 %v956, 0.0
      %v1527 = vmax.f32 %v961, 0.0
      %v1528 = vmax.f32 %v964, 0.0
      %v1529 = vmax.f32 %v969, 0.0
      %v1530 = vmax.f32 %v972, 0.0
      %v1531 = vmax.f32 %v977, 0.0
      %v1532 = vmax.f32 %v980, 0.0
      %v1533 = vmax.f32 %v985, 0.0
      %v1534 = vmax.f32 %v988, 0.0
      %v1535 = vmax.f32 %v993, 0.0
      %v1536 = vmax.f32 %v996, 0.0
      %v1537 = vmax.f32 %v1001, 0.0
      %v1538 = vmax.f32 %v1004, 0.0
      %v1539 = vmax.f32 %v1009, 0.0
      %v1540 = vmax.f32 %v1012, 0.0
      %v1541 = vmax.f32 %v1017, 0.0
      %v1542 = vmax.f32 %v1020, 0.0
      %v1543 = vmax.f32 %v1025, 0.0
      %v1544 = vmax.f32 %v1028, 0.0
      %v1545 = vmax.f32 %v1033, 0.0
      %v1546 = vmax.f32 %v1036, 0.0
      %v1547 = vmax.f32 %v1041, 0.0
      %v1548 = vmax.f32 %v1044, 0.0
      %v1549 = vmax.f32 %v1049, 0.0
      %v1550 = vmax.f32 %v1052, 0.0
      %v1551 = vmax.f32 %v1057, 0.0
      %v1552 = vmax.f32 %v1060, 0.0
      %v1553 = vmax.f32 %v1065, 0.0
      %v1554 = vmax.f32 %v1068, 0.0
      %v1555 = vmax.f32 %v1073, 0.0
      %v1556 = vmax.f32 %v1076, 0.0
      %v1557 = vmax.f32 %v1081, 0.0
      %v1558 = vmax.f32 %v1084, 0.0
      %v1559 = vmax.f32 %v1089, 0.0
      %v1560 = vmax.f32 %v1092, 0.0
      %v1561 = vmax.f32 %v1097, 0.0
      %v1562 = vmax.f32 %v1100, 0.0
      %v1563 = vmax.f32 %v1105, 0.0
      %v1564 = vmax.f32 %v1108, 0.0
      %v1565 = vmax.f32 %v1113, 0.0
      %v1566 = vmax.f32 %v1116, 0.0
      %v1567 = vmax.f32 %v1121, 0.0
      %v1568 = vmax.f32 %v1124, 0.0
      %v1569 = vmax.f32 %v1129, 0.0
      %v1570 = vmax.f32 %v1132, 0.0
      %v1571 = vmax.f32 %v1137, 0.0
      %v1572 = vmax.f32 %v1140, 0.0
      %v1573 = vmax.f32 %v1145, 0.0
      %v1574 = vmax.f32 %v1148, 0.0
      %v1575 = vmax.f32 %v1153, 0.0
      %v1576 = vmax.f32 %v1156, 0.0
      %v1577 = vmax.f32 %v1161, 0.0
      %v1578 = vmax.f32 %v1164, 0.0
      %v1579 = vmax.f32 %v1169, 0.0
      %v1580 = vmax.f32 %v1172, 0.0
      %v1581 = vmax.f32 %v1177, 0.0
      %v1582 = vmax.f32 %v1180, 0.0
      %v1583 = vmax.f32 %v1185, 0.0
      %v1584 = vmax.f32 %v1188, 0.0
      %v1585 = vmax.f32 %v1193, 0.0
      %v1586 = vmax.f32 %v1196, 0.0
      %v1587 = vmax.f32 %v1201, 0.0
      %v1588 = vmax.f32 %v1204, 0.0
      %v1589 = vmax.f32 %v1209, 0.0
      %v1590 = vmax.f32 %v1212, 0.0
      %v1591 = vmax.f32 %v1217, 0.0
      %v1592 = vmax.f32 %v1220, 0.0
      %v1593 = vmax.f32 %v1225, 0.0
      %v1594 = vmax.f32 %v1228, 0.0
      %v1595 = vmax.f32 %v1233, 0.0
      %v1596 = vmax.f32 %v1236, 0.0
      %v1597 = vmax.f32 %v1241, 0.0
      %v1598 = vmax.f32 %v1244, 0.0
      %v1599 = vmax.f32 %v1249, 0.0
      %v1600 = vmax.f32 %v1252, 0.0
      %v1601 = vmax.f32 %v1257, 0.0
      %v1602 = vmax.f32 %v1260, 0.0
      %v1603 = vmax.f32 %v1265, 0.0
      %v1604 = vmax.f32 %v1268, 0.0
      %v1605 = vmax.f32 %v1273, 0.0
      %v1606 = vmax.f32 %v1276, 0.0
      %v1607 = vmax.f32 %v1281, 0.0
      %v1608 = vmax.f32 %v1284, 0.0
      %v1609 = vmax.f32 %v1289, 0.0
      %v1610 = vmax.f32 %v1292, 0.0
      %v1611 = vmax.f32 %v1297, 0.0
      %v1612 = vmax.f32 %v1300, 0.0
      %v1613 = vmax.f32 %v1305, 0.0
      %v1614 = vmax.f32 %v1308, 0.0
      %v1615 = vmax.f32 %v1313, 0.0
      %v1616 = vmax.f32 %v1316, 0.0
      %v1617 = vmax.f32 %v1321, 0.0
      %v1618 = vmax.f32 %v1324, 0.0
      %v1619 = vmax.f32 %v1329, 0.0
      %v1620 = vmax.f32 %v1332, 0.0
      %v1621 = vmax.f32 %v1337, 0.0
      %v1622 = vmax.f32 %v1340, 0.0
      %v1623 = vmax.f32 %v1345, 0.0
      %v1624 = vmax.f32 %v1348, 0.0
      %v1625 = vmax.f32 %v1353, 0.0
      %v1626 = vmax.f32 %v1356, 0.0
      %v1627 = vmax.f32 %v1361, 0.0
      %v1628 = vmax.f32 %v1364, 0.0
      %v1629 = vmax.f32 %v1369, 0.0
      %v1630 = vmax.f32 %v1372, 0.0
      %v1631 = vmax.f32 %v1377, 0.0
      %v1632 = vmax.f32 %v1380, 0.0
      %v1633 = vmax.f32 %v1385, 0.0
      %v1634 = vmax.f32 %v1388, 0.0
      %v1635 = vmax.f32 %v1393, 0.0
      %v1636 = vmax.f32 %v1396, 0.0
      %v1637 = vmax.f32 %v1401, 0.0
      %v1638 = vmax.f32 %v1404, 0.0
      %v1639 = vmax.f32 %v1409, 0.0
      %v1640 = vmax.f32 %v1412, 0.0
      %v1641 = vmax.f32 %v1417, 0.0
      %v1642 = vmax.f32 %v1420, 0.0
      %v1643 = vmax.f32 %v1425, 0.0
      %v1644 = vmax.f32 %v1428, 0.0
      %v1645 = vmax.f32 %v1433, 0.0
      %v1646 = vmax.f32 %v1436, 0.0
      %v1647 = vmax.f32 %v1441, 0.0
      %v1648 = vmax.f32 %v1444, 0.0
      %v1649 = vmax.f32 %v1449, 0.0
      %v1650 = vmax.f32 %v1452, 0.0
      %v1651 = vmax.f32 %v1457, 0.0
      %v1652 = vmax.f32 %v1460, 0.0
      %v1653 = vmax.f32 %v1465, 0.0
      %v1654 = vmax.f32 %v1468, 0.0
      %v1655 = vmax.f32 %v1473, 0.0
      %v1656 = vmax.f32 %v1476, 0.0
      %v1657 = vmax.f32 %v1481, 0.0
      %v1658 = vmax.f32 %v1484, 0.0
      %v1659 = vmax.f32 %v1489, 0.0
      %v1660 = vmax.f32 %v1492, 0.0
      %v1661 = vmax.f32 %v1497, 0.0
      %v1662 = vmax.f32 %v1500, 0.0
      %v1663 = vmax.f32 %v1505, 0.0
      %v1664 = vmax.f32 %v1508, 0.0
      %v1665 = vpack.c.bf16 %v1512, %v1511
      %v1666 = vpack.c.bf16 %v1514, %v1513
      %v1667 = vpack.c.bf16 %v1516, %v1515
      %v1668 = vpack.c.bf16 %v1518, %v1517
      %v1669 = vpack.c.bf16 %v1520, %v1519
      %v1670 = vpack.c.bf16 %v1522, %v1521
      %v1671 = vpack.c.bf16 %v1524, %v1523
      %v1672 = vpack.c.bf16 %v1526, %v1525
      %v1673 = vpack.c.bf16 %v1528, %v1527
      %v1674 = vpack.c.bf16 %v1530, %v1529
      %v1675 = vpack.c.bf16 %v1532, %v1531
      %v1676 = vpack.c.bf16 %v1534, %v1533
      %v1677 = vpack.c.bf16 %v1536, %v1535
      %v1678 = vpack.c.bf16 %v1538, %v1537
      %v1679 = vpack.c.bf16 %v1540, %v1539
      %v1680 = vpack.c.bf16 %v1542, %v1541
      %v1681 = vpack.c.bf16 %v1544, %v1543
      %v1682 = vpack.c.bf16 %v1546, %v1545
      %v1683 = vpack.c.bf16 %v1548, %v1547
      %v1684 = vpack.c.bf16 %v1550, %v1549
      %v1685 = vpack.c.bf16 %v1552, %v1551
      %v1686 = vpack.c.bf16 %v1554, %v1553
      %v1687 = vpack.c.bf16 %v1556, %v1555
      %v1688 = vpack.c.bf16 %v1558, %v1557
      %v1689 = vpack.c.bf16 %v1560, %v1559
      %v1690 = vpack.c.bf16 %v1562, %v1561
      %v1691 = vpack.c.bf16 %v1564, %v1563
      %v1692 = vpack.c.bf16 %v1566, %v1565
      %v1693 = vpack.c.bf16 %v1568, %v1567
      %v1694 = vpack.c.bf16 %v1570, %v1569
      %v1695 = vpack.c.bf16 %v1572, %v1571
      %v1696 = vpack.c.bf16 %v1574, %v1573
      %v1697 = vpack.c.bf16 %v1576, %v1575
      %v1698 = vpack.c.bf16 %v1578, %v1577
      %v1699 = vpack.c.bf16 %v1580, %v1579
      %v1700 = vpack.c.bf16 %v1582, %v1581
      %v1701 = vpack.c.bf16 %v1584, %v1583
      %v1702 = vpack.c.bf16 %v1586, %v1585
      %v1703 = vpack.c.bf16 %v1588, %v1587
      %v1704 = vpack.c.bf16 %v1590, %v1589
      %v1705 = vpack.c.bf16 %v1592, %v1591
      %v1706 = vpack.c.bf16 %v1594, %v1593
      %v1707 = vpack.c.bf16 %v1596, %v1595
      %v1708 = vpack.c.bf16 %v1598, %v1597
      %v1709 = vpack.c.bf16 %v1600, %v1599
      %v1710 = vpack.c.bf16 %v1602, %v1601
      %v1711 = vpack.c.bf16 %v1604, %v1603
      %v1712 = vpack.c.bf16 %v1606, %v1605
      %v1713 = vpack.c.bf16 %v1608, %v1607
      %v1714 = vpack.c.bf16 %v1610, %v1609
      %v1715 = vpack.c.bf16 %v1612, %v1611
      %v1716 = vpack.c.bf16 %v1614, %v1613
      %v1717 = vpack.c.bf16 %v1616, %v1615
      %v1718 = vpack.c.bf16 %v1618, %v1617
      %v1719 = vpack.c.bf16 %v1620, %v1619
      %v1720 = vpack.c.bf16 %v1622, %v1621
      %v1721 = vpack.c.bf16 %v1624, %v1623
      %v1722 = vpack.c.bf16 %v1626, %v1625
      %v1723 = vpack.c.bf16 %v1628, %v1627
      %v1724 = vpack.c.bf16 %v1630, %v1629
      %v1725 = vpack.c.bf16 %v1632, %v1631
      %v1726 = vpack.c.bf16 %v1634, %v1633
      %v1727 = vpack.c.bf16 %v1636, %v1635
      %v1728 = vpack.c.bf16 %v1638, %v1637
      %v1729 = vpack.c.bf16 %v1640, %v1639
      %v1730 = vpack.c.bf16 %v1642, %v1641
      %v1731 = vpack.c.bf16 %v1644, %v1643
      %v1732 = vpack.c.bf16 %v1646, %v1645
      %v1733 = vpack.c.bf16 %v1648, %v1647
      %v1734 = vpack.c.bf16 %v1650, %v1649
      %v1735 = vpack.c.bf16 %v1652, %v1651
      %v1736 = vpack.c.bf16 %v1654, %v1653
      %v1737 = vpack.c.bf16 %v1656, %v1655
      %v1738 = vpack.c.bf16 %v1658, %v1657
      %v1739 = vpack.c.bf16 %v1660, %v1659
      %v1740 = vpack.c.bf16 %v1662, %v1661
      %v1741 = vpack.c.bf16 %v1664, %v1663
      %v1819 = vunpack.c.l.b16 %v1665
      %v1820 = vunpack.c.h.b16 %v1665
      %v1821 = vunpack.c.l.b16 %v1666
      %v1822 = vunpack.c.h.b16 %v1666
      %v1823 = vunpack.c.l.b16 %v1667
      %v1824 = vunpack.c.h.b16 %v1667
      %v1825 = vunpack.c.l.b16 %v1668
      %v1826 = vunpack.c.h.b16 %v1668
      %v1827 = vunpack.c.l.b16 %v1669
      %v1828 = vunpack.c.h.b16 %v1669
      %v1829 = vunpack.c.l.b16 %v1670
      %v1830 = vunpack.c.h.b16 %v1670
      %v1831 = vunpack.c.l.b16 %v1671
      %v1832 = vunpack.c.h.b16 %v1671
      %v1833 = vunpack.c.l.b16 %v1672
      %v1834 = vunpack.c.h.b16 %v1672
      %v1835 = vunpack.c.l.b16 %v1673
      %v1836 = vunpack.c.h.b16 %v1673
      %v1837 = vunpack.c.l.b16 %v1674
      %v1838 = vunpack.c.h.b16 %v1674
      %v1839 = vunpack.c.l.b16 %v1675
      %v1840 = vunpack.c.h.b16 %v1675
      %v1841 = vunpack.c.l.b16 %v1676
      %v1842 = vunpack.c.h.b16 %v1676
      %v1843 = vunpack.c.l.b16 %v1677
      %v1844 = vunpack.c.h.b16 %v1677
      %v1845 = vunpack.c.l.b16 %v1678
      %v1846 = vunpack.c.h.b16 %v1678
      %v1847 = vunpack.c.l.b16 %v1679
      %v1848 = vunpack.c.h.b16 %v1679
      %v1849 = vunpack.c.l.b16 %v1680
      %v1850 = vunpack.c.h.b16 %v1680
      %v1851 = vunpack.c.l.b16 %v1681
      %v1852 = vunpack.c.h.b16 %v1681
      %v1853 = vunpack.c.l.b16 %v1682
      %v1854 = vunpack.c.h.b16 %v1682
      %v1855 = vunpack.c.l.b16 %v1683
      %v1856 = vunpack.c.h.b16 %v1683
      %v1857 = vunpack.c.l.b16 %v1684
      %v1858 = vunpack.c.h.b16 %v1684
      %v1859 = vunpack.c.l.b16 %v1685
      %v1860 = vunpack.c.h.b16 %v1685
      %v1861 = vunpack.c.l.b16 %v1686
      %v1862 = vunpack.c.h.b16 %v1686
      %v1863 = vunpack.c.l.b16 %v1687
      %v1864 = vunpack.c.h.b16 %v1687
      %v1865 = vunpack.c.l.b16 %v1688
      %v1866 = vunpack.c.h.b16 %v1688
      %v1867 = vunpack.c.l.b16 %v1689
      %v1868 = vunpack.c.h.b16 %v1689
      %v1869 = vunpack.c.l.b16 %v1690
      %v1870 = vunpack.c.h.b16 %v1690
      %v1871 = vunpack.c.l.b16 %v1691
      %v1872 = vunpack.c.h.b16 %v1691
      %v1873 = vunpack.c.l.b16 %v1692
      %v1874 = vunpack.c.h.b16 %v1692
      %v1875 = vunpack.c.l.b16 %v1693
      %v1876 = vunpack.c.h.b16 %v1693
      %v1877 = vunpack.c.l.b16 %v1694
      %v1878 = vunpack.c.h.b16 %v1694
      %v1879 = vunpack.c.l.b16 %v1695
      %v1880 = vunpack.c.h.b16 %v1695
      %v1881 = vunpack.c.l.b16 %v1696
      %v1882 = vunpack.c.h.b16 %v1696
      %v1883 = vunpack.c.l.b16 %v1697
      %v1884 = vunpack.c.h.b16 %v1697
      %v1885 = vunpack.c.l.b16 %v1698
      %v1886 = vunpack.c.h.b16 %v1698
      %v1887 = vunpack.c.l.b16 %v1699
      %v1888 = vunpack.c.h.b16 %v1699
      %v1889 = vunpack.c.l.b16 %v1700
      %v1890 = vunpack.c.h.b16 %v1700
      %v1891 = vunpack.c.l.b16 %v1701
      %v1892 = vunpack.c.h.b16 %v1701
      %v1893 = vunpack.c.l.b16 %v1702
      %v1894 = vunpack.c.h.b16 %v1702
      %v1895 = vunpack.c.l.b16 %v1703
      %v1896 = vunpack.c.h.b16 %v1703
      %v1897 = vunpack.c.l.b16 %v1704
      %v1898 = vunpack.c.h.b16 %v1704
      %v1899 = vunpack.c.l.b16 %v1705
      %v1900 = vunpack.c.h.b16 %v1705
      %v1901 = vunpack.c.l.b16 %v1706
      %v1902 = vunpack.c.h.b16 %v1706
      %v1903 = vunpack.c.l.b16 %v1707
      %v1904 = vunpack.c.h.b16 %v1707
      %v1905 = vunpack.c.l.b16 %v1708
      %v1906 = vunpack.c.h.b16 %v1708
      %v1907 = vunpack.c.l.b16 %v1709
      %v1908 = vunpack.c.h.b16 %v1709
      %v1909 = vunpack.c.l.b16 %v1710
      %v1910 = vunpack.c.h.b16 %v1710
      %v1911 = vunpack.c.l.b16 %v1711
      %v1912 = vunpack.c.h.b16 %v1711
      %v1913 = vunpack.c.l.b16 %v1712
      %v1914 = vunpack.c.h.b16 %v1712
      %v1915 = vunpack.c.l.b16 %v1713
      %v1916 = vunpack.c.h.b16 %v1713
      %v1917 = vunpack.c.l.b16 %v1714
      %v1918 = vunpack.c.h.b16 %v1714
      %v1919 = vunpack.c.l.b16 %v1715
      %v1920 = vunpack.c.h.b16 %v1715
      %v1921 = vunpack.c.l.b16 %v1716
      %v1922 = vunpack.c.h.b16 %v1716
      %v1923 = vunpack.c.l.b16 %v1717
      %v1924 = vunpack.c.h.b16 %v1717
      %v1925 = vunpack.c.l.b16 %v1718
      %v1926 = vunpack.c.h.b16 %v1718
      %v1927 = vunpack.c.l.b16 %v1719
      %v1928 = vunpack.c.h.b16 %v1719
      %v1929 = vunpack.c.l.b16 %v1720
      %v1930 = vunpack.c.h.b16 %v1720
      %v1931 = vunpack.c.l.b16 %v1721
      %v1932 = vunpack.c.h.b16 %v1721
      %v1933 = vunpack.c.l.b16 %v1722
      %v1934 = vunpack.c.h.b16 %v1722
      %v1935 = vunpack.c.l.b16 %v1723
      %v1936 = vunpack.c.h.b16 %v1723
      %v1937 = vunpack.c.l.b16 %v1724
      %v1938 = vunpack.c.h.b16 %v1724
      %v1939 = vunpack.c.l.b16 %v1725
      %v1940 = vunpack.c.h.b16 %v1725
      %v1941 = vunpack.c.l.b16 %v1726
      %v1942 = vunpack.c.h.b16 %v1726
      %v1943 = vunpack.c.l.b16 %v1727
      %v1944 = vunpack.c.h.b16 %v1727
      %v1945 = vunpack.c.l.b16 %v1728
      %v1946 = vunpack.c.h.b16 %v1728
      %v1947 = vunpack.c.l.b16 %v1729
      %v1948 = vunpack.c.h.b16 %v1729
      %v1949 = vunpack.c.l.b16 %v1730
      %v1950 = vunpack.c.h.b16 %v1730
      %v1951 = vunpack.c.l.b16 %v1731
      %v1952 = vunpack.c.h.b16 %v1731
      %v1953 = vunpack.c.l.b16 %v1732
      %v1954 = vunpack.c.h.b16 %v1732
      %v1955 = vunpack.c.l.b16 %v1733
      %v1956 = vunpack.c.h.b16 %v1733
      %v1957 = vunpack.c.l.b16 %v1734
      %v1958 = vunpack.c.h.b16 %v1734
      %v1959 = vunpack.c.l.b16 %v1735
      %v1960 = vunpack.c.h.b16 %v1735
      %v1961 = vunpack.c.l.b16 %v1736
      %v1962 = vunpack.c.h.b16 %v1736
      %v1963 = vunpack.c.l.b16 %v1737
      %v1964 = vunpack.c.h.b16 %v1737
      %v1965 = vunpack.c.l.b16 %v1738
      %v1966 = vunpack.c.h.b16 %v1738
      %v1967 = vunpack.c.l.b16 %v1739
      %v1968 = vunpack.c.h.b16 %v1739
      %v1969 = vunpack.c.l.b16 %v1740
      %v1970 = vunpack.c.h.b16 %v1740
      %v1971 = vunpack.c.l.b16 %v1741
      %v1972 = vunpack.c.h.b16 %v1741
      %v1973 = vpack.c.b16 %v1819, %v1819
      %v1974 = vpack.c.b16 %v1820, %v1820
      %v1975 = vpack.c.b16 %v1821, %v1821
      %v1976 = vpack.c.b16 %v1822, %v1822
      %v1977 = vpack.c.b16 %v1823, %v1823
      %v1978 = vpack.c.b16 %v1824, %v1824
      %v1979 = vpack.c.b16 %v1825, %v1825
      %v1980 = vpack.c.b16 %v1826, %v1826
      %v1981 = vpack.c.b16 %v1827, %v1827
      %v1982 = vpack.c.b16 %v1828, %v1828
      %v1983 = vpack.c.b16 %v1829, %v1829
      %v1984 = vpack.c.b16 %v1830, %v1830
      %v1985 = vpack.c.b16 %v1831, %v1831
      %v1986 = vpack.c.b16 %v1832, %v1832
      %v1987 = vpack.c.b16 %v1833, %v1833
      %v1988 = vpack.c.b16 %v1834, %v1834
      %v1989 = vpack.c.b16 %v1835, %v1835
      %v1990 = vpack.c.b16 %v1836, %v1836
      %v1991 = vpack.c.b16 %v1837, %v1837
      %v1992 = vpack.c.b16 %v1838, %v1838
      %v1993 = vpack.c.b16 %v1839, %v1839
      %v1994 = vpack.c.b16 %v1840, %v1840
      %v1995 = vpack.c.b16 %v1841, %v1841
      %v1996 = vpack.c.b16 %v1842, %v1842
      %v1997 = vpack.c.b16 %v1843, %v1843
      %v1998 = vpack.c.b16 %v1844, %v1844
      %v1999 = vpack.c.b16 %v1845, %v1845
      %v2000 = vpack.c.b16 %v1846, %v1846
      %v2001 = vpack.c.b16 %v1847, %v1847
      %v2002 = vpack.c.b16 %v1848, %v1848
      %v2003 = vpack.c.b16 %v1849, %v1849
      %v2004 = vpack.c.b16 %v1850, %v1850
      %v2005 = vpack.c.b16 %v1851, %v1851
      %v2006 = vpack.c.b16 %v1852, %v1852
      %v2007 = vpack.c.b16 %v1853, %v1853
      %v2008 = vpack.c.b16 %v1854, %v1854
      %v2009 = vpack.c.b16 %v1855, %v1855
      %v2010 = vpack.c.b16 %v1856, %v1856
      %v2011 = vpack.c.b16 %v1857, %v1857
      %v2012 = vpack.c.b16 %v1858, %v1858
      %v2013 = vpack.c.b16 %v1859, %v1859
      %v2014 = vpack.c.b16 %v1860, %v1860
      %v2015 = vpack.c.b16 %v1861, %v1861
      %v2016 = vpack.c.b16 %v1862, %v1862
      %v2017 = vpack.c.b16 %v1863, %v1863
      %v2018 = vpack.c.b16 %v1864, %v1864
      %v2019 = vpack.c.b16 %v1865, %v1865
      %v2020 = vpack.c.b16 %v1866, %v1866
      %v2021 = vpack.c.b16 %v1867, %v1867
      %v2022 = vpack.c.b16 %v1868, %v1868
      %v2023 = vpack.c.b16 %v1869, %v1869
      %v2024 = vpack.c.b16 %v1870, %v1870
      %v2025 = vpack.c.b16 %v1871, %v1871
      %v2026 = vpack.c.b16 %v1872, %v1872
      %v2027 = vpack.c.b16 %v1873, %v1873
      %v2028 = vpack.c.b16 %v1874, %v1874
      %v2029 = vpack.c.b16 %v1875, %v1875
      %v2030 = vpack.c.b16 %v1876, %v1876
      %v2031 = vpack.c.b16 %v1877, %v1877
      %v2032 = vpack.c.b16 %v1878, %v1878
      %v2033 = vpack.c.b16 %v1879, %v1879
      %v2034 = vpack.c.b16 %v1880, %v1880
      %v2035 = vpack.c.b16 %v1881, %v1881
      %v2036 = vpack.c.b16 %v1882, %v1882
      %v2037 = vpack.c.b16 %v1883, %v1883
      %v2038 = vpack.c.b16 %v1884, %v1884
      %v2039 = vpack.c.b16 %v1885, %v1885
      %v2040 = vpack.c.b16 %v1886, %v1886
      %v2041 = vpack.c.b16 %v1887, %v1887
      %v2042 = vpack.c.b16 %v1888, %v1888
      %v2043 = vpack.c.b16 %v1889, %v1889
      %v2044 = vpack.c.b16 %v1890, %v1890
      %v2045 = vpack.c.b16 %v1891, %v1891
      %v2046 = vpack.c.b16 %v1892, %v1892
      %v2047 = vpack.c.b16 %v1893, %v1893
      %v2048 = vpack.c.b16 %v1894, %v1894
      %v2049 = vpack.c.b16 %v1895, %v1895
      %v2050 = vpack.c.b16 %v1896, %v1896
      %v2051 = vpack.c.b16 %v1897, %v1897
      %v2052 = vpack.c.b16 %v1898, %v1898
      %v2053 = vpack.c.b16 %v1899, %v1899
      %v2054 = vpack.c.b16 %v1900, %v1900
      %v2055 = vpack.c.b16 %v1901, %v1901
      %v2056 = vpack.c.b16 %v1902, %v1902
      %v2057 = vpack.c.b16 %v1903, %v1903
      %v2058 = vpack.c.b16 %v1904, %v1904
      %v2059 = vpack.c.b16 %v1905, %v1905
      %v2060 = vpack.c.b16 %v1906, %v1906
      %v2061 = vpack.c.b16 %v1907, %v1907
      %v2062 = vpack.c.b16 %v1908, %v1908
      %v2063 = vpack.c.b16 %v1909, %v1909
      %v2064 = vpack.c.b16 %v1910, %v1910
      %v2065 = vpack.c.b16 %v1911, %v1911
      %v2066 = vpack.c.b16 %v1912, %v1912
      %v2067 = vpack.c.b16 %v1913, %v1913
      %v2068 = vpack.c.b16 %v1914, %v1914
      %v2069 = vpack.c.b16 %v1915, %v1915
      %v2070 = vpack.c.b16 %v1916, %v1916
      %v2071 = vpack.c.b16 %v1917, %v1917
      %v2072 = vpack.c.b16 %v1918, %v1918
      %v2073 = vpack.c.b16 %v1919, %v1919
      %v2074 = vpack.c.b16 %v1920, %v1920
      %v2075 = vpack.c.b16 %v1921, %v1921
      %v2076 = vpack.c.b16 %v1922, %v1922
      %v2077 = vpack.c.b16 %v1923, %v1923
      %v2078 = vpack.c.b16 %v1924, %v1924
      %v2079 = vpack.c.b16 %v1925, %v1925
      %v2080 = vpack.c.b16 %v1926, %v1926
      %v2081 = vpack.c.b16 %v1927, %v1927
      %v2082 = vpack.c.b16 %v1928, %v1928
      %v2083 = vpack.c.b16 %v1929, %v1929
      %v2084 = vpack.c.b16 %v1930, %v1930
      %v2085 = vpack.c.b16 %v1931, %v1931
      %v2086 = vpack.c.b16 %v1932, %v1932
      %v2087 = vpack.c.b16 %v1933, %v1933
      %v2088 = vpack.c.b16 %v1934, %v1934
      %v2089 = vpack.c.b16 %v1935, %v1935
      %v2090 = vpack.c.b16 %v1936, %v1936
      %v2091 = vpack.c.b16 %v1937, %v1937
      %v2092 = vpack.c.b16 %v1938, %v1938
      %v2093 = vpack.c.b16 %v1939, %v1939
      %v2094 = vpack.c.b16 %v1940, %v1940
      %v2095 = vpack.c.b16 %v1941, %v1941
      %v2096 = vpack.c.b16 %v1942, %v1942
      %v2097 = vpack.c.b16 %v1943, %v1943
      %v2098 = vpack.c.b16 %v1944, %v1944
      %v2099 = vpack.c.b16 %v1945, %v1945
      %v2100 = vpack.c.b16 %v1946, %v1946
      %v2101 = vpack.c.b16 %v1947, %v1947
      %v2102 = vpack.c.b16 %v1948, %v1948
      %v2103 = vpack.c.b16 %v1949, %v1949
      %v2104 = vpack.c.b16 %v1950, %v1950
      %v2105 = vpack.c.b16 %v1951, %v1951
      %v2106 = vpack.c.b16 %v1952, %v1952
      %v2107 = vpack.c.b16 %v1953, %v1953
      %v2108 = vpack.c.b16 %v1954, %v1954
      %v2109 = vpack.c.b16 %v1955, %v1955
      %v2110 = vpack.c.b16 %v1956, %v1956
      %v2111 = vpack.c.b16 %v1957, %v1957
      %v2112 = vpack.c.b16 %v1958, %v1958
      %v2113 = vpack.c.b16 %v1959, %v1959
      %v2114 = vpack.c.b16 %v1960, %v1960
      %v2115 = vpack.c.b16 %v1961, %v1961
      %v2116 = vpack.c.b16 %v1962, %v1962
      %v2117 = vpack.c.b16 %v1963, %v1963
      %v2118 = vpack.c.b16 %v1964, %v1964
      %v2119 = vpack.c.b16 %v1965, %v1965
      %v2120 = vpack.c.b16 %v1966, %v1966
      %v2121 = vpack.c.b16 %v1967, %v1967
      %v2122 = vpack.c.b16 %v1968, %v1968
      %v2123 = vpack.c.b16 %v1969, %v1969
      %v2124 = vpack.c.b16 %v1970, %v1970
      %v2125 = vpack.c.b16 %v1971, %v1971
      %v2126 = vpack.c.b16 %v1972, %v1972
      %2281 = vst [vmem:[%s172] sm:$0xf] %v1973
      %2282 = vst [vmem:[%s172 + $0x4] sm:$0xf] %v1974
      %2283 = vst [vmem:[%s172 + $0x8] sm:$0xf] %v1975
      %2284 = vst [vmem:[%s172 + $0xc] sm:$0xf] %v1976
      %2285 = vst [vmem:[%s172 + $0x10] sm:$0xf] %v1977
      %2286 = vst [vmem:[%s172 + $0x14] sm:$0xf] %v1978
      %2287 = vst [vmem:[%s172 + $0x18] sm:$0xf] %v1979
      %2288 = vst [vmem:[%s172 + $0x1c] sm:$0xf] %v1980
      %2289 = vst [vmem:[%s172 + $0x20] sm:$0xf] %v1981
      %2290 = vst [vmem:[%s172 + $0x24] sm:$0xf] %v1982
      %2291 = vst [vmem:[%s172 + $0x28] sm:$0xf] %v1983
      %2292 = vst [vmem:[%s172 + $0x2c] sm:$0xf] %v1984
      %2293 = vst [vmem:[%s172 + $0x30] sm:$0xf] %v1985
      %2294 = vst [vmem:[%s172 + $0x34] sm:$0xf] %v1986
      %2295 = vst [vmem:[%s172 + $0x38] sm:$0xf] %v1987
      %2296 = vst [vmem:[%s172 + $0x3c] sm:$0xf] %v1988
      %2297 = vst [vmem:[%s172 + $0x40] sm:$0xf] %v1989
      %2298 = vst [vmem:[%s172 + $0x44] sm:$0xf] %v1990
      %2299 = vst [vmem:[%s172 + $0x48] sm:$0xf] %v1991
      %2300 = vst [vmem:[%s172 + $0x4c] sm:$0xf] %v1992
      %2301 = vst [vmem:[%s172 + $0x50] sm:$0xf] %v1993
      %2302 = vst [vmem:[%s172 + $0x54] sm:$0xf] %v1994
      %2303 = vst [vmem:[%s172 + $0x58] sm:$0xf] %v1995
      %2304 = vst [vmem:[%s172 + $0x5c] sm:$0xf] %v1996
      %2305 = vst [vmem:[%s172 + $0x60] sm:$0xf] %v1997
      %2306 = vst [vmem:[%s172 + $0x64] sm:$0xf] %v1998
      %2307 = vst [vmem:[%s172 + $0x68] sm:$0xf] %v1999
      %2308 = vst [vmem:[%s172 + $0x6c] sm:$0xf] %v2000
      %2309 = vst [vmem:[%s172 + $0x70] sm:$0xf] %v2001
      %2310 = vst [vmem:[%s172 + $0x74] sm:$0xf] %v2002
      %2311 = vst [vmem:[%s172 + $0x78] sm:$0xf] %v2003
      %2312 = vst [vmem:[%s172 + $0x7c] sm:$0xf] %v2004
      %2313 = vst [vmem:[%s172 + $0x80] sm:$0xf] %v2005
      %2314 = vst [vmem:[%s172 + $0x84] sm:$0xf] %v2006
      %2315 = vst [vmem:[%s172 + $0x88] sm:$0xf] %v2007
      %2316 = vst [vmem:[%s172 + $0x8c] sm:$0xf] %v2008
      %2317 = vst [vmem:[%s172 + $0x90] sm:$0xf] %v2009
      %2318 = vst [vmem:[%s172 + $0x94] sm:$0xf] %v2010
      %2319 = vst [vmem:[%s172 + $0x98] sm:$0xf] %v2011
      %2320 = vst [vmem:[%s172 + $0x9c] sm:$0xf] %v2012
      %2321 = vst [vmem:[%s172 + $0xa0] sm:$0xf] %v2013
      %2322 = vst [vmem:[%s172 + $0xa4] sm:$0xf] %v2014
      %2323 = vst [vmem:[%s172 + $0xa8] sm:$0xf] %v2015
      %2324 = vst [vmem:[%s172 + $0xac] sm:$0xf] %v2016
      %2325 = vst [vmem:[%s172 + $0xb0] sm:$0xf] %v2017
      %2326 = vst [vmem:[%s172 + $0xb4] sm:$0xf] %v2018
      %2327 = vst [vmem:[%s172 + $0xb8] sm:$0xf] %v2019
      %2328 = vst [vmem:[%s172 + $0xbc] sm:$0xf] %v2020
      %2329 = vst [vmem:[%s172 + $0xc0] sm:$0xf] %v2021
      %2330 = vst [vmem:[%s172 + $0xc4] sm:$0xf] %v2022
      %2331 = vst [vmem:[%s172 + $0xc8] sm:$0xf] %v2023
      %2332 = vst [vmem:[%s172 + $0xcc] sm:$0xf] %v2024
      %2333 = vst [vmem:[%s172 + $0xd0] sm:$0xf] %v2025
      %2334 = vst [vmem:[%s172 + $0xd4] sm:$0xf] %v2026
      %2335 = vst [vmem:[%s172 + $0xd8] sm:$0xf] %v2027
      %2336 = vst [vmem:[%s172 + $0xdc] sm:$0xf] %v2028
      %2337 = vst [vmem:[%s172 + $0xe0] sm:$0xf] %v2029
      %2338 = vst [vmem:[%s172 + $0xe4] sm:$0xf] %v2030
      %2339 = vst [vmem:[%s172 + $0xe8] sm:$0xf] %v2031
      %2340 = vst [vmem:[%s172 + $0xec] sm:$0xf] %v2032
      %2341 = vst [vmem:[%s172 + $0xf0] sm:$0xf] %v2033
      %2342 = vst [vmem:[%s172 + $0xf4] sm:$0xf] %v2034
      %2343 = vst [vmem:[%s172 + $0xf8] sm:$0xf] %v2035
      %2344 = vst [vmem:[%s172 + $0xfc] sm:$0xf] %v2036
      %2345 = vst [vmem:[%s172 + $0x100] sm:$0xf] %v2037
      %2346 = vst [vmem:[%s172 + $0x104] sm:$0xf] %v2038
      %2347 = vst [vmem:[%s172 + $0x108] sm:$0xf] %v2039
      %2348 = vst [vmem:[%s172 + $0x10c] sm:$0xf] %v2040
      %2349 = vst [vmem:[%s172 + $0x110] sm:$0xf] %v2041
      %2350 = vst [vmem:[%s172 + $0x114] sm:$0xf] %v2042
      %2351 = vst [vmem:[%s172 + $0x118] sm:$0xf] %v2043
      %2352 = vst [vmem:[%s172 + $0x11c] sm:$0xf] %v2044
      %2353 = vst [vmem:[%s172 + $0x120] sm:$0xf] %v2045
      %2354 = vst [vmem:[%s172 + $0x124] sm:$0xf] %v2046
      %2355 = vst [vmem:[%s172 + $0x128] sm:$0xf] %v2047
      %2356 = vst [vmem:[%s172 + $0x12c] sm:$0xf] %v2048
      %2357 = vst [vmem:[%s172 + $0x130] sm:$0xf] %v2049
      %2358 = vst [vmem:[%s172 + $0x134] sm:$0xf] %v2050
      %2359 = vst [vmem:[%s172 + $0x138] sm:$0xf] %v2051
      %2360 = vst [vmem:[%s172 + $0x13c] sm:$0xf] %v2052
      %2361 = vst [vmem:[%s172 + $0x140] sm:$0xf] %v2053
      %2362 = vst [vmem:[%s172 + $0x144] sm:$0xf] %v2054
      %2363 = vst [vmem:[%s172 + $0x148] sm:$0xf] %v2055
      %2364 = vst [vmem:[%s172 + $0x14c] sm:$0xf] %v2056
      %2365 = vst [vmem:[%s172 + $0x150] sm:$0xf] %v2057
      %2366 = vst [vmem:[%s172 + $0x154] sm:$0xf] %v2058
      %2367 = vst [vmem:[%s172 + $0x158] sm:$0xf] %v2059
      %2368 = vst [vmem:[%s172 + $0x15c] sm:$0xf] %v2060
      %2369 = vst [vmem:[%s172 + $0x160] sm:$0xf] %v2061
      %2370 = vst [vmem:[%s172 + $0x164] sm:$0xf] %v2062
      %2371 = vst [vmem:[%s172 + $0x168] sm:$0xf] %v2063
      %2372 = vst [vmem:[%s172 + $0x16c] sm:$0xf] %v2064
      %2373 = vst [vmem:[%s172 + $0x170] sm:$0xf] %v2065
      %2374 = vst [vmem:[%s172 + $0x174] sm:$0xf] %v2066
      %2375 = vst [vmem:[%s172 + $0x178] sm:$0xf] %v2067
      %2376 = vst [vmem:[%s172 + $0x17c] sm:$0xf] %v2068
      %2377 = vst [vmem:[%s172 + $0x180] sm:$0xf] %v2069
      %2378 = vst [vmem:[%s172 + $0x184] sm:$0xf] %v2070
      %2379 = vst [vmem:[%s172 + $0x188] sm:$0xf] %v2071
      %2380 = vst [vmem:[%s172 + $0x18c] sm:$0xf] %v2072
      %2381 = vst [vmem:[%s172 + $0x190] sm:$0xf] %v2073
      %2382 = vst [vmem:[%s172 + $0x194] sm:$0xf] %v2074
      %2383 = vst [vmem:[%s172 + $0x198] sm:$0xf] %v2075
      %2384 = vst [vmem:[%s172 + $0x19c] sm:$0xf] %v2076
      %2385 = vst [vmem:[%s172 + $0x1a0] sm:$0xf] %v2077
      %2386 = vst [vmem:[%s172 + $0x1a4] sm:$0xf] %v2078
      %2387 = vst [vmem:[%s172 + $0x1a8] sm:$0xf] %v2079
      %2388 = vst [vmem:[%s172 + $0x1ac] sm:$0xf] %v2080
      %2389 = vst [vmem:[%s172 + $0x1b0] sm:$0xf] %v2081
      %2390 = vst [vmem:[%s172 + $0x1b4] sm:$0xf] %v2082
      %2391 = vst [vmem:[%s172 + $0x1b8] sm:$0xf] %v2083
      %2392 = vst [vmem:[%s172 + $0x1bc] sm:$0xf] %v2084
      %2393 = vst [vmem:[%s172 + $0x1c0] sm:$0xf] %v2085
      %2394 = vst [vmem:[%s172 + $0x1c4] sm:$0xf] %v2086
      %2395 = vst [vmem:[%s172 + $0x1c8] sm:$0xf] %v2087
      %2396 = vst [vmem:[%s172 + $0x1cc] sm:$0xf] %v2088
      %2397 = vst [vmem:[%s172 + $0x1d0] sm:$0xf] %v2089
      %2398 = vst [vmem:[%s172 + $0x1d4] sm:$0xf] %v2090
      %2399 = vst [vmem:[%s172 + $0x1d8] sm:$0xf] %v2091
      %2400 = vst [vmem:[%s172 + $0x1dc] sm:$0xf] %v2092
      %2401 = vst [vmem:[%s172 + $0x1e0] sm:$0xf] %v2093
      %2402 = vst [vmem:[%s172 + $0x1e4] sm:$0xf] %v2094
      %2403 = vst [vmem:[%s172 + $0x1e8] sm:$0xf] %v2095
      %2404 = vst [vmem:[%s172 + $0x1ec] sm:$0xf] %v2096
      %2405 = vst [vmem:[%s172 + $0x1f0] sm:$0xf] %v2097
      %2406 = vst [vmem:[%s172 + $0x1f4] sm:$0xf] %v2098
      %2407 = vst [vmem:[%s172 + $0x1f8] sm:$0xf] %v2099
      %2408 = vst [vmem:[%s172 + $0x1fc] sm:$0xf] %v2100
      %2409 = vst [vmem:[%s172 + $0x200] sm:$0xf] %v2101
      %2410 = vst [vmem:[%s172 + $0x204] sm:$0xf] %v2102
      %2411 = vst [vmem:[%s172 + $0x208] sm:$0xf] %v2103
      %2412 = vst [vmem:[%s172 + $0x20c] sm:$0xf] %v2104
      %2413 = vst [vmem:[%s172 + $0x210] sm:$0xf] %v2105
      %2414 = vst [vmem:[%s172 + $0x214] sm:$0xf] %v2106
      %2415 = vst [vmem:[%s172 + $0x218] sm:$0xf] %v2107
      %2416 = vst [vmem:[%s172 + $0x21c] sm:$0xf] %v2108
      %2417 = vst [vmem:[%s172 + $0x220] sm:$0xf] %v2109
      %2418 = vst [vmem:[%s172 + $0x224] sm:$0xf] %v2110
      %2419 = vst [vmem:[%s172 + $0x228] sm:$0xf] %v2111
      %2420 = vst [vmem:[%s172 + $0x22c] sm:$0xf] %v2112
      %2421 = vst [vmem:[%s172 + $0x230] sm:$0xf] %v2113
      %2422 = vst [vmem:[%s172 + $0x234] sm:$0xf] %v2114
      %2423 = vst [vmem:[%s172 + $0x238] sm:$0xf] %v2115
      %2424 = vst [vmem:[%s172 + $0x23c] sm:$0xf] %v2116
      %2425 = vst [vmem:[%s172 + $0x240] sm:$0xf] %v2117
      %2426 = vst [vmem:[%s172 + $0x244] sm:$0xf] %v2118
      %2427 = vst [vmem:[%s172 + $0x248] sm:$0xf] %v2119
      %2428 = vst [vmem:[%s172 + $0x24c] sm:$0xf] %v2120
      %2429 = vst [vmem:[%s172 + $0x250] sm:$0xf] %v2121
      %2430 = vst [vmem:[%s172 + $0x254] sm:$0xf] %v2122
      %2431 = vst [vmem:[%s172 + $0x258] sm:$0xf] %v2123
      %2432 = vst [vmem:[%s172 + $0x25c] sm:$0xf] %v2124
      %2433 = vst [vmem:[%s172 + $0x260] sm:$0xf] %v2125
      %2434 = vst [vmem:[%s172 + $0x264] sm:$0xf] %v2126
      %s2435 = smul.u32 154, %s14
      %p2436 = scmp.lt.s32.totalorder %s2435, 307
      %s2437 = scalar_select %p2436, %s2435, 307
      %s2438 = smul.addr %s2437, 4
      %s2439 = scalar_lea.vmem %s3, %s2438
      // Predicated region
      $region33: #{conv_net_forward.4} parent=31 // pred_check
        %p2440 = pneg %p100
      $region34: #{conv_net_forward.4} parent=31 // pred_check_branch
        %2442 = sbr.rel (%p2440) target = $region36
      $region35: #{conv_net_forward.4} parent=31 // pred_region
        %s2443 = smul.u32 154, %s14
      $region36: #{conv_net_forward.4} parent=31 // pred_fallthru
        _
    $region32: #{conv_net_forward.4} parent=5 // pred_fallthru
      _
    %p2444 = scmp.le.s32.totalorder 2, %s9
    // Predicated region
    $region37: #{conv_net_forward.4} parent=5 // pred_check
      %p2445 = pneg %p2444
    $region38: #{conv_net_forward.4} parent=5 // pred_check_branch
      %2447 = sbr.rel (%p2445) target = $region40
    $region39: #{conv_net_forward.4} parent=5 // pred_region
      %s2448 = ssub.s32 %s9, 2
      // Predicated region
      $region41: #{conv_net_forward.4} parent=39 // pred_check
        %p2449 = pneg %p106
      $region42: #{conv_net_forward.4} parent=39 // pred_check_branch
        %2451 = sbr.rel (%p2449) target = $region44
      $region43: #{conv_net_forward.4} parent=39 // pred_region
        %s2452 = smul.u32 154, %s15
        %p2453 = scmp.lt.s32.totalorder %s2452, 307
        %s2454 = scalar_select %p2453, %s2452, 307
        %s2455 = smul.addr %s2454, 4
        %s2456 = scalar_lea.vmem %s3, %s2455
      $region44: #{conv_net_forward.4} parent=39 // pred_fallthru
        _
    $region40: #{conv_net_forward.4} parent=5 // pred_fallthru
      _
  $region6: #{conv_net_forward.4} parent=0 // loop_footer
    %s13 = sadd.s32 1, %s9
  $region7: #{conv_net_forward.4} parent=0 // loop_footer_branch
    %8 = sbr.rel target = $region3
  $region8: #{conv_net_forward.4} parent=0 // loop_exit
    _

// kernel: conv_net_forward.5
$region0: #{conv_net_forward.5}
  #allocation0 [shape = 'u32[]', space=smem, size = 0x4, offset = 0x4, fixed_abs, tag = 'smem constant byte address 0x4 - core index']
  #allocation1 [shape = 'u32[144,128]{1,0:T(1,128)}', space=vmem, size = 0x12000, scoped, tag = 'internal scratch']
  %s0 = inlined_call_operand.vmem [shape: bf16[592,128], index: 0, kind: input, shape index: {}]
  %s1 = inlined_call_operand.vmem [shape: bf16[128,128], index: 1, kind: input, shape index: {}]
  %s2 = inlined_call_operand.vmem [shape: f32[1,128], index: 2, kind: input, shape index: {}]
  %s3 = inlined_call_operand.vmem [shape: bf16[592,128], index: 3, kind: output, shape index: {}]
  %s4 = sld [smem:[#allocation0]]
  $region45: #{conv_net_forward.5} parent=0
    _
  %s6 = ssub.s32 1, %s4
  %s7 = scalar_select 0, %s6, %s4
  loop: start=0, step=1, limit=4
  $region2: #{conv_net_forward.5} parent=0 // loop_pre_header
    _
  $region3: #{conv_net_forward.5} parent=0 // loop_header
    %s9 = sphi 0, %s13
    %p10 = scmp.ge.s32.totalorder %s9, 4
    %s19 = sphi 0, %s21
    %s22 = sphi 0, %s19
    %s23 = sphi 0, %s22
    %s39 = sphi 0, %s23
    %s43 = sphi 0, %s43
    %s45 = sphi 0, %s43
    %s46 = sphi 0, %s45
    %s60 = sphi 0, %s46
    %s64 = sphi 0, %s64
    %s66 = sphi 0, %s64
    %s67 = sphi 0, %s66
    %s81 = sphi 0, %s67
    %s87 = sphi 0, %s89
    %s90 = sphi 0, %s87
    %s91 = sphi 0, %s90
    %s107 = sphi 0, %s91
  $region4: #{conv_net_forward.5} parent=0 // loop_header_branch
    %12 = sbr.rel (%p10) target = $region8
  $region5: #{conv_net_forward.5} parent=0 // loop_body
    %s14 = ssub.s32 %s9, 1
    %s15 = ssub.s32 %s9, 2
    %s16 = sadd.s32 %s9, 1
    %s17 = ssub.s32 %s9, %s16
    %p18 = scmp.eq.s32.totalorder %s17, 0
    %s20 = sadd.s32 %s19, 1
    %s21 = scalar_select %p18, %s19, %s20
    %p24 = pneg %p18
    %p25 = scmp.eq.s32.totalorder %s9, 1
    %p26 = por %p24, %p25
    %p27 = scmp.ne.s32.totalorder %s19, %s22
    %p28 = scmp.eq.s32.totalorder %s9, 0
    %p29 = por %p27, %p28
    %p30 = scmp.ne.s32.totalorder %s19, %s22
    %p31 = scmp.eq.s32.totalorder %s14, 1
    %p32 = por %p30, %p31
    %p33 = scmp.ne.s32.totalorder %s22, %s23
    %p34 = scmp.eq.s32.totalorder %s14, 0
    %p35 = por %p33, %p34
    %p36 = scmp.ne.s32.totalorder %s22, %s23
    %p37 = scmp.eq.s32.totalorder %s15, 1
    %p38 = por %p36, %p37
    %p40 = scmp.ne.s32.totalorder %s23, %s39
    %p41 = scmp.eq.s32.totalorder %s15, 0
    %p42 = por %p40, %p41
    %s44 = sadd.s32 %s43, 1
    %p47 = scmp.eq.s32.totalorder %s9, 1
    %p48 = scmp.ne.s32.totalorder %s43, %s45
    %p49 = scmp.eq.s32.totalorder %s9, 0
    %p50 = por %p48, %p49
    %p51 = scmp.ne.s32.totalorder %s43, %s45
    %p52 = scmp.eq.s32.totalorder %s14, 1
    %p53 = por %p51, %p52
    %p54 = scmp.ne.s32.totalorder %s45, %s46
    %p55 = scmp.eq.s32.totalorder %s14, 0
    %p56 = por %p54, %p55
    %p57 = scmp.ne.s32.totalorder %s45, %s46
    %p58 = scmp.eq.s32.totalorder %s15, 1
    %p59 = por %p57, %p58
    %p61 = scmp.ne.s32.totalorder %s46, %s60
    %p62 = scmp.eq.s32.totalorder %s15, 0
    %p63 = por %p61, %p62
    %s65 = sadd.s32 %s64, 1
    %p68 = scmp.eq.s32.totalorder %s9, 1
    %p69 = scmp.ne.s32.totalorder %s64, %s66
    %p70 = scmp.eq.s32.totalorder %s9, 0
    %p71 = por %p69, %p70
    %p72 = scmp.ne.s32.totalorder %s64, %s66
    %p73 = scmp.eq.s32.totalorder %s14, 1
    %p74 = por %p72, %p73
    %p75 = scmp.ne.s32.totalorder %s66, %s67
    %p76 = scmp.eq.s32.totalorder %s14, 0
    %p77 = por %p75, %p76
    %p78 = scmp.ne.s32.totalorder %s66, %s67
    %p79 = scmp.eq.s32.totalorder %s15, 1
    %p80 = por %p78, %p79
    %p82 = scmp.ne.s32.totalorder %s67, %s81
    %p83 = scmp.eq.s32.totalorder %s15, 0
    %p84 = por %p82, %p83
    %s85 = ssub.s32 %s9, %s16
    %p86 = scmp.eq.s32.totalorder %s85, 0
    %s88 = sadd.s32 %s87, 1
    %s89 = scalar_select %p86, %s87, %s88
    %p92 = pneg %p86
    %p93 = scmp.eq.s32.totalorder %s9, 1
    %p94 = por %p92, %p93
    %p95 = scmp.ne.s32.totalorder %s87, %s90
    %p96 = scmp.eq.s32.totalorder %s9, 0
    %p97 = por %p95, %p96
    %p98 = scmp.ne.s32.totalorder %s87, %s90
    %p99 = scmp.eq.s32.totalorder %s14, 1
    %p100 = por %p98, %p99
    %p101 = scmp.ne.s32.totalorder %s90, %s91
    %p102 = scmp.eq.s32.totalorder %s14, 0
    %p103 = por %p101, %p102
    %p104 = scmp.ne.s32.totalorder %s90, %s91
    %p105 = scmp.eq.s32.totalorder %s15, 1
    %p106 = por %p104, %p105
    %p108 = scmp.ne.s32.totalorder %s91, %s107
    %p109 = scmp.eq.s32.totalorder %s15, 0
    %p110 = por %p108, %p109
    %p111 = scmp.le.s32.totalorder 1, %s9
    %p112 = scmp.lt.s32.totalorder %s9, 3
    %p113 = pnand %p111, %p112
    %p114 = pneg %p113
    // Predicated region
    $region9: #{conv_net_forward.5} parent=5 // pred_check
      _
    $region10: #{conv_net_forward.5} parent=5 // pred_check_branch
      %116 = sbr.rel (%p113) target = $region12
    $region11: #{conv_net_forward.5} parent=5 // pred_region
      %s117 = ssub.s32 %s9, 1
      // Predicated region
      $region13: #{conv_net_forward.5} parent=11 // pred_check
        %p118 = pneg %p56
      $region14: #{conv_net_forward.5} parent=11 // pred_check_branch
        %120 = sbr.rel (%p118) target = $region16
      $region15: #{conv_net_forward.5} parent=11 // pred_region
        _
      $region16: #{conv_net_forward.5} parent=11 // pred_fallthru
        _
      // Predicated region
      $region17: #{conv_net_forward.5} parent=11 // pred_check
        %p121 = pneg %p77
      $region18: #{conv_net_forward.5} parent=11 // pred_check_branch
        %123 = sbr.rel (%p121) target = $region20
      $region19: #{conv_net_forward.5} parent=11 // pred_region
        _
      $region20: #{conv_net_forward.5} parent=11 // pred_fallthru
        _
    $region12: #{conv_net_forward.5} parent=5 // pred_fallthru
      _
    %p124 = scmp.lt.s32.totalorder %s9, 2
    // Predicated region
    $region21: #{conv_net_forward.5} parent=5 // pred_check
      %p125 = pneg %p124
    $region22: #{conv_net_forward.5} parent=5 // pred_check_branch
      %127 = sbr.rel (%p125) target = $region24
    $region23: #{conv_net_forward.5} parent=5 // pred_region
      // Predicated region
      $region25: #{conv_net_forward.5} parent=23 // pred_check
        %p128 = pneg %p29
      $region26: #{conv_net_forward.5} parent=23 // pred_check_branch
        %130 = sbr.rel (%p128) target = $region28
      $region27: #{conv_net_forward.5} parent=23 // pred_region
        %s131 = smul.u32 37, %s9
        %p132 = scmp.lt.s32.totalorder %s131, 73
        %s133 = scalar_select %p132, %s131, 73
        %s134 = smul.addr %s133, 4
        %s135 = scalar_lea.vmem %s0, %s134
        %s136 = smul.u32 37, %s9
      $region28: #{conv_net_forward.5} parent=23 // pred_fallthru
        _
    $region24: #{conv_net_forward.5} parent=5 // pred_fallthru
      _
    %p137 = scmp.le.s32.totalorder 1, %s9
    %p138 = scmp.lt.s32.totalorder %s9, 3
    %p139 = pnand %p137, %p138
    %p140 = pneg %p139
    // Predicated region
    $region29: #{conv_net_forward.5} parent=5 // pred_check
      _
    $region30: #{conv_net_forward.5} parent=5 // pred_check_branch
      %142 = sbr.rel (%p139) target = $region32
    $region31: #{conv_net_forward.5} parent=5 // pred_region
      %s143 = ssub.s32 %s9, 1
      %s144 = smul.u32 37, %s14
      %p145 = scmp.lt.s32.totalorder %s144, 73
      %s146 = scalar_select %p145, %s144, 73
      %s147 = smul.addr %s146, 4
      %s148 = scalar_lea.vmem %s0, %s147
      %p149 = pneg %p35
      %p150 = pneg %p32
      %p151 = pneg %p56
      %p152 = pneg %p53
      %p153 = pneg %p77
      %p154 = pneg %p74
      %p155 = pneg %p103
      %p156 = pneg %p100
      %s157 = smul.u32 37, %s14
      %p158 = scmp.lt.s32.totalorder %s157, 73
      %s159 = scalar_select %p158, %s157, 73
      %s160 = smul.addr %s159, 4
      %s161 = scalar_lea.vmem %s3, %s160
      %s162 = smul.u32 37, %s14
      %p163 = scmp.lt.s32.totalorder %s162, 73
      %s164 = scalar_select %p163, %s162, 73
      %s165 = smul.addr %s164, 4
      %s166 = scalar_lea.vmem %s0, %s165
      %s167 = smul.u32 37, %s14
      %s168 = smul.u32 37, %s14
      %p169 = scmp.lt.s32.totalorder %s168, 73
      %s170 = scalar_select %p169, %s168, 73
      %s171 = smul.addr %s170, 4
      %s172 = scalar_lea.vmem %s3, %s171
      %s173 = smul.u32 37, %s14
      %v175 = vld [vmem:[%s166] sm:$0xf]
      %v176 = vld [vmem:[%s166 + $0x4] sm:$0xf]
      %v177 = vld [vmem:[%s166 + $0x8] sm:$0xf]
      %v178 = vld [vmem:[%s166 + $0xc] sm:$0xf]
      %v179 = vld [vmem:[%s166 + $0x10] sm:$0xf]
      %v180 = vld [vmem:[%s166 + $0x14] sm:$0xf]
      %v181 = vld [vmem:[%s166 + $0x18] sm:$0xf]
      %v182 = vld [vmem:[%s166 + $0x1c] sm:$0xf]
      %v183 = vld [vmem:[%s166 + $0x20] sm:$0xf]
      %v184 = vld [vmem:[%s166 + $0x24] sm:$0xf]
      %v185 = vld [vmem:[%s166 + $0x28] sm:$0xf]
      %v186 = vld [vmem:[%s166 + $0x2c] sm:$0xf]
      %v187 = vld [vmem:[%s166 + $0x30] sm:$0xf]
      %v188 = vld [vmem:[%s166 + $0x34] sm:$0xf]
      %v189 = vld [vmem:[%s166 + $0x38] sm:$0xf]
      %v190 = vld [vmem:[%s166 + $0x3c] sm:$0xf]
      %v191 = vld [vmem:[%s166 + $0x40] sm:$0xf]
      %v192 = vld [vmem:[%s166 + $0x44] sm:$0xf]
      %v193 = vld [vmem:[%s166 + $0x48] sm:$0xf]
      %v194 = vld [vmem:[%s166 + $0x4c] sm:$0xf]
      %v195 = vld [vmem:[%s166 + $0x50] sm:$0xf]
      %v196 = vld [vmem:[%s166 + $0x54] sm:$0xf]
      %v197 = vld [vmem:[%s166 + $0x58] sm:$0xf]
      %v198 = vld [vmem:[%s166 + $0x5c] sm:$0xf]
      %v199 = vld [vmem:[%s166 + $0x60] sm:$0xf]
      %v200 = vld [vmem:[%s166 + $0x64] sm:$0xf]
      %v201 = vld [vmem:[%s166 + $0x68] sm:$0xf]
      %v202 = vld [vmem:[%s166 + $0x6c] sm:$0xf]
      %v203 = vld [vmem:[%s166 + $0x70] sm:$0xf]
      %v204 = vld [vmem:[%s166 + $0x74] sm:$0xf]
      %v205 = vld [vmem:[%s166 + $0x78] sm:$0xf]
      %v206 = vld [vmem:[%s166 + $0x7c] sm:$0xf]
      %v207 = vld [vmem:[%s166 + $0x80] sm:$0xf]
      %v208 = vld [vmem:[%s166 + $0x84] sm:$0xf]
      %v209 = vld [vmem:[%s166 + $0x88] sm:$0xf]
      %v210 = vld [vmem:[%s166 + $0x8c] sm:$0xf]
      %v211 = vld [vmem:[%s166 + $0x90] sm:$0xf]
      %v212 = vld [vmem:[%s1] sm:$0xf]
      %v213 = vld [vmem:[%s1 + $0x4] sm:$0xf]
      %v214 = vld [vmem:[%s1 + $0x8] sm:$0xf]
      %v215 = vld [vmem:[%s1 + $0xc] sm:$0xf]
      %v216 = vld [vmem:[%s1 + $0x10] sm:$0xf]
      %v217 = vld [vmem:[%s1 + $0x14] sm:$0xf]
      %v218 = vld [vmem:[%s1 + $0x18] sm:$0xf]
      %v219 = vld [vmem:[%s1 + $0x1c] sm:$0xf]
      %v220 = vld [vmem:[%s1 + $0x20] sm:$0xf]
      %v221 = vld [vmem:[%s1 + $0x24] sm:$0xf]
      %v222 = vld [vmem:[%s1 + $0x28] sm:$0xf]
      %v223 = vld [vmem:[%s1 + $0x2c] sm:$0xf]
      %v224 = vld [vmem:[%s1 + $0x30] sm:$0xf]
      %v225 = vld [vmem:[%s1 + $0x34] sm:$0xf]
      %v226 = vld [vmem:[%s1 + $0x38] sm:$0xf]
      %v227 = vld [vmem:[%s1 + $0x3c] sm:$0xf]
      %v228 = vld [vmem:[%s2] sm:$0x1]
      %v230 = vlaneseq
      %v231 = vshrl.u32 %v230, 7
      %v232 = vsub.s32 0, %v231
      %v233 = vrot.slane %v228, %v232
      %v272 = vunpack.c.l.b16 %v175
      %v273 = vunpack.c.l.b16 %v176
      %v274 = vunpack.c.l.b16 %v177
      %v275 = vunpack.c.l.b16 %v178
      %v276 = vunpack.c.l.b16 %v179
      %v277 = vunpack.c.l.b16 %v180
      %v278 = vunpack.c.l.b16 %v181
      %v279 = vunpack.c.l.b16 %v182
      %v280 = vunpack.c.l.b16 %v183
      %v281 = vunpack.c.l.b16 %v184
      %v282 = vunpack.c.l.b16 %v185
      %v283 = vunpack.c.l.b16 %v186
      %v284 = vunpack.c.l.b16 %v187
      %v285 = vunpack.c.l.b16 %v188
      %v286 = vunpack.c.l.b16 %v189
      %v287 = vunpack.c.l.b16 %v190
      %v288 = vunpack.c.l.b16 %v191
      %v289 = vunpack.c.l.b16 %v192
      %v290 = vunpack.c.l.b16 %v193
      %v291 = vunpack.c.l.b16 %v194
      %v292 = vunpack.c.l.b16 %v195
      %v293 = vunpack.c.l.b16 %v196
      %v294 = vunpack.c.l.b16 %v197
      %v295 = vunpack.c.l.b16 %v198
      %v296 = vunpack.c.l.b16 %v199
      %v297 = vunpack.c.l.b16 %v200
      %v298 = vunpack.c.l.b16 %v201
      %v299 = vunpack.c.l.b16 %v202
      %v300 = vunpack.c.l.b16 %v203
      %v301 = vunpack.c.l.b16 %v204
      %v302 = vunpack.c.l.b16 %v205
      %v303 = vunpack.c.l.b16 %v206
      %v304 = vunpack.c.l.b16 %v207
      %v305 = vunpack.c.l.b16 %v208
      %v306 = vunpack.c.l.b16 %v209
      %v307 = vunpack.c.l.b16 %v210
      %v308 = vunpack.c.l.b16 %v211
      %v309 = vpack.c.b16 %v273, %v272
      %v310 = vpack.c.b16 %v275, %v274
      %v311 = vpack.c.b16 %v277, %v276
      %v312 = vpack.c.b16 %v279, %v278
      %v313 = vpack.c.b16 %v281, %v280
      %v314 = vpack.c.b16 %v283, %v282
      %v315 = vpack.c.b16 %v285, %v284
      %v316 = vpack.c.b16 %v287, %v286
      %v317 = vpack.c.b16 %v289, %v288
      %v318 = vpack.c.b16 %v291, %v290
      %v319 = vpack.c.b16 %v293, %v292
      %v320 = vpack.c.b16 %v295, %v294
      %v321 = vpack.c.b16 %v297, %v296
      %v322 = vpack.c.b16 %v299, %v298
      %v323 = vpack.c.b16 %v301, %v300
      %v324 = vpack.c.b16 %v303, %v302
      %v325 = vpack.c.b16 %v305, %v304
      %v326 = vpack.c.b16 %v307, %v306
      %v327 = vpack.c.b16 %v308, %v308
      %v363 = vunpack.c.l.b16 %v212
      %v364 = vunpack.c.l.b16 %v213
      %v365 = vunpack.c.l.b16 %v214
      %v366 = vunpack.c.l.b16 %v215
      %v367 = vunpack.c.l.b16 %v216
      %v368 = vunpack.c.l.b16 %v217
      %v369 = vunpack.c.l.b16 %v218
      %v370 = vunpack.c.l.b16 %v219
      %v371 = vunpack.c.l.b16 %v220
      %v372 = vunpack.c.l.b16 %v221
      %v373 = vunpack.c.l.b16 %v222
      %v374 = vunpack.c.l.b16 %v223
      %v375 = vunpack.c.l.b16 %v224
      %v376 = vunpack.c.l.b16 %v225
      %v377 = vunpack.c.l.b16 %v226
      %v378 = vunpack.c.l.b16 %v227
      %v379 = vpack.c.b16 %v364, %v363
      %v380 = vpack.c.b16 %v366, %v365
      %v381 = vpack.c.b16 %v368, %v367
      %v382 = vpack.c.b16 %v370, %v369
      %v383 = vpack.c.b16 %v372, %v371
      %v384 = vpack.c.b16 %v374, %v373
      %v385 = vpack.c.b16 %v376, %v375
      %v386 = vpack.c.b16 %v378, %v377
      %395 = vmatprep.subr.bf16.mxu0 0
      %396 = vmatpush1.bf16.msra.mxu0 %v379
      %397 = vmatprep.subr.bf16.mxu0 0
      %398 = vmatpush1.bf16.msra.mxu0 %v380
      %399 = vmatprep.subr.bf16.mxu0 0
      %400 = vmatpush1.bf16.msra.mxu0 %v381
      %401 = vmatprep.subr.bf16.mxu0 0
      %402 = vmatpush1.bf16.msra.mxu0 %v382
      %403 = vmatprep.subr.bf16.mxu0 0
      %404 = vmatpush1.bf16.msra.mxu0 %v383
      %405 = vmatprep.subr.bf16.mxu0 0
      %406 = vmatpush1.bf16.msra.mxu0 %v384
      %407 = vmatprep.subr.bf16.mxu0 0
      %408 = vmatpush1.bf16.msra.mxu0 %v385
      %409 = vmatprep.subr.bf16.mxu0 0
      %410 = vmatpush1.bf16.msra.mxu0 %v386
      %411 = vmatprep.subr.bf16.mxu0 0
      %412 = vmatpush1.bf16.msra.mxu0 0
      %413 = vmatprep.subr.bf16.mxu0 0
      %414 = vmatpush1.bf16.msra.mxu0 0
      %415 = vmatprep.subr.bf16.mxu0 0
      %416 = vmatpush1.bf16.msra.mxu0 0
      %417 = vmatprep.subr.bf16.mxu0 0
      %418 = vmatpush1.bf16.msra.mxu0 0
      %419 = vmatprep.subr.bf16.mxu0 0
      %420 = vmatpush1.bf16.msra.mxu0 0
      %421 = vmatprep.subr.bf16.mxu0 0
      %422 = vmatpush1.bf16.msra.mxu0 0
      %423 = vmatprep.subr.bf16.mxu0 0
      %424 = vmatpush1.bf16.msra.mxu0 0
      %425 = vmatprep.subr.bf16.mxu0 0
      %426 = vmatpush1.bf16.msra.mxu0 0
      %427 = vmatprep.mubr.bf16.mxu0 0
      %428 = vmatmul.mubr.bf16.gmra.mrb[0].mxu0 %v309
      %v429 = vpop.f32.mrb[0].mxu0
      %v430 = vadd.f32 %v233, %v429
      %v431 = vpop.f32.mrb[0].mxu0
      %v432 = vpop.f32.mrb[0].mxu0
      %v433 = vadd.f32 %v233, %v432
      %v434 = vpop.f32.mrb[0].mxu0
      %435 = vmatprep.mubr.bf16.mxu0 0
      %436 = vmatmul.mubr.bf16.gmra.mrb[0].mxu0 %v310
      %v437 = vpop.f32.mrb[0].mxu0
      %v438 = vadd.f32 %v233, %v437
      %v439 = vpop.f32.mrb[0].mxu0
      %v440 = vpop.f32.mrb[0].mxu0
      %v441 = vadd.f32 %v233, %v440
      %v442 = vpop.f32.mrb[0].mxu0
      %443 = vmatprep.mubr.bf16.mxu0 0
      %444 = vmatmul.mubr.bf16.gmra.mrb[0].mxu0 %v311
      %v445 = vpop.f32.mrb[0].mxu0
      %v446 = vadd.f32 %v233, %v445
      %v447 = vpop.f32.mrb[0].mxu0
      %v448 = vpop.f32.mrb[0].mxu0
      %v449 = vadd.f32 %v233, %v448
      %v450 = vpop.f32.mrb[0].mxu0
      %451 = vmatprep.mubr.bf16.mxu0 0
      %452 = vmatmul.mubr.bf16.gmra.mrb[0].mxu0 %v312
      %v453 = vpop.f32.mrb[0].mxu0
      %v454 = vadd.f32 %v233, %v453
      %v455 = vpop.f32.mrb[0].mxu0
      %v456 = vpop.f32.mrb[0].mxu0
      %v457 = vadd.f32 %v233, %v456
      %v458 = vpop.f32.mrb[0].mxu0
      %459 = vmatprep.mubr.bf16.mxu0 0
      %460 = vmatmul.mubr.bf16.gmra.mrb[0].mxu0 %v313
      %v461 = vpop.f32.mrb[0].mxu0
      %v462 = vadd.f32 %v233, %v461
      %v463 = vpop.f32.mrb[0].mxu0
      %v464 = vpop.f32.mrb[0].mxu0
      %v465 = vadd.f32 %v233, %v464
      %v466 = vpop.f32.mrb[0].mxu0
      %467 = vmatprep.mubr.bf16.mxu0 0
      %468 = vmatmul.mubr.bf16.gmra.mrb[0].mxu0 %v314
      %v469 = vpop.f32.mrb[0].mxu0
      %v470 = vadd.f32 %v233, %v469
      %v471 = vpop.f32.mrb[0].mxu0
      %v472 = vpop.f32.mrb[0].mxu0
      %v473 = vadd.f32 %v233, %v472
      %v474 = vpop.f32.mrb[0].mxu0
      %475 = vmatprep.mubr.bf16.mxu0 0
      %476 = vmatmul.mubr.bf16.gmra.mrb[0].mxu0 %v315
      %v477 = vpop.f32.mrb[0].mxu0
      %v478 = vadd.f32 %v233, %v477
      %v479 = vpop.f32.mrb[0].mxu0
      %v480 = vpop.f32.mrb[0].mxu0
      %v481 = vadd.f32 %v233, %v480
      %v482 = vpop.f32.mrb[0].mxu0
      %483 = vmatprep.mubr.bf16.mxu0 0
      %484 = vmatmul.mubr.bf16.gmra.mrb[0].mxu0 %v316
      %v485 = vpop.f32.mrb[0].mxu0
      %v486 = vadd.f32 %v233, %v485
      %v487 = vpop.f32.mrb[0].mxu0
      %v488 = vpop.f32.mrb[0].mxu0
      %v489 = vadd.f32 %v233, %v488
      %v490 = vpop.f32.mrb[0].mxu0
      %491 = vmatprep.mubr.bf16.mxu0 0
      %492 = vmatmul.mubr.bf16.gmra.mrb[0].mxu0 %v317
      %v493 = vpop.f32.mrb[0].mxu0
      %v494 = vadd.f32 %v233, %v493
      %v495 = vpop.f32.mrb[0].mxu0
      %v496 = vpop.f32.mrb[0].mxu0
      %v497 = vadd.f32 %v233, %v496
      %v498 = vpop.f32.mrb[0].mxu0
      %499 = vmatprep.mubr.bf16.mxu0 0
      %500 = vmatmul.mubr.bf16.gmra.mrb[0].mxu0 %v318
      %v501 = vpop.f32.mrb[0].mxu0
      %v502 = vadd.f32 %v233, %v501
      %v503 = vpop.f32.mrb[0].mxu0
      %v504 = vpop.f32.mrb[0].mxu0
      %v505 = vadd.f32 %v233, %v504
      %v506 = vpop.f32.mrb[0].mxu0
      %507 = vmatprep.mubr.bf16.mxu0 0
      %508 = vmatmul.mubr.bf16.gmra.mrb[0].mxu0 %v319
      %v509 = vpop.f32.mrb[0].mxu0
      %v510 = vadd.f32 %v233, %v509
      %v511 = vpop.f32.mrb[0].mxu0
      %v512 = vpop.f32.mrb[0].mxu0
      %v513 = vadd.f32 %v233, %v512
      %v514 = vpop.f32.mrb[0].mxu0
      %515 = vmatprep.mubr.bf16.mxu0 0
      %516 = vmatmul.mubr.bf16.gmra.mrb[0].mxu0 %v320
      %v517 = vpop.f32.mrb[0].mxu0
      %v518 = vadd.f32 %v233, %v517
      %v519 = vpop.f32.mrb[0].mxu0
      %v520 = vpop.f32.mrb[0].mxu0
      %v521 = vadd.f32 %v233, %v520
      %v522 = vpop.f32.mrb[0].mxu0
      %523 = vmatprep.mubr.bf16.mxu0 0
      %524 = vmatmul.mubr.bf16.gmra.mrb[0].mxu0 %v321
      %v525 = vpop.f32.mrb[0].mxu0
      %v526 = vadd.f32 %v233, %v525
      %v527 = vpop.f32.mrb[0].mxu0
      %v528 = vpop.f32.mrb[0].mxu0
      %v529 = vadd.f32 %v233, %v528
      %v530 = vpop.f32.mrb[0].mxu0
      %531 = vmatprep.mubr.bf16.mxu0 0
      %532 = vmatmul.mubr.bf16.gmra.mrb[0].mxu0 %v322
      %v533 = vpop.f32.mrb[0].mxu0
      %v534 = vadd.f32 %v233, %v533
      %v535 = vpop.f32.mrb[0].mxu0
      %v536 = vpop.f32.mrb[0].mxu0
      %v537 = vadd.f32 %v233, %v536
      %v538 = vpop.f32.mrb[0].mxu0
      %539 = vmatprep.mubr.bf16.mxu0 0
      %540 = vmatmul.mubr.bf16.gmra.mrb[0].mxu0 %v323
      %v541 = vpop.f32.mrb[0].mxu0
      %v542 = vadd.f32 %v233, %v541
      %v543 = vpop.f32.mrb[0].mxu0
      %v544 = vpop.f32.mrb[0].mxu0
      %v545 = vadd.f32 %v233, %v544
      %v546 = vpop.f32.mrb[0].mxu0
      %547 = vmatprep.mubr.bf16.mxu0 0
      %548 = vmatmul.mubr.bf16.gmra.mrb[0].mxu0 %v324
      %v549 = vpop.f32.mrb[0].mxu0
      %v550 = vadd.f32 %v233, %v549
      %v551 = vpop.f32.mrb[0].mxu0
      %v552 = vpop.f32.mrb[0].mxu0
      %v553 = vadd.f32 %v233, %v552
      %v554 = vpop.f32.mrb[0].mxu0
      %555 = vmatprep.mubr.bf16.mxu0 0
      %556 = vmatmul.mubr.bf16.gmra.mrb[0].mxu0 %v325
      %v557 = vpop.f32.mrb[0].mxu0
      %v558 = vadd.f32 %v233, %v557
      %v559 = vpop.f32.mrb[0].mxu0
      %v560 = vpop.f32.mrb[0].mxu0
      %v561 = vadd.f32 %v233, %v560
      %v562 = vpop.f32.mrb[0].mxu0
      %563 = vmatprep.mubr.bf16.mxu0 0
      %564 = vmatmul.mubr.bf16.gmra.mrb[0].mxu0 %v326
      %v565 = vpop.f32.mrb[0].mxu0
      %v566 = vadd.f32 %v233, %v565
      %v567 = vpop.f32.mrb[0].mxu0
      %v568 = vpop.f32.mrb[0].mxu0
      %v569 = vadd.f32 %v233, %v568
      %v570 = vpop.f32.mrb[0].mxu0
      %571 = vmatprep.mubr.bf16.mxu0 0
      %572 = vmatmul.mubr.bf16.gmra.mrb[0].mxu0 %v327
      %v573 = vpop.f32.mrb[0].mxu0
      %v574 = vadd.f32 %v233, %v573
      %v575 = vpop.f32.mrb[0].mxu0
      %v576 = vpop.f32.mrb[0].mxu0
      %v577 = vpop.f32.mrb[0].mxu0
      %578 = vdwg.mxu0
      %v579 = vmax.f32 %v430, 0.0
      %v580 = vmax.f32 %v433, 0.0
      %v581 = vmax.f32 %v438, 0.0
      %v582 = vmax.f32 %v441, 0.0
      %v583 = vmax.f32 %v446, 0.0
      %v584 = vmax.f32 %v449, 0.0
      %v585 = vmax.f32 %v454, 0.0
      %v586 = vmax.f32 %v457, 0.0
      %v587 = vmax.f32 %v462, 0.0
      %v588 = vmax.f32 %v465, 0.0
      %v589 = vmax.f32 %v470, 0.0
      %v590 = vmax.f32 %v473, 0.0
      %v591 = vmax.f32 %v478, 0.0
      %v592 = vmax.f32 %v481, 0.0
      %v593 = vmax.f32 %v486, 0.0
      %v594 = vmax.f32 %v489, 0.0
      %v595 = vmax.f32 %v494, 0.0
      %v596 = vmax.f32 %v497, 0.0
      %v597 = vmax.f32 %v502, 0.0
      %v598 = vmax.f32 %v505, 0.0
      %v599 = vmax.f32 %v510, 0.0
      %v600 = vmax.f32 %v513, 0.0
      %v601 = vmax.f32 %v518, 0.0
      %v602 = vmax.f32 %v521, 0.0
      %v603 = vmax.f32 %v526, 0.0
      %v604 = vmax.f32 %v529, 0.0
      %v605 = vmax.f32 %v534, 0.0
      %v606 = vmax.f32 %v537, 0.0
      %v607 = vmax.f32 %v542, 0.0
      %v608 = vmax.f32 %v545, 0.0
      %v609 = vmax.f32 %v550, 0.0
      %v610 = vmax.f32 %v553, 0.0
      %v611 = vmax.f32 %v558, 0.0
      %v612 = vmax.f32 %v561, 0.0
      %v613 = vmax.f32 %v566, 0.0
      %v614 = vmax.f32 %v569, 0.0
      %v615 = vmax.f32 %v574, 0.0
      %v616 = vpack.c.bf16 %v580, %v579
      %v617 = vpack.c.bf16 %v582, %v581
      %v618 = vpack.c.bf16 %v584, %v583
      %v619 = vpack.c.bf16 %v586, %v585
      %v620 = vpack.c.bf16 %v588, %v587
      %v621 = vpack.c.bf16 %v590, %v589
      %v622 = vpack.c.bf16 %v592, %v591
      %v623 = vpack.c.bf16 %v594, %v593
      %v624 = vpack.c.bf16 %v596, %v595
      %v625 = vpack.c.bf16 %v598, %v597
      %v626 = vpack.c.bf16 %v600, %v599
      %v627 = vpack.c.bf16 %v602, %v601
      %v628 = vpack.c.bf16 %v604, %v603
      %v629 = vpack.c.bf16 %v606, %v605
      %v630 = vpack.c.bf16 %v608, %v607
      %v631 = vpack.c.bf16 %v610, %v609
      %v632 = vpack.c.bf16 %v612, %v611
      %v633 = vpack.c.bf16 %v614, %v613
      %v634 = vpack.c.bf16 %v615, %v615
      %v654 = vunpack.c.l.b16 %v616
      %v655 = vunpack.c.h.b16 %v616
      %v656 = vunpack.c.l.b16 %v617
      %v657 = vunpack.c.h.b16 %v617
      %v658 = vunpack.c.l.b16 %v618
      %v659 = vunpack.c.h.b16 %v618
      %v660 = vunpack.c.l.b16 %v619
      %v661 = vunpack.c.h.b16 %v619
      %v662 = vunpack.c.l.b16 %v620
      %v663 = vunpack.c.h.b16 %v620
      %v664 = vunpack.c.l.b16 %v621
      %v665 = vunpack.c.h.b16 %v621
      %v666 = vunpack.c.l.b16 %v622
      %v667 = vunpack.c.h.b16 %v622
      %v668 = vunpack.c.l.b16 %v623
      %v669 = vunpack.c.h.b16 %v623
      %v670 = vunpack.c.l.b16 %v624
      %v671 = vunpack.c.h.b16 %v624
      %v672 = vunpack.c.l.b16 %v625
      %v673 = vunpack.c.h.b16 %v625
      %v674 = vunpack.c.l.b16 %v626
      %v675 = vunpack.c.h.b16 %v626
      %v676 = vunpack.c.l.b16 %v627
      %v677 = vunpack.c.h.b16 %v627
      %v678 = vunpack.c.l.b16 %v628
      %v679 = vunpack.c.h.b16 %v628
      %v680 = vunpack.c.l.b16 %v629
      %v681 = vunpack.c.h.b16 %v629
      %v682 = vunpack.c.l.b16 %v630
      %v683 = vunpack.c.h.b16 %v630
      %v684 = vunpack.c.l.b16 %v631
      %v685 = vunpack.c.h.b16 %v631
      %v686 = vunpack.c.l.b16 %v632
      %v687 = vunpack.c.h.b16 %v632
      %v688 = vunpack.c.l.b16 %v633
      %v689 = vunpack.c.h.b16 %v633
      %v690 = vunpack.c.l.b16 %v634
      %v691 = vpack.c.b16 %v654, %v654
      %v692 = vpack.c.b16 %v655, %v655
      %v693 = vpack.c.b16 %v656, %v656
      %v694 = vpack.c.b16 %v657, %v657
      %v695 = vpack.c.b16 %v658, %v658
      %v696 = vpack.c.b16 %v659, %v659
      %v697 = vpack.c.b16 %v660, %v660
      %v698 = vpack.c.b16 %v661, %v661
      %v699 = vpack.c.b16 %v662, %v662
      %v700 = vpack.c.b16 %v663, %v663
      %v701 = vpack.c.b16 %v664, %v664
      %v702 = vpack.c.b16 %v665, %v665
      %v703 = vpack.c.b16 %v666, %v666
      %v704 = vpack.c.b16 %v667, %v667
      %v705 = vpack.c.b16 %v668, %v668
      %v706 = vpack.c.b16 %v669, %v669
      %v707 = vpack.c.b16 %v670, %v670
      %v708 = vpack.c.b16 %v671, %v671
      %v709 = vpack.c.b16 %v672, %v672
      %v710 = vpack.c.b16 %v673, %v673
      %v711 = vpack.c.b16 %v674, %v674
      %v712 = vpack.c.b16 %v675, %v675
      %v713 = vpack.c.b16 %v676, %v676
      %v714 = vpack.c.b16 %v677, %v677
      %v715 = vpack.c.b16 %v678, %v678
      %v716 = vpack.c.b16 %v679, %v679
      %v717 = vpack.c.b16 %v680, %v680
      %v718 = vpack.c.b16 %v681, %v681
      %v719 = vpack.c.b16 %v682, %v682
      %v720 = vpack.c.b16 %v683, %v683
      %v721 = vpack.c.b16 %v684, %v684
      %v722 = vpack.c.b16 %v685, %v685
      %v723 = vpack.c.b16 %v686, %v686
      %v724 = vpack.c.b16 %v687, %v687
      %v725 = vpack.c.b16 %v688, %v688
      %v726 = vpack.c.b16 %v689, %v689
      %v727 = vpack.c.b16 %v690, %v690
      %765 = vst [vmem:[%s172] sm:$0xf] %v691
      %766 = vst [vmem:[%s172 + $0x4] sm:$0xf] %v692
      %767 = vst [vmem:[%s172 + $0x8] sm:$0xf] %v693
      %768 = vst [vmem:[%s172 + $0xc] sm:$0xf] %v694
      %769 = vst [vmem:[%s172 + $0x10] sm:$0xf] %v695
      %770 = vst [vmem:[%s172 + $0x14] sm:$0xf] %v696
      %771 = vst [vmem:[%s172 + $0x18] sm:$0xf] %v697
      %772 = vst [vmem:[%s172 + $0x1c] sm:$0xf] %v698
      %773 = vst [vmem:[%s172 + $0x20] sm:$0xf] %v699
      %774 = vst [vmem:[%s172 + $0x24] sm:$0xf] %v700
      %775 = vst [vmem:[%s172 + $0x28] sm:$0xf] %v701
      %776 = vst [vmem:[%s172 + $0x2c] sm:$0xf] %v702
      %777 = vst [vmem:[%s172 + $0x30] sm:$0xf] %v703
      %778 = vst [vmem:[%s172 + $0x34] sm:$0xf] %v704
      %779 = vst [vmem:[%s172 + $0x38] sm:$0xf] %v705
      %780 = vst [vmem:[%s172 + $0x3c] sm:$0xf] %v706
      %781 = vst [vmem:[%s172 + $0x40] sm:$0xf] %v707
      %782 = vst [vmem:[%s172 + $0x44] sm:$0xf] %v708
      %783 = vst [vmem:[%s172 + $0x48] sm:$0xf] %v709
      %784 = vst [vmem:[%s172 + $0x4c] sm:$0xf] %v710
      %785 = vst [vmem:[%s172 + $0x50] sm:$0xf] %v711
      %786 = vst [vmem:[%s172 + $0x54] sm:$0xf] %v712
      %787 = vst [vmem:[%s172 + $0x58] sm:$0xf] %v713
      %788 = vst [vmem:[%s172 + $0x5c] sm:$0xf] %v714
      %789 = vst [vmem:[%s172 + $0x60] sm:$0xf] %v715
      %790 = vst [vmem:[%s172 + $0x64] sm:$0xf] %v716
      %791 = vst [vmem:[%s172 + $0x68] sm:$0xf] %v717
      %792 = vst [vmem:[%s172 + $0x6c] sm:$0xf] %v718
      %793 = vst [vmem:[%s172 + $0x70] sm:$0xf] %v719
      %794 = vst [vmem:[%s172 + $0x74] sm:$0xf] %v720
      %795 = vst [vmem:[%s172 + $0x78] sm:$0xf] %v721
      %796 = vst [vmem:[%s172 + $0x7c] sm:$0xf] %v722
      %797 = vst [vmem:[%s172 + $0x80] sm:$0xf] %v723
      %798 = vst [vmem:[%s172 + $0x84] sm:$0xf] %v724
      %799 = vst [vmem:[%s172 + $0x88] sm:$0xf] %v725
      %800 = vst [vmem:[%s172 + $0x8c] sm:$0xf] %v726
      %801 = vst [vmem:[%s172 + $0x90] sm:$0xf] %v727
      %s802 = smul.u32 37, %s14
      %p803 = scmp.lt.s32.totalorder %s802, 73
      %s804 = scalar_select %p803, %s802, 73
      %s805 = smul.addr %s804, 4
      %s806 = scalar_lea.vmem %s3, %s805
      // Predicated region
      $region33: #{conv_net_forward.5} parent=31 // pred_check
        %p807 = pneg %p100
      $region34: #{conv_net_forward.5} parent=31 // pred_check_branch
        %809 = sbr.rel (%p807) target = $region36
      $region35: #{conv_net_forward.5} parent=31 // pred_region
        %s810 = smul.u32 37, %s14
      $region36: #{conv_net_forward.5} parent=31 // pred_fallthru
        _
    $region32: #{conv_net_forward.5} parent=5 // pred_fallthru
      _
    %p811 = scmp.le.s32.totalorder 2, %s9
    // Predicated region
    $region37: #{conv_net_forward.5} parent=5 // pred_check
      %p812 = pneg %p811
    $region38: #{conv_net_forward.5} parent=5 // pred_check_branch
      %814 = sbr.rel (%p812) target = $region40
    $region39: #{conv_net_forward.5} parent=5 // pred_region
      %s815 = ssub.s32 %s9, 2
      // Predicated region
      $region41: #{conv_net_forward.5} parent=39 // pred_check
        %p816 = pneg %p106
      $region42: #{conv_net_forward.5} parent=39 // pred_check_branch
        %818 = sbr.rel (%p816) target = $region44
      $region43: #{conv_net_forward.5} parent=39 // pred_region
        %s819 = smul.u32 37, %s15
        %p820 = scmp.lt.s32.totalorder %s819, 73
        %s821 = scalar_select %p820, %s819, 73
        %s822 = smul.addr %s821, 4
        %s823 = scalar_lea.vmem %s3, %s822
      $region44: #{conv_net_forward.5} parent=39 // pred_fallthru
        _
    $region40: #{conv_net_forward.5} parent=5 // pred_fallthru
      _
  $region6: #{conv_net_forward.5} parent=0 // loop_footer
    %s13 = sadd.s32 1, %s9
  $region7: #{conv_net_forward.5} parent=0 // loop_footer_branch
    %8 = sbr.rel target = $region3
  $region8: #{conv_net_forward.5} parent=0 // loop_exit
    _

// kernel: conv_net_forward.6
$region0: #{conv_net_forward.6}
  #allocation0 [shape = 'u32[]', space=smem, size = 0x4, offset = 0x4, fixed_abs, tag = 'smem constant byte address 0x4 - core index']
  #allocation1 [shape = 'u32[144,128]{1,0:T(1,128)}', space=vmem, size = 0x12000, scoped, tag = 'internal scratch']
  %s0 = inlined_call_operand.vmem [shape: bf16[128,128], index: 0, kind: input, shape index: {}]
  %s1 = inlined_call_operand.vmem [shape: bf16[128,128], index: 1, kind: input, shape index: {}]
  %s2 = inlined_call_operand.vmem [shape: f32[1,128], index: 2, kind: input, shape index: {}]
  %s3 = inlined_call_operand.vmem [shape: bf16[128,128], index: 3, kind: output, shape index: {}]
  %s4 = sld [smem:[#allocation0]]
  $region45: #{conv_net_forward.6} parent=0
    _
  %s6 = ssub.s32 1, %s4
  %s7 = scalar_select 0, %s6, %s4
  loop: start=0, step=1, limit=4
  $region2: #{conv_net_forward.6} parent=0 // loop_pre_header
    _
  $region3: #{conv_net_forward.6} parent=0 // loop_header
    %s9 = sphi 0, %s13
    %p10 = scmp.ge.s32.totalorder %s9, 4
    %s19 = sphi 0, %s21
    %s22 = sphi 0, %s19
    %s23 = sphi 0, %s22
    %s39 = sphi 0, %s23
    %s43 = sphi 0, %s43
    %s45 = sphi 0, %s43
    %s46 = sphi 0, %s45
    %s60 = sphi 0, %s46
    %s64 = sphi 0, %s64
    %s66 = sphi 0, %s64
    %s67 = sphi 0, %s66
    %s81 = sphi 0, %s67
    %s87 = sphi 0, %s89
    %s90 = sphi 0, %s87
    %s91 = sphi 0, %s90
    %s107 = sphi 0, %s91
  $region4: #{conv_net_forward.6} parent=0 // loop_header_branch
    %12 = sbr.rel (%p10) target = $region8
  $region5: #{conv_net_forward.6} parent=0 // loop_body
    %s14 = ssub.s32 %s9, 1
    %s15 = ssub.s32 %s9, 2
    %s16 = sadd.s32 %s9, 1
    %s17 = ssub.s32 %s9, %s16
    %p18 = scmp.eq.s32.totalorder %s17, 0
    %s20 = sadd.s32 %s19, 1
    %s21 = scalar_select %p18, %s19, %s20
    %p24 = pneg %p18
    %p25 = scmp.eq.s32.totalorder %s9, 1
    %p26 = por %p24, %p25
    %p27 = scmp.ne.s32.totalorder %s19, %s22
    %p28 = scmp.eq.s32.totalorder %s9, 0
    %p29 = por %p27, %p28
    %p30 = scmp.ne.s32.totalorder %s19, %s22
    %p31 = scmp.eq.s32.totalorder %s14, 1
    %p32 = por %p30, %p31
    %p33 = scmp.ne.s32.totalorder %s22, %s23
    %p34 = scmp.eq.s32.totalorder %s14, 0
    %p35 = por %p33, %p34
    %p36 = scmp.ne.s32.totalorder %s22, %s23
    %p37 = scmp.eq.s32.totalorder %s15, 1
    %p38 = por %p36, %p37
    %p40 = scmp.ne.s32.totalorder %s23, %s39
    %p41 = scmp.eq.s32.totalorder %s15, 0
    %p42 = por %p40, %p41
    %s44 = sadd.s32 %s43, 1
    %p47 = scmp.eq.s32.totalorder %s9, 1
    %p48 = scmp.ne.s32.totalorder %s43, %s45
    %p49 = scmp.eq.s32.totalorder %s9, 0
    %p50 = por %p48, %p49
    %p51 = scmp.ne.s32.totalorder %s43, %s45
    %p52 = scmp.eq.s32.totalorder %s14, 1
    %p53 = por %p51, %p52
    %p54 = scmp.ne.s32.totalorder %s45, %s46
    %p55 = scmp.eq.s32.totalorder %s14, 0
    %p56 = por %p54, %p55
    %p57 = scmp.ne.s32.totalorder %s45, %s46
    %p58 = scmp.eq.s32.totalorder %s15, 1
    %p59 = por %p57, %p58
    %p61 = scmp.ne.s32.totalorder %s46, %s60
    %p62 = scmp.eq.s32.totalorder %s15, 0
    %p63 = por %p61, %p62
    %s65 = sadd.s32 %s64, 1
    %p68 = scmp.eq.s32.totalorder %s9, 1
    %p69 = scmp.ne.s32.totalorder %s64, %s66
    %p70 = scmp.eq.s32.totalorder %s9, 0
    %p71 = por %p69, %p70
    %p72 = scmp.ne.s32.totalorder %s64, %s66
    %p73 = scmp.eq.s32.totalorder %s14, 1
    %p74 = por %p72, %p73
    %p75 = scmp.ne.s32.totalorder %s66, %s67
    %p76 = scmp.eq.s32.totalorder %s14, 0
    %p77 = por %p75, %p76
    %p78 = scmp.ne.s32.totalorder %s66, %s67
    %p79 = scmp.eq.s32.totalorder %s15, 1
    %p80 = por %p78, %p79
    %p82 = scmp.ne.s32.totalorder %s67, %s81
    %p83 = scmp.eq.s32.totalorder %s15, 0
    %p84 = por %p82, %p83
    %s85 = ssub.s32 %s9, %s16
    %p86 = scmp.eq.s32.totalorder %s85, 0
    %s88 = sadd.s32 %s87, 1
    %s89 = scalar_select %p86, %s87, %s88
    %p92 = pneg %p86
    %p93 = scmp.eq.s32.totalorder %s9, 1
    %p94 = por %p92, %p93
    %p95 = scmp.ne.s32.totalorder %s87, %s90
    %p96 = scmp.eq.s32.totalorder %s9, 0
    %p97 = por %p95, %p96
    %p98 = scmp.ne.s32.totalorder %s87, %s90
    %p99 = scmp.eq.s32.totalorder %s14, 1
    %p100 = por %p98, %p99
    %p101 = scmp.ne.s32.totalorder %s90, %s91
    %p102 = scmp.eq.s32.totalorder %s14, 0
    %p103 = por %p101, %p102
    %p104 = scmp.ne.s32.totalorder %s90, %s91
    %p105 = scmp.eq.s32.totalorder %s15, 1
    %p106 = por %p104, %p105
    %p108 = scmp.ne.s32.totalorder %s91, %s107
    %p109 = scmp.eq.s32.totalorder %s15, 0
    %p110 = por %p108, %p109
    %p111 = scmp.le.s32.totalorder 1, %s9
    %p112 = scmp.lt.s32.totalorder %s9, 3
    %p113 = pnand %p111, %p112
    %p114 = pneg %p113
    // Predicated region
    $region9: #{conv_net_forward.6} parent=5 // pred_check
      _
    $region10: #{conv_net_forward.6} parent=5 // pred_check_branch
      %116 = sbr.rel (%p113) target = $region12
    $region11: #{conv_net_forward.6} parent=5 // pred_region
      %s117 = ssub.s32 %s9, 1
      // Predicated region
      $region13: #{conv_net_forward.6} parent=11 // pred_check
        %p118 = pneg %p56
      $region14: #{conv_net_forward.6} parent=11 // pred_check_branch
        %120 = sbr.rel (%p118) target = $region16
      $region15: #{conv_net_forward.6} parent=11 // pred_region
        _
      $region16: #{conv_net_forward.6} parent=11 // pred_fallthru
        _
      // Predicated region
      $region17: #{conv_net_forward.6} parent=11 // pred_check
        %p121 = pneg %p77
      $region18: #{conv_net_forward.6} parent=11 // pred_check_branch
        %123 = sbr.rel (%p121) target = $region20
      $region19: #{conv_net_forward.6} parent=11 // pred_region
        _
      $region20: #{conv_net_forward.6} parent=11 // pred_fallthru
        _
    $region12: #{conv_net_forward.6} parent=5 // pred_fallthru
      _
    %p124 = scmp.lt.s32.totalorder %s9, 2
    // Predicated region
    $region21: #{conv_net_forward.6} parent=5 // pred_check
      %p125 = pneg %p124
    $region22: #{conv_net_forward.6} parent=5 // pred_check_branch
      %127 = sbr.rel (%p125) target = $region24
    $region23: #{conv_net_forward.6} parent=5 // pred_region
      // Predicated region
      $region25: #{conv_net_forward.6} parent=23 // pred_check
        %p128 = pneg %p29
      $region26: #{conv_net_forward.6} parent=23 // pred_check_branch
        %130 = sbr.rel (%p128) target = $region28
      $region27: #{conv_net_forward.6} parent=23 // pred_region
        %s131 = smul.u32 8, %s9
        %p132 = scmp.lt.s32.totalorder %s131, 15
        %s133 = scalar_select %p132, %s131, 15
        %s134 = smul.addr %s133, 4
        %s135 = scalar_lea.vmem %s0, %s134
        %s136 = smul.u32 8, %s9
      $region28: #{conv_net_forward.6} parent=23 // pred_fallthru
        _
    $region24: #{conv_net_forward.6} parent=5 // pred_fallthru
      _
    %p137 = scmp.le.s32.totalorder 1, %s9
    %p138 = scmp.lt.s32.totalorder %s9, 3
    %p139 = pnand %p137, %p138
    %p140 = pneg %p139
    // Predicated region
    $region29: #{conv_net_forward.6} parent=5 // pred_check
      _
    $region30: #{conv_net_forward.6} parent=5 // pred_check_branch
      %142 = sbr.rel (%p139) target = $region32
    $region31: #{conv_net_forward.6} parent=5 // pred_region
      %s143 = ssub.s32 %s9, 1
      %s144 = smul.u32 8, %s14
      %p145 = scmp.lt.s32.totalorder %s144, 15
      %s146 = scalar_select %p145, %s144, 15
      %s147 = smul.addr %s146, 4
      %s148 = scalar_lea.vmem %s0, %s147
      %p149 = pneg %p35
      %p150 = pneg %p32
      %p151 = pneg %p56
      %p152 = pneg %p53
      %p153 = pneg %p77
      %p154 = pneg %p74
      %p155 = pneg %p103
      %p156 = pneg %p100
      %s157 = smul.u32 8, %s14
      %p158 = scmp.lt.s32.totalorder %s157, 15
      %s159 = scalar_select %p158, %s157, 15
      %s160 = smul.addr %s159, 4
      %s161 = scalar_lea.vmem %s3, %s160
      %s162 = smul.u32 8, %s14
      %p163 = scmp.lt.s32.totalorder %s162, 15
      %s164 = scalar_select %p163, %s162, 15
      %s165 = smul.addr %s164, 4
      %s166 = scalar_lea.vmem %s0, %s165
      %s167 = smul.u32 8, %s14
      %s168 = smul.u32 8, %s14
      %p169 = scmp.lt.s32.totalorder %s168, 15
      %s170 = scalar_select %p169, %s168, 15
      %s171 = smul.addr %s170, 4
      %s172 = scalar_lea.vmem %s3, %s171
      %s173 = smul.u32 8, %s14
      %v175 = vld [vmem:[%s166] sm:$0xf]
      %v176 = vld [vmem:[%s166 + $0x4] sm:$0xf]
      %v177 = vld [vmem:[%s166 + $0x8] sm:$0xf]
      %v178 = vld [vmem:[%s166 + $0xc] sm:$0xf]
      %v179 = vld [vmem:[%s166 + $0x10] sm:$0xf]
      %v180 = vld [vmem:[%s166 + $0x14] sm:$0xf]
      %v181 = vld [vmem:[%s166 + $0x18] sm:$0xf]
      %v182 = vld [vmem:[%s166 + $0x1c] sm:$0xf]
      %v183 = vld [vmem:[%s1] sm:$0xf]
      %v184 = vld [vmem:[%s1 + $0x4] sm:$0xf]
      %v185 = vld [vmem:[%s1 + $0x8] sm:$0xf]
      %v186 = vld [vmem:[%s1 + $0xc] sm:$0xf]
      %v187 = vld [vmem:[%s1 + $0x10] sm:$0xf]
      %v188 = vld [vmem:[%s1 + $0x14] sm:$0xf]
      %v189 = vld [vmem:[%s1 + $0x18] sm:$0xf]
      %v190 = vld [vmem:[%s1 + $0x1c] sm:$0xf]
      %v191 = vld [vmem:[%s1 + $0x20] sm:$0xf]
      %v192 = vld [vmem:[%s1 + $0x24] sm:$0xf]
      %v193 = vld [vmem:[%s1 + $0x28] sm:$0xf]
      %v194 = vld [vmem:[%s1 + $0x2c] sm:$0xf]
      %v195 = vld [vmem:[%s1 + $0x30] sm:$0xf]
      %v196 = vld [vmem:[%s1 + $0x34] sm:$0xf]
      %v197 = vld [vmem:[%s1 + $0x38] sm:$0xf]
      %v198 = vld [vmem:[%s1 + $0x3c] sm:$0xf]
      %v199 = vld [vmem:[%s2] sm:$0x1]
      %v201 = vlaneseq
      %v202 = vshrl.u32 %v201, 7
      %v203 = vsub.s32 0, %v202
      %v204 = vrot.slane %v199, %v203
      %v214 = vunpack.c.l.b16 %v175
      %v215 = vunpack.c.l.b16 %v176
      %v216 = vunpack.c.l.b16 %v177
      %v217 = vunpack.c.l.b16 %v178
      %v218 = vunpack.c.l.b16 %v179
      %v219 = vunpack.c.l.b16 %v180
      %v220 = vunpack.c.l.b16 %v181
      %v221 = vunpack.c.l.b16 %v182
      %v222 = vpack.c.b16 %v215, %v214
      %v223 = vpack.c.b16 %v217, %v216
      %v224 = vpack.c.b16 %v219, %v218
      %v225 = vpack.c.b16 %v221, %v220
      %v246 = vunpack.c.l.b16 %v183
      %v247 = vunpack.c.l.b16 %v184
      %v248 = vunpack.c.l.b16 %v185
      %v249 = vunpack.c.l.b16 %v186
      %v250 = vunpack.c.l.b16 %v187
      %v251 = vunpack.c.l.b16 %v188
      %v252 = vunpack.c.l.b16 %v189
      %v253 = vunpack.c.l.b16 %v190
      %v254 = vunpack.c.l.b16 %v191
      %v255 = vunpack.c.l.b16 %v192
      %v256 = vunpack.c.l.b16 %v193
      %v257 = vunpack.c.l.b16 %v194
      %v258 = vunpack.c.l.b16 %v195
      %v259 = vunpack.c.l.b16 %v196
      %v260 = vunpack.c.l.b16 %v197
      %v261 = vunpack.c.l.b16 %v198
      %v262 = vpack.c.b16 %v247, %v246
      %v263 = vpack.c.b16 %v249, %v248
      %v264 = vpack.c.b16 %v251, %v250
      %v265 = vpack.c.b16 %v253, %v252
      %v266 = vpack.c.b16 %v255, %v254
      %v267 = vpack.c.b16 %v257, %v256
      %v268 = vpack.c.b16 %v259, %v258
      %v269 = vpack.c.b16 %v261, %v260
      %278 = vmatprep.subr.bf16.mxu0 0
      %279 = vmatpush1.bf16.msra.mxu0 %v262
      %280 = vmatprep.subr.bf16.mxu0 0
      %281 = vmatpush1.bf16.msra.mxu0 %v263
      %282 = vmatprep.subr.bf16.mxu0 0
      %283 = vmatpush1.bf16.msra.mxu0 %v264
      %284 = vmatprep.subr.bf16.mxu0 0
      %285 = vmatpush1.bf16.msra.mxu0 %v265
      %286 = vmatprep.subr.bf16.mxu0 0
      %287 = vmatpush1.bf16.msra.mxu0 %v266
      %288 = vmatprep.subr.bf16.mxu0 0
      %289 = vmatpush1.bf16.msra.mxu0 %v267
      %290 = vmatprep.subr.bf16.mxu0 0
      %291 = vmatpush1.bf16.msra.mxu0 %v268
      %292 = vmatprep.subr.bf16.mxu0 0
      %293 = vmatpush1.bf16.msra.mxu0 %v269
      %294 = vmatprep.subr.bf16.mxu0 0
      %295 = vmatpush1.bf16.msra.mxu0 0
      %296 = vmatprep.subr.bf16.mxu0 0
      %297 = vmatpush1.bf16.msra.mxu0 0
      %298 = vmatprep.subr.bf16.mxu0 0
      %299 = vmatpush1.bf16.msra.mxu0 0
      %300 = vmatprep.subr.bf16.mxu0 0
      %301 = vmatpush1.bf16.msra.mxu0 0
      %302 = vmatprep.subr.bf16.mxu0 0
      %303 = vmatpush1.bf16.msra.mxu0 0
      %304 = vmatprep.subr.bf16.mxu0 0
      %305 = vmatpush1.bf16.msra.mxu0 0
      %306 = vmatprep.subr.bf16.mxu0 0
      %307 = vmatpush1.bf16.msra.mxu0 0
      %308 = vmatprep.subr.bf16.mxu0 0
      %309 = vmatpush1.bf16.msra.mxu0 0
      %310 = vmatprep.mubr.bf16.mxu0 0
      %311 = vmatmul.mubr.bf16.gmra.mrb[0].mxu0 %v222
      %v312 = vpop.f32.mrb[0].mxu0
      %v313 = vadd.f32 %v204, %v312
      %v314 = vpop.f32.mrb[0].mxu0
      %v315 = vpop.f32.mrb[0].mxu0
      %v316 = vadd.f32 %v204, %v315
      %v317 = vpop.f32.mrb[0].mxu0
      %318 = vmatprep.mubr.bf16.mxu0 0
      %319 = vmatmul.mubr.bf16.gmra.mrb[0].mxu0 %v223
      %v320 = vpop.f32.mrb[0].mxu0
      %v321 = vadd.f32 %v204, %v320
      %v322 = vpop.f32.mrb[0].mxu0
      %v323 = vpop.f32.mrb[0].mxu0
      %v324 = vadd.f32 %v204, %v323
      %v325 = vpop.f32.mrb[0].mxu0
      %326 = vmatprep.mubr.bf16.mxu0 0
      %327 = vmatmul.mubr.bf16.gmra.mrb[0].mxu0 %v224
      %v328 = vpop.f32.mrb[0].mxu0
      %v329 = vadd.f32 %v204, %v328
      %v330 = vpop.f32.mrb[0].mxu0
      %v331 = vpop.f32.mrb[0].mxu0
      %v332 = vadd.f32 %v204, %v331
      %v333 = vpop.f32.mrb[0].mxu0
      %334 = vmatprep.mubr.bf16.mxu0 0
      %335 = vmatmul.mubr.bf16.gmra.mrb[0].mxu0 %v225
      %v336 = vpop.f32.mrb[0].mxu0
      %v337 = vadd.f32 %v204, %v336
      %v338 = vpop.f32.mrb[0].mxu0
      %v339 = vpop.f32.mrb[0].mxu0
      %v340 = vadd.f32 %v204, %v339
      %v341 = vpop.f32.mrb[0].mxu0
      %342 = vdwg.mxu0
      %v343 = vmax.f32 %v313, 0.0
      %v344 = vmax.f32 %v316, 0.0
      %v345 = vmax.f32 %v321, 0.0
      %v346 = vmax.f32 %v324, 0.0
      %v347 = vmax.f32 %v329, 0.0
      %v348 = vmax.f32 %v332, 0.0
      %v349 = vmax.f32 %v337, 0.0
      %v350 = vmax.f32 %v340, 0.0
      %v351 = vpack.c.bf16 %v344, %v343
      %v352 = vpack.c.bf16 %v346, %v345
      %v353 = vpack.c.bf16 %v348, %v347
      %v354 = vpack.c.bf16 %v350, %v349
      %v359 = vunpack.c.l.b16 %v351
      %v360 = vunpack.c.h.b16 %v351
      %v361 = vunpack.c.l.b16 %v352
      %v362 = vunpack.c.h.b16 %v352
      %v363 = vunpack.c.l.b16 %v353
      %v364 = vunpack.c.h.b16 %v353
      %v365 = vunpack.c.l.b16 %v354
      %v366 = vunpack.c.h.b16 %v354
      %v367 = vpack.c.b16 %v359, %v359
      %v368 = vpack.c.b16 %v360, %v360
      %v369 = vpack.c.b16 %v361, %v361
      %v370 = vpack.c.b16 %v362, %v362
      %v371 = vpack.c.b16 %v363, %v363
      %v372 = vpack.c.b16 %v364, %v364
      %v373 = vpack.c.b16 %v365, %v365
      %v374 = vpack.c.b16 %v366, %v366
      %383 = vst [vmem:[%s172] sm:$0xf] %v367
      %384 = vst [vmem:[%s172 + $0x4] sm:$0xf] %v368
      %385 = vst [vmem:[%s172 + $0x8] sm:$0xf] %v369
      %386 = vst [vmem:[%s172 + $0xc] sm:$0xf] %v370
      %387 = vst [vmem:[%s172 + $0x10] sm:$0xf] %v371
      %388 = vst [vmem:[%s172 + $0x14] sm:$0xf] %v372
      %389 = vst [vmem:[%s172 + $0x18] sm:$0xf] %v373
      %390 = vst [vmem:[%s172 + $0x1c] sm:$0xf] %v374
      %s391 = smul.u32 8, %s14
      %p392 = scmp.lt.s32.totalorder %s391, 15
      %s393 = scalar_select %p392, %s391, 15
      %s394 = smul.addr %s393, 4
      %s395 = scalar_lea.vmem %s3, %s394
      // Predicated region
      $region33: #{conv_net_forward.6} parent=31 // pred_check
        %p396 = pneg %p100
      $region34: #{conv_net_forward.6} parent=31 // pred_check_branch
        %398 = sbr.rel (%p396) target = $region36
      $region35: #{conv_net_forward.6} parent=31 // pred_region
        %s399 = smul.u32 8, %s14
      $region36: #{conv_net_forward.6} parent=31 // pred_fallthru
        _
    $region32: #{conv_net_forward.6} parent=5 // pred_fallthru
      _
    %p400 = scmp.le.s32.totalorder 2, %s9
    // Predicated region
    $region37: #{conv_net_forward.6} parent=5 // pred_check
      %p401 = pneg %p400
    $region38: #{conv_net_forward.6} parent=5 // pred_check_branch
      %403 = sbr.rel (%p401) target = $region40
    $region39: #{conv_net_forward.6} parent=5 // pred_region
      %s404 = ssub.s32 %s9, 2
      // Predicated region
      $region41: #{conv_net_forward.6} parent=39 // pred_check
        %p405 = pneg %p106
      $region42: #{conv_net_forward.6} parent=39 // pred_check_branch
        %407 = sbr.rel (%p405) target = $region44
      $region43: #{conv_net_forward.6} parent=39 // pred_region
        %s408 = smul.u32 8, %s15
        %p409 = scmp.lt.s32.totalorder %s408, 15
        %s410 = scalar_select %p409, %s408, 15
        %s411 = smul.addr %s410, 4
        %s412 = scalar_lea.vmem %s3, %s411
      $region44: #{conv_net_forward.6} parent=39 // pred_fallthru
        _
    $region40: #{conv_net_forward.6} parent=5 // pred_fallthru
      _
  $region6: #{conv_net_forward.6} parent=0 // loop_footer
    %s13 = sadd.s32 1, %s9
  $region7: #{conv_net_forward.6} parent=0 // loop_footer_branch
    %8 = sbr.rel target = $region3
  $region8: #{conv_net_forward.6} parent=0 // loop_exit
    _

// kernel: conv_net_forward.7
$region0: #{conv_net_forward.7}
  #allocation0 [shape = 'u32[]', space=smem, size = 0x4, offset = 0x4, fixed_abs, tag = 'smem constant byte address 0x4 - core index']
  #allocation1 [shape = 'u32[144,128]{1,0:T(1,128)}', space=vmem, size = 0x12000, scoped, tag = 'internal scratch']
  %s0 = inlined_call_operand.vmem [shape: bf16[8,1536], index: 0, kind: input, shape index: {}]
  %s1 = inlined_call_operand.vmem [shape: bf16[1536,384], index: 1, kind: input, shape index: {}]
  %s2 = inlined_call_operand.vmem [shape: f32[1,384], index: 2, kind: input, shape index: {}]
  %s3 = inlined_call_operand.vmem [shape: bf16[384,128], index: 3, kind: input, shape index: {}]
  %s4 = inlined_call_operand.vmem [shape: f32[1,128], index: 4, kind: input, shape index: {}]
  %s5 = inlined_call_operand.vmem [shape: bf16[128,128], index: 5, kind: input, shape index: {}]
  %s6 = inlined_call_operand.vmem [shape: f32[1,128], index: 6, kind: input, shape index: {}]
  %s7 = inlined_call_operand.vmem [shape: f32[8,128], index: 7, kind: output, shape index: {}]
  %s8 = sld [smem:[#allocation0]]
  $region38: #{conv_net_forward.7} parent=0
    _
  %s10 = ssub.s32 1, %s8
  %s11 = scalar_select 0, %s10, %s8
  // Predicated region
  $region2: #{conv_net_forward.7} parent=0 // pred_check
    _
  $region3: #{conv_net_forward.7} parent=0 // pred_check_branch
    %13 = sbr.rel (0) target = $region5
  $region4: #{conv_net_forward.7} parent=0 // pred_region
    _
  $region5: #{conv_net_forward.7} parent=0 // pred_fallthru
    _
  // Predicated region
  $region6: #{conv_net_forward.7} parent=0 // pred_check
    _
  $region7: #{conv_net_forward.7} parent=0 // pred_check_branch
    %15 = sbr.rel (0) target = $region9
  $region8: #{conv_net_forward.7} parent=0 // pred_region
    _
  $region9: #{conv_net_forward.7} parent=0 // pred_fallthru
    _
  // Predicated region
  $region10: #{conv_net_forward.7} parent=0 // pred_check
    _
  $region11: #{conv_net_forward.7} parent=0 // pred_check_branch
    %17 = sbr.rel (0) target = $region13
  $region12: #{conv_net_forward.7} parent=0 // pred_region
    _
  $region13: #{conv_net_forward.7} parent=0 // pred_fallthru
    _
  // Predicated region
  $region14: #{conv_net_forward.7} parent=0 // pred_check
    _
  $region15: #{conv_net_forward.7} parent=0 // pred_check_branch
    %19 = sbr.rel (0) target = $region17
  $region16: #{conv_net_forward.7} parent=0 // pred_region
    _
  $region17: #{conv_net_forward.7} parent=0 // pred_fallthru
    _
  // Predicated region
  $region18: #{conv_net_forward.7} parent=0 // pred_check
    _
  $region19: #{conv_net_forward.7} parent=0 // pred_check_branch
    %21 = sbr.rel (0) target = $region21
  $region20: #{conv_net_forward.7} parent=0 // pred_region
    _
  $region21: #{conv_net_forward.7} parent=0 // pred_fallthru
    _
  // Predicated region
  $region22: #{conv_net_forward.7} parent=0 // pred_check
    _
  $region23: #{conv_net_forward.7} parent=0 // pred_check_branch
    %23 = sbr.rel (0) target = $region25
  $region24: #{conv_net_forward.7} parent=0 // pred_region
    _
  $region25: #{conv_net_forward.7} parent=0 // pred_fallthru
    _
  // Predicated region
  $region26: #{conv_net_forward.7} parent=0 // pred_check
    _
  $region27: #{conv_net_forward.7} parent=0 // pred_check_branch
    %25 = sbr.rel (0) target = $region29
  $region28: #{conv_net_forward.7} parent=0 // pred_region
    _
  $region29: #{conv_net_forward.7} parent=0 // pred_fallthru
    _
  %v27 = vld [vmem:[%s0] sm:$0xff]
  %v28 = vld [vmem:[%s0 + $0x8] sm:$0xff]
  %v29 = vld [vmem:[%s0 + $0x10] sm:$0xff]
  %v30 = vld [vmem:[%s0 + $0x18] sm:$0xff]
  %v31 = vld [vmem:[%s0 + $0x20] sm:$0xff]
  %v32 = vld [vmem:[%s0 + $0x28] sm:$0xff]
  %v33 = vld [vmem:[%s1] sm:$0xff]
  %v34 = vld [vmem:[%s1 + $0x8] sm:$0xf]
  %v35 = vld [vmem:[%s1 + $0xc] sm:$0xff]
  %v36 = vld [vmem:[%s1 + $0x14] sm:$0xf]
  %v37 = vld [vmem:[%s1 + $0x18] sm:$0xff]
  %v38 = vld [vmem:[%s1 + $0x20] sm:$0xf]
  %v39 = vld [vmem:[%s1 + $0x24] sm:$0xff]
  %v40 = vld [vmem:[%s1 + $0x2c] sm:$0xf]
  %v41 = vld [vmem:[%s1 + $0x30] sm:$0xff]
  %v42 = vld [vmem:[%s1 + $0x38] sm:$0xf]
  %v43 = vld [vmem:[%s1 + $0x3c] sm:$0xff]
  %v44 = vld [vmem:[%s1 + $0x44] sm:$0xf]
  %v45 = vld [vmem:[%s1 + $0x48] sm:$0xff]
  %v46 = vld [vmem:[%s1 + $0x50] sm:$0xf]
  %v47 = vld [vmem:[%s1 + $0x54] sm:$0xff]
  %v48 = vld [vmem:[%s1 + $0x5c] sm:$0xf]
  %v49 = vld [vmem:[%s1 + $0x60] sm:$0xff]
  %v50 = vld [vmem:[%s1 + $0x68] sm:$0xf]
  %v51 = vld [vmem:[%s1 + $0x6c] sm:$0xff]
  %v52 = vld [vmem:[%s1 + $0x74] sm:$0xf]
  %v53 = vld [vmem:[%s1 + $0x78] sm:$0xff]
  %v54 = vld [vmem:[%s1 + $0x80] sm:$0xf]
  %v55 = vld [vmem:[%s1 + $0x84] sm:$0xff]
  %v56 = vld [vmem:[%s1 + $0x8c] sm:$0xf]
  %v57 = vld [vmem:[%s1 + $0x90] sm:$0xff]
  %v58 = vld [vmem:[%s1 + $0x98] sm:$0xf]
  %v59 = vld [vmem:[%s1 + $0x9c] sm:$0xff]
  %v60 = vld [vmem:[%s1 + $0xa4] sm:$0xf]
  %v61 = vld [vmem:[%s1 + $0xa8] sm:$0xff]
  %v62 = vld [vmem:[%s1 + $0xb0] sm:$0xf]
  %v63 = vld [vmem:[%s1 + $0xb4] sm:$0xff]
  %v64 = vld [vmem:[%s1 + $0xbc] sm:$0xf]
  %v65 = vld [vmem:[%s1 + $0xc0] sm:$0xff]
  %v66 = vld [vmem:[%s1 + $0xc8] sm:$0xf]
  %v67 = vld [vmem:[%s1 + $0xcc] sm:$0xff]
  %v68 = vld [vmem:[%s1 + $0xd4] sm:$0xf]
  %v69 = vld [vmem:[%s1 + $0xd8] sm:$0xff]
  %v70 = vld [vmem:[%s1 + $0xe0] sm:$0xf]
  %v71 = vld [vmem:[%s1 + $0xe4] sm:$0xff]
  %v72 = vld [vmem:[%s1 + $0xec] sm:$0xf]
  %v73 = vld [vmem:[%s1 + $0xf0] sm:$0xff]
  %v74 = vld [vmem:[%s1 + $0xf8] sm:$0xf]
  %v75 = vld [vmem:[%s1 + $0xfc] sm:$0xff]
  %v76 = vld [vmem:[%s1 + $0x104] sm:$0xf]
  %v77 = vld [vmem:[%s1 + $0x108] sm:$0xff]
  %v78 = vld [vmem:[%s1 + $0x110] sm:$0xf]
  %v79 = vld [vmem:[%s1 + $0x114] sm:$0xff]
  %v80 = vld [vmem:[%s1 + $0x11c] sm:$0xf]
  %v81 = vld [vmem:[%s1 + $0x120] sm:$0xff]
  %v82 = vld [vmem:[%s1 + $0x128] sm:$0xf]
  %v83 = vld [vmem:[%s1 + $0x12c] sm:$0xff]
  %v84 = vld [vmem:[%s1 + $0x134] sm:$0xf]
  %v85 = vld [vmem:[%s1 + $0x138] sm:$0xff]
  %v86 = vld [vmem:[%s1 + $0x140] sm:$0xf]
  %v87 = vld [vmem:[%s1 + $0x144] sm:$0xff]
  %v88 = vld [vmem:[%s1 + $0x14c] sm:$0xf]
  %v89 = vld [vmem:[%s1 + $0x150] sm:$0xff]
  %v90 = vld [vmem:[%s1 + $0x158] sm:$0xf]
  %v91 = vld [vmem:[%s1 + $0x15c] sm:$0xff]
  %v92 = vld [vmem:[%s1 + $0x164] sm:$0xf]
  %v93 = vld [vmem:[%s1 + $0x168] sm:$0xff]
  %v94 = vld [vmem:[%s1 + $0x170] sm:$0xf]
  %v95 = vld [vmem:[%s1 + $0x174] sm:$0xff]
  %v96 = vld [vmem:[%s1 + $0x17c] sm:$0xf]
  %v97 = vld [vmem:[%s1 + $0x180] sm:$0xff]
  %v98 = vld [vmem:[%s1 + $0x188] sm:$0xf]
  %v99 = vld [vmem:[%s1 + $0x18c] sm:$0xff]
  %v100 = vld [vmem:[%s1 + $0x194] sm:$0xf]
  %v101 = vld [vmem:[%s1 + $0x198] sm:$0xff]
  %v102 = vld [vmem:[%s1 + $0x1a0] sm:$0xf]
  %v103 = vld [vmem:[%s1 + $0x1a4] sm:$0xff]
  %v104 = vld [vmem:[%s1 + $0x1ac] sm:$0xf]
  %v105 = vld [vmem:[%s1 + $0x1b0] sm:$0xff]
  %v106 = vld [vmem:[%s1 + $0x1b8] sm:$0xf]
  %v107 = vld [vmem:[%s1 + $0x1bc] sm:$0xff]
  %v108 = vld [vmem:[%s1 + $0x1c4] sm:$0xf]
  %v109 = vld [vmem:[%s1 + $0x1c8] sm:$0xff]
  %v110 = vld [vmem:[%s1 + $0x1d0] sm:$0xf]
  %v111 = vld [vmem:[%s1 + $0x1d4] sm:$0xff]
  %v112 = vld [vmem:[%s1 + $0x1dc] sm:$0xf]
  %v113 = vld [vmem:[%s1 + $0x1e0] sm:$0xff]
  %v114 = vld [vmem:[%s1 + $0x1e8] sm:$0xf]
  %v115 = vld [vmem:[%s1 + $0x1ec] sm:$0xff]
  %v116 = vld [vmem:[%s1 + $0x1f4] sm:$0xf]
  %v117 = vld [vmem:[%s1 + $0x1f8] sm:$0xff]
  %v118 = vld [vmem:[%s1 + $0x200] sm:$0xf]
  %v119 = vld [vmem:[%s1 + $0x204] sm:$0xff]
  %v120 = vld [vmem:[%s1 + $0x20c] sm:$0xf]
  %v121 = vld [vmem:[%s1 + $0x210] sm:$0xff]
  %v122 = vld [vmem:[%s1 + $0x218] sm:$0xf]
  %v123 = vld [vmem:[%s1 + $0x21c] sm:$0xff]
  %v124 = vld [vmem:[%s1 + $0x224] sm:$0xf]
  %v125 = vld [vmem:[%s1 + $0x228] sm:$0xff]
  %v126 = vld [vmem:[%s1 + $0x230] sm:$0xf]
  %v127 = vld [vmem:[%s1 + $0x234] sm:$0xff]
  %v128 = vld [vmem:[%s1 + $0x23c] sm:$0xf]
  %v129 = vld [vmem:[%s1 + $0x240] sm:$0xff]
  %v130 = vld [vmem:[%s1 + $0x248] sm:$0xf]
  %v131 = vld [vmem:[%s1 + $0x24c] sm:$0xff]
  %v132 = vld [vmem:[%s1 + $0x254] sm:$0xf]
  %v133 = vld [vmem:[%s1 + $0x258] sm:$0xff]
  %v134 = vld [vmem:[%s1 + $0x260] sm:$0xf]
  %v135 = vld [vmem:[%s1 + $0x264] sm:$0xff]
  %v136 = vld [vmem:[%s1 + $0x26c] sm:$0xf]
  %v137 = vld [vmem:[%s1 + $0x270] sm:$0xff]
  %v138 = vld [vmem:[%s1 + $0x278] sm:$0xf]
  %v139 = vld [vmem:[%s1 + $0x27c] sm:$0xff]
  %v140 = vld [vmem:[%s1 + $0x284] sm:$0xf]
  %v141 = vld [vmem:[%s1 + $0x288] sm:$0xff]
  %v142 = vld [vmem:[%s1 + $0x290] sm:$0xf]
  %v143 = vld [vmem:[%s1 + $0x294] sm:$0xff]
  %v144 = vld [vmem:[%s1 + $0x29c] sm:$0xf]
  %v145 = vld [vmem:[%s1 + $0x2a0] sm:$0xff]
  %v146 = vld [vmem:[%s1 + $0x2a8] sm:$0xf]
  %v147 = vld [vmem:[%s1 + $0x2ac] sm:$0xff]
  %v148 = vld [vmem:[%s1 + $0x2b4] sm:$0xf]
  %v149 = vld [vmem:[%s1 + $0x2b8] sm:$0xff]
  %v150 = vld [vmem:[%s1 + $0x2c0] sm:$0xf]
  %v151 = vld [vmem:[%s1 + $0x2c4] sm:$0xff]
  %v152 = vld [vmem:[%s1 + $0x2cc] sm:$0xf]
  %v153 = vld [vmem:[%s1 + $0x2d0] sm:$0xff]
  %v154 = vld [vmem:[%s1 + $0x2d8] sm:$0xf]
  %v155 = vld [vmem:[%s1 + $0x2dc] sm:$0xff]
  %v156 = vld [vmem:[%s1 + $0x2e4] sm:$0xf]
  %v157 = vld [vmem:[%s1 + $0x2e8] sm:$0xff]
  %v158 = vld [vmem:[%s1 + $0x2f0] sm:$0xf]
  %v159 = vld [vmem:[%s1 + $0x2f4] sm:$0xff]
  %v160 = vld [vmem:[%s1 + $0x2fc] sm:$0xf]
  %v161 = vld [vmem:[%s1 + $0x300] sm:$0xff]
  %v162 = vld [vmem:[%s1 + $0x308] sm:$0xf]
  %v163 = vld [vmem:[%s1 + $0x30c] sm:$0xff]
  %v164 = vld [vmem:[%s1 + $0x314] sm:$0xf]
  %v165 = vld [vmem:[%s1 + $0x318] sm:$0xff]
  %v166 = vld [vmem:[%s1 + $0x320] sm:$0xf]
  %v167 = vld [vmem:[%s1 + $0x324] sm:$0xff]
  %v168 = vld [vmem:[%s1 + $0x32c] sm:$0xf]
  %v169 = vld [vmem:[%s1 + $0x330] sm:$0xff]
  %v170 = vld [vmem:[%s1 + $0x338] sm:$0xf]
  %v171 = vld [vmem:[%s1 + $0x33c] sm:$0xff]
  %v172 = vld [vmem:[%s1 + $0x344] sm:$0xf]
  %v173 = vld [vmem:[%s1 + $0x348] sm:$0xff]
  %v174 = vld [vmem:[%s1 + $0x350] sm:$0xf]
  %v175 = vld [vmem:[%s1 + $0x354] sm:$0xff]
  %v176 = vld [vmem:[%s1 + $0x35c] sm:$0xf]
  %v177 = vld [vmem:[%s1 + $0x360] sm:$0xff]
  %v178 = vld [vmem:[%s1 + $0x368] sm:$0xf]
  %v179 = vld [vmem:[%s1 + $0x36c] sm:$0xff]
  %v180 = vld [vmem:[%s1 + $0x374] sm:$0xf]
  %v181 = vld [vmem:[%s1 + $0x378] sm:$0xff]
  %v182 = vld [vmem:[%s1 + $0x380] sm:$0xf]
  %v183 = vld [vmem:[%s1 + $0x384] sm:$0xff]
  %v184 = vld [vmem:[%s1 + $0x38c] sm:$0xf]
  %v185 = vld [vmem:[%s1 + $0x390] sm:$0xff]
  %v186 = vld [vmem:[%s1 + $0x398] sm:$0xf]
  %v187 = vld [vmem:[%s1 + $0x39c] sm:$0xff]
  %v188 = vld [vmem:[%s1 + $0x3a4] sm:$0xf]
  %v189 = vld [vmem:[%s1 + $0x3a8] sm:$0xff]
  %v190 = vld [vmem:[%s1 + $0x3b0] sm:$0xf]
  %v191 = vld [vmem:[%s1 + $0x3b4] sm:$0xff]
  %v192 = vld [vmem:[%s1 + $0x3bc] sm:$0xf]
  %v193 = vld [vmem:[%s1 + $0x3c0] sm:$0xff]
  %v194 = vld [vmem:[%s1 + $0x3c8] sm:$0xf]
  %v195 = vld [vmem:[%s1 + $0x3cc] sm:$0xff]
  %v196 = vld [vmem:[%s1 + $0x3d4] sm:$0xf]
  %v197 = vld [vmem:[%s1 + $0x3d8] sm:$0xff]
  %v198 = vld [vmem:[%s1 + $0x3e0] sm:$0xf]
  %v199 = vld [vmem:[%s1 + $0x3e4] sm:$0xff]
  %v200 = vld [vmem:[%s1 + $0x3ec] sm:$0xf]
  %v201 = vld [vmem:[%s1 + $0x3f0] sm:$0xff]
  %v202 = vld [vmem:[%s1 + $0x3f8] sm:$0xf]
  %v203 = vld [vmem:[%s1 + $0x3fc] sm:$0xff]
  %v204 = vld [vmem:[%s1 + $0x404] sm:$0xf]
  %v205 = vld [vmem:[%s1 + $0x408] sm:$0xff]
  %v206 = vld [vmem:[%s1 + $0x410] sm:$0xf]
  %v207 = vld [vmem:[%s1 + $0x414] sm:$0xff]
  %v208 = vld [vmem:[%s1 + $0x41c] sm:$0xf]
  %v209 = vld [vmem:[%s1 + $0x420] sm:$0xff]
  %v210 = vld [vmem:[%s1 + $0x428] sm:$0xf]
  %v211 = vld [vmem:[%s1 + $0x42c] sm:$0xff]
  %v212 = vld [vmem:[%s1 + $0x434] sm:$0xf]
  %v213 = vld [vmem:[%s1 + $0x438] sm:$0xff]
  %v214 = vld [vmem:[%s1 + $0x440] sm:$0xf]
  %v215 = vld [vmem:[%s1 + $0x444] sm:$0xff]
  %v216 = vld [vmem:[%s1 + $0x44c] sm:$0xf]
  %v217 = vld [vmem:[%s1 + $0x450] sm:$0xff]
  %v218 = vld [vmem:[%s1 + $0x458] sm:$0xf]
  %v219 = vld [vmem:[%s1 + $0x45c] sm:$0xff]
  %v220 = vld [vmem:[%s1 + $0x464] sm:$0xf]
  %v221 = vld [vmem:[%s1 + $0x468] sm:$0xff]
  %v222 = vld [vmem:[%s1 + $0x470] sm:$0xf]
  %v223 = vld [vmem:[%s1 + $0x474] sm:$0xff]
  %v224 = vld [vmem:[%s1 + $0x47c] sm:$0xf]
  %v225 = vld [vmem:[%s1 + $0x480] sm:$0xff]
  %v226 = vld [vmem:[%s1 + $0x488] sm:$0xf]
  %v227 = vld [vmem:[%s1 + $0x48c] sm:$0xff]
  %v228 = vld [vmem:[%s1 + $0x494] sm:$0xf]
  %v229 = vld [vmem:[%s1 + $0x498] sm:$0xff]
  %v230 = vld [vmem:[%s1 + $0x4a0] sm:$0xf]
  %v231 = vld [vmem:[%s1 + $0x4a4] sm:$0xff]
  %v232 = vld [vmem:[%s1 + $0x4ac] sm:$0xf]
  %v233 = vld [vmem:[%s1 + $0x4b0] sm:$0xff]
  %v234 = vld [vmem:[%s1 + $0x4b8] sm:$0xf]
  %v235 = vld [vmem:[%s1 + $0x4bc] sm:$0xff]
  %v236 = vld [vmem:[%s1 + $0x4c4] sm:$0xf]
  %v237 = vld [vmem:[%s1 + $0x4c8] sm:$0xff]
  %v238 = vld [vmem:[%s1 + $0x4d0] sm:$0xf]
  %v239 = vld [vmem:[%s1 + $0x4d4] sm:$0xff]
  %v240 = vld [vmem:[%s1 + $0x4dc] sm:$0xf]
  %v241 = vld [vmem:[%s1 + $0x4e0] sm:$0xff]
  %v242 = vld [vmem:[%s1 + $0x4e8] sm:$0xf]
  %v243 = vld [vmem:[%s1 + $0x4ec] sm:$0xff]
  %v244 = vld [vmem:[%s1 + $0x4f4] sm:$0xf]
  %v245 = vld [vmem:[%s1 + $0x4f8] sm:$0xff]
  %v246 = vld [vmem:[%s1 + $0x500] sm:$0xf]
  %v247 = vld [vmem:[%s1 + $0x504] sm:$0xff]
  %v248 = vld [vmem:[%s1 + $0x50c] sm:$0xf]
  %v249 = vld [vmem:[%s1 + $0x510] sm:$0xff]
  %v250 = vld [vmem:[%s1 + $0x518] sm:$0xf]
  %v251 = vld [vmem:[%s1 + $0x51c] sm:$0xff]
  %v252 = vld [vmem:[%s1 + $0x524] sm:$0xf]
  %v253 = vld [vmem:[%s1 + $0x528] sm:$0xff]
  %v254 = vld [vmem:[%s1 + $0x530] sm:$0xf]
  %v255 = vld [vmem:[%s1 + $0x534] sm:$0xff]
  %v256 = vld [vmem:[%s1 + $0x53c] sm:$0xf]
  %v257 = vld [vmem:[%s1 + $0x540] sm:$0xff]
  %v258 = vld [vmem:[%s1 + $0x548] sm:$0xf]
  %v259 = vld [vmem:[%s1 + $0x54c] sm:$0xff]
  %v260 = vld [vmem:[%s1 + $0x554] sm:$0xf]
  %v261 = vld [vmem:[%s1 + $0x558] sm:$0xff]
  %v262 = vld [vmem:[%s1 + $0x560] sm:$0xf]
  %v263 = vld [vmem:[%s1 + $0x564] sm:$0xff]
  %v264 = vld [vmem:[%s1 + $0x56c] sm:$0xf]
  %v265 = vld [vmem:[%s1 + $0x570] sm:$0xff]
  %v266 = vld [vmem:[%s1 + $0x578] sm:$0xf]
  %v267 = vld [vmem:[%s1 + $0x57c] sm:$0xff]
  %v268 = vld [vmem:[%s1 + $0x584] sm:$0xf]
  %v269 = vld [vmem:[%s1 + $0x588] sm:$0xff]
  %v270 = vld [vmem:[%s1 + $0x590] sm:$0xf]
  %v271 = vld [vmem:[%s1 + $0x594] sm:$0xff]
  %v272 = vld [vmem:[%s1 + $0x59c] sm:$0xf]
  %v273 = vld [vmem:[%s1 + $0x5a0] sm:$0xff]
  %v274 = vld [vmem:[%s1 + $0x5a8] sm:$0xf]
  %v275 = vld [vmem:[%s1 + $0x5ac] sm:$0xff]
  %v276 = vld [vmem:[%s1 + $0x5b4] sm:$0xf]
  %v277 = vld [vmem:[%s1 + $0x5b8] sm:$0xff]
  %v278 = vld [vmem:[%s1 + $0x5c0] sm:$0xf]
  %v279 = vld [vmem:[%s1 + $0x5c4] sm:$0xff]
  %v280 = vld [vmem:[%s1 + $0x5cc] sm:$0xf]
  %v281 = vld [vmem:[%s1 + $0x5d0] sm:$0xff]
  %v282 = vld [vmem:[%s1 + $0x5d8] sm:$0xf]
  %v283 = vld [vmem:[%s1 + $0x5dc] sm:$0xff]
  %v284 = vld [vmem:[%s1 + $0x5e4] sm:$0xf]
  %v285 = vld [vmem:[%s1 + $0x5e8] sm:$0xff]
  %v286 = vld [vmem:[%s1 + $0x5f0] sm:$0xf]
  %v287 = vld [vmem:[%s1 + $0x5f4] sm:$0xff]
  %v288 = vld [vmem:[%s1 + $0x5fc] sm:$0xf]
  %v289 = vld [vmem:[%s1 + $0x600] sm:$0xff]
  %v290 = vld [vmem:[%s1 + $0x608] sm:$0xf]
  %v291 = vld [vmem:[%s1 + $0x60c] sm:$0xff]
  %v292 = vld [vmem:[%s1 + $0x614] sm:$0xf]
  %v293 = vld [vmem:[%s1 + $0x618] sm:$0xff]
  %v294 = vld [vmem:[%s1 + $0x620] sm:$0xf]
  %v295 = vld [vmem:[%s1 + $0x624] sm:$0xff]
  %v296 = vld [vmem:[%s1 + $0x62c] sm:$0xf]
  %v297 = vld [vmem:[%s1 + $0x630] sm:$0xff]
  %v298 = vld [vmem:[%s1 + $0x638] sm:$0xf]
  %v299 = vld [vmem:[%s1 + $0x63c] sm:$0xff]
  %v300 = vld [vmem:[%s1 + $0x644] sm:$0xf]
  %v301 = vld [vmem:[%s1 + $0x648] sm:$0xff]
  %v302 = vld [vmem:[%s1 + $0x650] sm:$0xf]
  %v303 = vld [vmem:[%s1 + $0x654] sm:$0xff]
  %v304 = vld [vmem:[%s1 + $0x65c] sm:$0xf]
  %v305 = vld [vmem:[%s1 + $0x660] sm:$0xff]
  %v306 = vld [vmem:[%s1 + $0x668] sm:$0xf]
  %v307 = vld [vmem:[%s1 + $0x66c] sm:$0xff]
  %v308 = vld [vmem:[%s1 + $0x674] sm:$0xf]
  %v309 = vld [vmem:[%s1 + $0x678] sm:$0xff]
  %v310 = vld [vmem:[%s1 + $0x680] sm:$0xf]
  %v311 = vld [vmem:[%s1 + $0x684] sm:$0xff]
  %v312 = vld [vmem:[%s1 + $0x68c] sm:$0xf]
  %v313 = vld [vmem:[%s1 + $0x690] sm:$0xff]
  %v314 = vld [vmem:[%s1 + $0x698] sm:$0xf]
  %v315 = vld [vmem:[%s1 + $0x69c] sm:$0xff]
  %v316 = vld [vmem:[%s1 + $0x6a4] sm:$0xf]
  %v317 = vld [vmem:[%s1 + $0x6a8] sm:$0xff]
  %v318 = vld [vmem:[%s1 + $0x6b0] sm:$0xf]
  %v319 = vld [vmem:[%s1 + $0x6b4] sm:$0xff]
  %v320 = vld [vmem:[%s1 + $0x6bc] sm:$0xf]
  %v321 = vld [vmem:[%s1 + $0x6c0] sm:$0xff]
  %v322 = vld [vmem:[%s1 + $0x6c8] sm:$0xf]
  %v323 = vld [vmem:[%s1 + $0x6cc] sm:$0xff]
  %v324 = vld [vmem:[%s1 + $0x6d4] sm:$0xf]
  %v325 = vld [vmem:[%s1 + $0x6d8] sm:$0xff]
  %v326 = vld [vmem:[%s1 + $0x6e0] sm:$0xf]
  %v327 = vld [vmem:[%s1 + $0x6e4] sm:$0xff]
  %v328 = vld [vmem:[%s1 + $0x6ec] sm:$0xf]
  %v329 = vld [vmem:[%s1 + $0x6f0] sm:$0xff]
  %v330 = vld [vmem:[%s1 + $0x6f8] sm:$0xf]
  %v331 = vld [vmem:[%s1 + $0x6fc] sm:$0xff]
  %v332 = vld [vmem:[%s1 + $0x704] sm:$0xf]
  %v333 = vld [vmem:[%s1 + $0x708] sm:$0xff]
  %v334 = vld [vmem:[%s1 + $0x710] sm:$0xf]
  %v335 = vld [vmem:[%s1 + $0x714] sm:$0xff]
  %v336 = vld [vmem:[%s1 + $0x71c] sm:$0xf]
  %v337 = vld [vmem:[%s1 + $0x720] sm:$0xff]
  %v338 = vld [vmem:[%s1 + $0x728] sm:$0xf]
  %v339 = vld [vmem:[%s1 + $0x72c] sm:$0xff]
  %v340 = vld [vmem:[%s1 + $0x734] sm:$0xf]
  %v341 = vld [vmem:[%s1 + $0x738] sm:$0xff]
  %v342 = vld [vmem:[%s1 + $0x740] sm:$0xf]
  %v343 = vld [vmem:[%s1 + $0x744] sm:$0xff]
  %v344 = vld [vmem:[%s1 + $0x74c] sm:$0xf]
  %v345 = vld [vmem:[%s1 + $0x750] sm:$0xff]
  %v346 = vld [vmem:[%s1 + $0x758] sm:$0xf]
  %v347 = vld [vmem:[%s1 + $0x75c] sm:$0xff]
  %v348 = vld [vmem:[%s1 + $0x764] sm:$0xf]
  %v349 = vld [vmem:[%s1 + $0x768] sm:$0xff]
  %v350 = vld [vmem:[%s1 + $0x770] sm:$0xf]
  %v351 = vld [vmem:[%s1 + $0x774] sm:$0xff]
  %v352 = vld [vmem:[%s1 + $0x77c] sm:$0xf]
  %v353 = vld [vmem:[%s1 + $0x780] sm:$0xff]
  %v354 = vld [vmem:[%s1 + $0x788] sm:$0xf]
  %v355 = vld [vmem:[%s1 + $0x78c] sm:$0xff]
  %v356 = vld [vmem:[%s1 + $0x794] sm:$0xf]
  %v357 = vld [vmem:[%s1 + $0x798] sm:$0xff]
  %v358 = vld [vmem:[%s1 + $0x7a0] sm:$0xf]
  %v359 = vld [vmem:[%s1 + $0x7a4] sm:$0xff]
  %v360 = vld [vmem:[%s1 + $0x7ac] sm:$0xf]
  %v361 = vld [vmem:[%s1 + $0x7b0] sm:$0xff]
  %v362 = vld [vmem:[%s1 + $0x7b8] sm:$0xf]
  %v363 = vld [vmem:[%s1 + $0x7bc] sm:$0xff]
  %v364 = vld [vmem:[%s1 + $0x7c4] sm:$0xf]
  %v365 = vld [vmem:[%s1 + $0x7c8] sm:$0xff]
  %v366 = vld [vmem:[%s1 + $0x7d0] sm:$0xf]
  %v367 = vld [vmem:[%s1 + $0x7d4] sm:$0xff]
  %v368 = vld [vmem:[%s1 + $0x7dc] sm:$0xf]
  %v369 = vld [vmem:[%s1 + $0x7e0] sm:$0xff]
  %v370 = vld [vmem:[%s1 + $0x7e8] sm:$0xf]
  %v371 = vld [vmem:[%s1 + $0x7ec] sm:$0xff]
  %v372 = vld [vmem:[%s1 + $0x7f4] sm:$0xf]
  %v373 = vld [vmem:[%s1 + $0x7f8] sm:$0xff]
  %v374 = vld [vmem:[%s1 + $0x800] sm:$0xf]
  %v375 = vld [vmem:[%s1 + $0x804] sm:$0xff]
  %v376 = vld [vmem:[%s1 + $0x80c] sm:$0xf]
  %v377 = vld [vmem:[%s1 + $0x810] sm:$0xff]
  %v378 = vld [vmem:[%s1 + $0x818] sm:$0xf]
  %v379 = vld [vmem:[%s1 + $0x81c] sm:$0xff]
  %v380 = vld [vmem:[%s1 + $0x824] sm:$0xf]
  %v381 = vld [vmem:[%s1 + $0x828] sm:$0xff]
  %v382 = vld [vmem:[%s1 + $0x830] sm:$0xf]
  %v383 = vld [vmem:[%s1 + $0x834] sm:$0xff]
  %v384 = vld [vmem:[%s1 + $0x83c] sm:$0xf]
  %v385 = vld [vmem:[%s1 + $0x840] sm:$0xff]
  %v386 = vld [vmem:[%s1 + $0x848] sm:$0xf]
  %v387 = vld [vmem:[%s1 + $0x84c] sm:$0xff]
  %v388 = vld [vmem:[%s1 + $0x854] sm:$0xf]
  %v389 = vld [vmem:[%s1 + $0x858] sm:$0xff]
  %v390 = vld [vmem:[%s1 + $0x860] sm:$0xf]
  %v391 = vld [vmem:[%s1 + $0x864] sm:$0xff]
  %v392 = vld [vmem:[%s1 + $0x86c] sm:$0xf]
  %v393 = vld [vmem:[%s1 + $0x870] sm:$0xff]
  %v394 = vld [vmem:[%s1 + $0x878] sm:$0xf]
  %v395 = vld [vmem:[%s1 + $0x87c] sm:$0xff]
  %v396 = vld [vmem:[%s1 + $0x884] sm:$0xf]
  %v397 = vld [vmem:[%s1 + $0x888] sm:$0xff]
  %v398 = vld [vmem:[%s1 + $0x890] sm:$0xf]
  %v399 = vld [vmem:[%s1 + $0x894] sm:$0xff]
  %v400 = vld [vmem:[%s1 + $0x89c] sm:$0xf]
  %v401 = vld [vmem:[%s1 + $0x8a0] sm:$0xff]
  %v402 = vld [vmem:[%s1 + $0x8a8] sm:$0xf]
  %v403 = vld [vmem:[%s1 + $0x8ac] sm:$0xff]
  %v404 = vld [vmem:[%s1 + $0x8b4] sm:$0xf]
  %v405 = vld [vmem:[%s1 + $0x8b8] sm:$0xff]
  %v406 = vld [vmem:[%s1 + $0x8c0] sm:$0xf]
  %v407 = vld [vmem:[%s1 + $0x8c4] sm:$0xff]
  %v408 = vld [vmem:[%s1 + $0x8cc] sm:$0xf]
  %v409 = vld [vmem:[%s1 + $0x8d0] sm:$0xff]
  %v410 = vld [vmem:[%s1 + $0x8d8] sm:$0xf]
  %v411 = vld [vmem:[%s1 + $0x8dc] sm:$0xff]
  %v412 = vld [vmem:[%s1 + $0x8e4] sm:$0xf]
  %v413 = vld [vmem:[%s1 + $0x8e8] sm:$0xff]
  %v414 = vld [vmem:[%s1 + $0x8f0] sm:$0xf]
  %v415 = vld [vmem:[%s1 + $0x8f4] sm:$0xff]
  %v416 = vld [vmem:[%s1 + $0x8fc] sm:$0xf]
  %v417 = vld [vmem:[%s2] sm:$0x7]
  %v419 = vlaneseq
  %v420 = vshrl.u32 %v419, 7
  %v421 = vsub.s32 0, %v420
  %v422 = vrot.slane %v417, %v421
  %v423 = vlaneseq
  %v424 = vshrl.u32 %v423, 7
  %v425 = vsub.s32 1, %v424
  %v426 = vrot.slane %v417, %v425
  %v427 = vlaneseq
  %v428 = vshrl.u32 %v427, 7
  %v429 = vsub.s32 2, %v428
  %v430 = vrot.slane %v417, %v429
  %v440 = vunpack.c.l.b16 %v27
  %v441 = vunpack.c.h.b16 %v27
  %v442 = vunpack.c.l.b16 %v28
  %v443 = vunpack.c.h.b16 %v28
  %v444 = vunpack.c.l.b16 %v29
  %v445 = vunpack.c.h.b16 %v29
  %v446 = vunpack.c.l.b16 %v30
  %v447 = vunpack.c.h.b16 %v30
  %v448 = vunpack.c.l.b16 %v31
  %v449 = vunpack.c.h.b16 %v31
  %v450 = vunpack.c.l.b16 %v32
  %v451 = vunpack.c.h.b16 %v32
  %v452 = vpack.c.b16 %v440, %v440
  %v453 = vpack.c.b16 %v441, %v441
  %v454 = vpack.c.b16 %v442, %v442
  %v455 = vpack.c.b16 %v443, %v443
  %v456 = vpack.c.b16 %v444, %v444
  %v457 = vpack.c.b16 %v445, %v445
  %v458 = vpack.c.b16 %v446, %v446
  %v459 = vpack.c.b16 %v447, %v447
  %v460 = vpack.c.b16 %v448, %v448
  %v461 = vpack.c.b16 %v449, %v449
  %v462 = vpack.c.b16 %v450, %v450
  %v463 = vpack.c.b16 %v451, %v451
  %v860 = vunpack.c.l.b16 %v33
  %v861 = vunpack.c.h.b16 %v33
  %v862 = vunpack.c.l.b16 %v34
  %v863 = vunpack.c.l.b16 %v35
  %v864 = vunpack.c.h.b16 %v35
  %v865 = vunpack.c.l.b16 %v36
  %v866 = vunpack.c.l.b16 %v37
  %v867 = vunpack.c.h.b16 %v37
  %v868 = vunpack.c.l.b16 %v38
  %v869 = vunpack.c.l.b16 %v39
  %v870 = vunpack.c.h.b16 %v39
  %v871 = vunpack.c.l.b16 %v40
  %v872 = vunpack.c.l.b16 %v41
  %v873 = vunpack.c.h.b16 %v41
  %v874 = vunpack.c.l.b16 %v42
  %v875 = vunpack.c.l.b16 %v43
  %v876 = vunpack.c.h.b16 %v43
  %v877 = vunpack.c.l.b16 %v44
  %v878 = vunpack.c.l.b16 %v45
  %v879 = vunpack.c.h.b16 %v45
  %v880 = vunpack.c.l.b16 %v46
  %v881 = vunpack.c.l.b16 %v47
  %v882 = vunpack.c.h.b16 %v47
  %v883 = vunpack.c.l.b16 %v48
  %v884 = vunpack.c.l.b16 %v49
  %v885 = vunpack.c.h.b16 %v49
  %v886 = vunpack.c.l.b16 %v50
  %v887 = vunpack.c.l.b16 %v51
  %v888 = vunpack.c.h.b16 %v51
  %v889 = vunpack.c.l.b16 %v52
  %v890 = vunpack.c.l.b16 %v53
  %v891 = vunpack.c.h.b16 %v53
  %v892 = vunpack.c.l.b16 %v54
  %v893 = vunpack.c.l.b16 %v55
  %v894 = vunpack.c.h.b16 %v55
  %v895 = vunpack.c.l.b16 %v56
  %v896 = vunpack.c.l.b16 %v57
  %v897 = vunpack.c.h.b16 %v57
  %v898 = vunpack.c.l.b16 %v58
  %v899 = vunpack.c.l.b16 %v59
  %v900 = vunpack.c.h.b16 %v59
  %v901 = vunpack.c.l.b16 %v60
  %v902 = vunpack.c.l.b16 %v61
  %v903 = vunpack.c.h.b16 %v61
  %v904 = vunpack.c.l.b16 %v62
  %v905 = vunpack.c.l.b16 %v63
  %v906 = vunpack.c.h.b16 %v63
  %v907 = vunpack.c.l.b16 %v64
  %v908 = vunpack.c.l.b16 %v65
  %v909 = vunpack.c.h.b16 %v65
  %v910 = vunpack.c.l.b16 %v66
  %v911 = vunpack.c.l.b16 %v67
  %v912 = vunpack.c.h.b16 %v67
  %v913 = vunpack.c.l.b16 %v68
  %v914 = vunpack.c.l.b16 %v69
  %v915 = vunpack.c.h.b16 %v69
  %v916 = vunpack.c.l.b16 %v70
  %v917 = vunpack.c.l.b16 %v71
  %v918 = vunpack.c.h.b16 %v71
  %v919 = vunpack.c.l.b16 %v72
  %v920 = vunpack.c.l.b16 %v73
  %v921 = vunpack.c.h.b16 %v73
  %v922 = vunpack.c.l.b16 %v74
  %v923 = vunpack.c.l.b16 %v75
  %v924 = vunpack.c.h.b16 %v75
  %v925 = vunpack.c.l.b16 %v76
  %v926 = vunpack.c.l.b16 %v77
  %v927 = vunpack.c.h.b16 %v77
  %v928 = vunpack.c.l.b16 %v78
  %v929 = vunpack.c.l.b16 %v79
  %v930 = vunpack.c.h.b16 %v79
  %v931 = vunpack.c.l.b16 %v80
  %v932 = vunpack.c.l.b16 %v81
  %v933 = vunpack.c.h.b16 %v81
  %v934 = vunpack.c.l.b16 %v82
  %v935 = vunpack.c.l.b16 %v83
  %v936 = vunpack.c.h.b16 %v83
  %v937 = vunpack.c.l.b16 %v84
  %v938 = vunpack.c.l.b16 %v85
  %v939 = vunpack.c.h.b16 %v85
  %v940 = vunpack.c.l.b16 %v86
  %v941 = vunpack.c.l.b16 %v87
  %v942 = vunpack.c.h.b16 %v87
  %v943 = vunpack.c.l.b16 %v88
  %v944 = vunpack.c.l.b16 %v89
  %v945 = vunpack.c.h.b16 %v89
  %v946 = vunpack.c.l.b16 %v90
  %v947 = vunpack.c.l.b16 %v91
  %v948 = vunpack.c.h.b16 %v91
  %v949 = vunpack.c.l.b16 %v92
  %v950 = vunpack.c.l.b16 %v93
  %v951 = vunpack.c.h.b16 %v93
  %v952 = vunpack.c.l.b16 %v94
  %v953 = vunpack.c.l.b16 %v95
  %v954 = vunpack.c.h.b16 %v95
  %v955 = vunpack.c.l.b16 %v96
  %v956 = vunpack.c.l.b16 %v97
  %v957 = vunpack.c.h.b16 %v97
  %v958 = vunpack.c.l.b16 %v98
  %v959 = vunpack.c.l.b16 %v99
  %v960 = vunpack.c.h.b16 %v99
  %v961 = vunpack.c.l.b16 %v100
  %v962 = vunpack.c.l.b16 %v101
  %v963 = vunpack.c.h.b16 %v101
  %v964 = vunpack.c.l.b16 %v102
  %v965 = vunpack.c.l.b16 %v103
  %v966 = vunpack.c.h.b16 %v103
  %v967 = vunpack.c.l.b16 %v104
  %v968 = vunpack.c.l.b16 %v105
  %v969 = vunpack.c.h.b16 %v105
  %v970 = vunpack.c.l.b16 %v106
  %v971 = vunpack.c.l.b16 %v107
  %v972 = vunpack.c.h.b16 %v107
  %v973 = vunpack.c.l.b16 %v108
  %v974 = vunpack.c.l.b16 %v109
  %v975 = vunpack.c.h.b16 %v109
  %v976 = vunpack.c.l.b16 %v110
  %v977 = vunpack.c.l.b16 %v111
  %v978 = vunpack.c.h.b16 %v111
  %v979 = vunpack.c.l.b16 %v112
  %v980 = vunpack.c.l.b16 %v113
  %v981 = vunpack.c.h.b16 %v113
  %v982 = vunpack.c.l.b16 %v114
  %v983 = vunpack.c.l.b16 %v115
  %v984 = vunpack.c.h.b16 %v115
  %v985 = vunpack.c.l.b16 %v116
  %v986 = vunpack.c.l.b16 %v117
  %v987 = vunpack.c.h.b16 %v117
  %v988 = vunpack.c.l.b16 %v118
  %v989 = vunpack.c.l.b16 %v119
  %v990 = vunpack.c.h.b16 %v119
  %v991 = vunpack.c.l.b16 %v120
  %v992 = vunpack.c.l.b16 %v121
  %v993 = vunpack.c.h.b16 %v121
  %v994 = vunpack.c.l.b16 %v122
  %v995 = vunpack.c.l.b16 %v123
  %v996 = vunpack.c.h.b16 %v123
  %v997 = vunpack.c.l.b16 %v124
  %v998 = vunpack.c.l.b16 %v125
  %v999 = vunpack.c.h.b16 %v125
  %v1000 = vunpack.c.l.b16 %v126
  %v1001 = vunpack.c.l.b16 %v127
  %v1002 = vunpack.c.h.b16 %v127
  %v1003 = vunpack.c.l.b16 %v128
  %v1004 = vunpack.c.l.b16 %v129
  %v1005 = vunpack.c.h.b16 %v129
  %v1006 = vunpack.c.l.b16 %v130
  %v1007 = vunpack.c.l.b16 %v131
  %v1008 = vunpack.c.h.b16 %v131
  %v1009 = vunpack.c.l.b16 %v132
  %v1010 = vunpack.c.l.b16 %v133
  %v1011 = vunpack.c.h.b16 %v133
  %v1012 = vunpack.c.l.b16 %v134
  %v1013 = vunpack.c.l.b16 %v135
  %v1014 = vunpack.c.h.b16 %v135
  %v1015 = vunpack.c.l.b16 %v136
  %v1016 = vunpack.c.l.b16 %v137
  %v1017 = vunpack.c.h.b16 %v137
  %v1018 = vunpack.c.l.b16 %v138
  %v1019 = vunpack.c.l.b16 %v139
  %v1020 = vunpack.c.h.b16 %v139
  %v1021 = vunpack.c.l.b16 %v140
  %v1022 = vunpack.c.l.b16 %v141
  %v1023 = vunpack.c.h.b16 %v141
  %v1024 = vunpack.c.l.b16 %v142
  %v1025 = vunpack.c.l.b16 %v143
  %v1026 = vunpack.c.h.b16 %v143
  %v1027 = vunpack.c.l.b16 %v144
  %v1028 = vunpack.c.l.b16 %v145
  %v1029 = vunpack.c.h.b16 %v145
  %v1030 = vunpack.c.l.b16 %v146
  %v1031 = vunpack.c.l.b16 %v147
  %v1032 = vunpack.c.h.b16 %v147
  %v1033 = vunpack.c.l.b16 %v148
  %v1034 = vunpack.c.l.b16 %v149
  %v1035 = vunpack.c.h.b16 %v149
  %v1036 = vunpack.c.l.b16 %v150
  %v1037 = vunpack.c.l.b16 %v151
  %v1038 = vunpack.c.h.b16 %v151
  %v1039 = vunpack.c.l.b16 %v152
  %v1040 = vunpack.c.l.b16 %v153
  %v1041 = vunpack.c.h.b16 %v153
  %v1042 = vunpack.c.l.b16 %v154
  %v1043 = vunpack.c.l.b16 %v155
  %v1044 = vunpack.c.h.b16 %v155
  %v1045 = vunpack.c.l.b16 %v156
  %v1046 = vunpack.c.l.b16 %v157
  %v1047 = vunpack.c.h.b16 %v157
  %v1048 = vunpack.c.l.b16 %v158
  %v1049 = vunpack.c.l.b16 %v159
  %v1050 = vunpack.c.h.b16 %v159
  %v1051 = vunpack.c.l.b16 %v160
  %v1052 = vunpack.c.l.b16 %v161
  %v1053 = vunpack.c.h.b16 %v161
  %v1054 = vunpack.c.l.b16 %v162
  %v1055 = vunpack.c.l.b16 %v163
  %v1056 = vunpack.c.h.b16 %v163
  %v1057 = vunpack.c.l.b16 %v164
  %v1058 = vunpack.c.l.b16 %v165
  %v1059 = vunpack.c.h.b16 %v165
  %v1060 = vunpack.c.l.b16 %v166
  %v1061 = vunpack.c.l.b16 %v167
  %v1062 = vunpack.c.h.b16 %v167
  %v1063 = vunpack.c.l.b16 %v168
  %v1064 = vunpack.c.l.b16 %v169
  %v1065 = vunpack.c.h.b16 %v169
  %v1066 = vunpack.c.l.b16 %v170
  %v1067 = vunpack.c.l.b16 %v171
  %v1068 = vunpack.c.h.b16 %v171
  %v1069 = vunpack.c.l.b16 %v172
  %v1070 = vunpack.c.l.b16 %v173
  %v1071 = vunpack.c.h.b16 %v173
  %v1072 = vunpack.c.l.b16 %v174
  %v1073 = vunpack.c.l.b16 %v175
  %v1074 = vunpack.c.h.b16 %v175
  %v1075 = vunpack.c.l.b16 %v176
  %v1076 = vunpack.c.l.b16 %v177
  %v1077 = vunpack.c.h.b16 %v177
  %v1078 = vunpack.c.l.b16 %v178
  %v1079 = vunpack.c.l.b16 %v179
  %v1080 = vunpack.c.h.b16 %v179
  %v1081 = vunpack.c.l.b16 %v180
  %v1082 = vunpack.c.l.b16 %v181
  %v1083 = vunpack.c.h.b16 %v181
  %v1084 = vunpack.c.l.b16 %v182
  %v1085 = vunpack.c.l.b16 %v183
  %v1086 = vunpack.c.h.b16 %v183
  %v1087 = vunpack.c.l.b16 %v184
  %v1088 = vunpack.c.l.b16 %v185
  %v1089 = vunpack.c.h.b16 %v185
  %v1090 = vunpack.c.l.b16 %v186
  %v1091 = vunpack.c.l.b16 %v187
  %v1092 = vunpack.c.h.b16 %v187
  %v1093 = vunpack.c.l.b16 %v188
  %v1094 = vunpack.c.l.b16 %v189
  %v1095 = vunpack.c.h.b16 %v189
  %v1096 = vunpack.c.l.b16 %v190
  %v1097 = vunpack.c.l.b16 %v191
  %v1098 = vunpack.c.h.b16 %v191
  %v1099 = vunpack.c.l.b16 %v192
  %v1100 = vunpack.c.l.b16 %v193
  %v1101 = vunpack.c.h.b16 %v193
  %v1102 = vunpack.c.l.b16 %v194
  %v1103 = vunpack.c.l.b16 %v195
  %v1104 = vunpack.c.h.b16 %v195
  %v1105 = vunpack.c.l.b16 %v196
  %v1106 = vunpack.c.l.b16 %v197
  %v1107 = vunpack.c.h.b16 %v197
  %v1108 = vunpack.c.l.b16 %v198
  %v1109 = vunpack.c.l.b16 %v199
  %v1110 = vunpack.c.h.b16 %v199
  %v1111 = vunpack.c.l.b16 %v200
  %v1112 = vunpack.c.l.b16 %v201
  %v1113 = vunpack.c.h.b16 %v201
  %v1114 = vunpack.c.l.b16 %v202
  %v1115 = vunpack.c.l.b16 %v203
  %v1116 = vunpack.c.h.b16 %v203
  %v1117 = vunpack.c.l.b16 %v204
  %v1118 = vunpack.c.l.b16 %v205
  %v1119 = vunpack.c.h.b16 %v205
  %v1120 = vunpack.c.l.b16 %v206
  %v1121 = vunpack.c.l.b16 %v207
  %v1122 = vunpack.c.h.b16 %v207
  %v1123 = vunpack.c.l.b16 %v208
  %v1124 = vunpack.c.l.b16 %v209
  %v1125 = vunpack.c.h.b16 %v209
  %v1126 = vunpack.c.l.b16 %v210
  %v1127 = vunpack.c.l.b16 %v211
  %v1128 = vunpack.c.h.b16 %v211
  %v1129 = vunpack.c.l.b16 %v212
  %v1130 = vunpack.c.l.b16 %v213
  %v1131 = vunpack.c.h.b16 %v213
  %v1132 = vunpack.c.l.b16 %v214
  %v1133 = vunpack.c.l.b16 %v215
  %v1134 = vunpack.c.h.b16 %v215
  %v1135 = vunpack.c.l.b16 %v216
  %v1136 = vunpack.c.l.b16 %v217
  %v1137 = vunpack.c.h.b16 %v217
  %v1138 = vunpack.c.l.b16 %v218
  %v1139 = vunpack.c.l.b16 %v219
  %v1140 = vunpack.c.h.b16 %v219
  %v1141 = vunpack.c.l.b16 %v220
  %v1142 = vunpack.c.l.b16 %v221
  %v1143 = vunpack.c.h.b16 %v221
  %v1144 = vunpack.c.l.b16 %v222
  %v1145 = vunpack.c.l.b16 %v223
  %v1146 = vunpack.c.h.b16 %v223
  %v1147 = vunpack.c.l.b16 %v224
  %v1148 = vunpack.c.l.b16 %v225
  %v1149 = vunpack.c.h.b16 %v225
  %v1150 = vunpack.c.l.b16 %v226
  %v1151 = vunpack.c.l.b16 %v227
  %v1152 = vunpack.c.h.b16 %v227
  %v1153 = vunpack.c.l.b16 %v228
  %v1154 = vunpack.c.l.b16 %v229
  %v1155 = vunpack.c.h.b16 %v229
  %v1156 = vunpack.c.l.b16 %v230
  %v1157 = vunpack.c.l.b16 %v231
  %v1158 = vunpack.c.h.b16 %v231
  %v1159 = vunpack.c.l.b16 %v232
  %v1160 = vunpack.c.l.b16 %v233
  %v1161 = vunpack.c.h.b16 %v233
  %v1162 = vunpack.c.l.b16 %v234
  %v1163 = vunpack.c.l.b16 %v235
  %v1164 = vunpack.c.h.b16 %v235
  %v1165 = vunpack.c.l.b16 %v236
  %v1166 = vunpack.c.l.b16 %v237
  %v1167 = vunpack.c.h.b16 %v237
  %v1168 = vunpack.c.l.b16 %v238
  %v1169 = vunpack.c.l.b16 %v239
  %v1170 = vunpack.c.h.b16 %v239
  %v1171 = vunpack.c.l.b16 %v240
  %v1172 = vunpack.c.l.b16 %v241
  %v1173 = vunpack.c.h.b16 %v241
  %v1174 = vunpack.c.l.b16 %v242
  %v1175 = vunpack.c.l.b16 %v243
  %v1176 = vunpack.c.h.b16 %v243
  %v1177 = vunpack.c.l.b16 %v244
  %v1178 = vunpack.c.l.b16 %v245
  %v1179 = vunpack.c.h.b16 %v245
  %v1180 = vunpack.c.l.b16 %v246
  %v1181 = vunpack.c.l.b16 %v247
  %v1182 = vunpack.c.h.b16 %v247
  %v1183 = vunpack.c.l.b16 %v248
  %v1184 = vunpack.c.l.b16 %v249
  %v1185 = vunpack.c.h.b16 %v249
  %v1186 = vunpack.c.l.b16 %v250
  %v1187 = vunpack.c.l.b16 %v251
  %v1188 = vunpack.c.h.b16 %v251
  %v1189 = vunpack.c.l.b16 %v252
  %v1190 = vunpack.c.l.b16 %v253
  %v1191 = vunpack.c.h.b16 %v253
  %v1192 = vunpack.c.l.b16 %v254
  %v1193 = vunpack.c.l.b16 %v255
  %v1194 = vunpack.c.h.b16 %v255
  %v1195 = vunpack.c.l.b16 %v256
  %v1196 = vunpack.c.l.b16 %v257
  %v1197 = vunpack.c.h.b16 %v257
  %v1198 = vunpack.c.l.b16 %v258
  %v1199 = vunpack.c.l.b16 %v259
  %v1200 = vunpack.c.h.b16 %v259
  %v1201 = vunpack.c.l.b16 %v260
  %v1202 = vunpack.c.l.b16 %v261
  %v1203 = vunpack.c.h.b16 %v261
  %v1204 = vunpack.c.l.b16 %v262
  %v1205 = vunpack.c.l.b16 %v263
  %v1206 = vunpack.c.h.b16 %v263
  %v1207 = vunpack.c.l.b16 %v264
  %v1208 = vunpack.c.l.b16 %v265
  %v1209 = vunpack.c.h.b16 %v265
  %v1210 = vunpack.c.l.b16 %v266
  %v1211 = vunpack.c.l.b16 %v267
  %v1212 = vunpack.c.h.b16 %v267
  %v1213 = vunpack.c.l.b16 %v268
  %v1214 = vunpack.c.l.b16 %v269
  %v1215 = vunpack.c.h.b16 %v269
  %v1216 = vunpack.c.l.b16 %v270
  %v1217 = vunpack.c.l.b16 %v271
  %v1218 = vunpack.c.h.b16 %v271
  %v1219 = vunpack.c.l.b16 %v272
  %v1220 = vunpack.c.l.b16 %v273
  %v1221 = vunpack.c.h.b16 %v273
  %v1222 = vunpack.c.l.b16 %v274
  %v1223 = vunpack.c.l.b16 %v275
  %v1224 = vunpack.c.h.b16 %v275
  %v1225 = vunpack.c.l.b16 %v276
  %v1226 = vunpack.c.l.b16 %v277
  %v1227 = vunpack.c.h.b16 %v277
  %v1228 = vunpack.c.l.b16 %v278
  %v1229 = vunpack.c.l.b16 %v279
  %v1230 = vunpack.c.h.b16 %v279
  %v1231 = vunpack.c.l.b16 %v280
  %v1232 = vunpack.c.l.b16 %v281
  %v1233 = vunpack.c.h.b16 %v281
  %v1234 = vunpack.c.l.b16 %v282
  %v1235 = vunpack.c.l.b16 %v283
  %v1236 = vunpack.c.h.b16 %v283
  %v1237 = vunpack.c.l.b16 %v284
  %v1238 = vunpack.c.l.b16 %v285
  %v1239 = vunpack.c.h.b16 %v285
  %v1240 = vunpack.c.l.b16 %v286
  %v1241 = vunpack.c.l.b16 %v287
  %v1242 = vunpack.c.h.b16 %v287
  %v1243 = vunpack.c.l.b16 %v288
  %v1244 = vunpack.c.l.b16 %v289
  %v1245 = vunpack.c.h.b16 %v289
  %v1246 = vunpack.c.l.b16 %v290
  %v1247 = vunpack.c.l.b16 %v291
  %v1248 = vunpack.c.h.b16 %v291
  %v1249 = vunpack.c.l.b16 %v292
  %v1250 = vunpack.c.l.b16 %v293
  %v1251 = vunpack.c.h.b16 %v293
  %v1252 = vunpack.c.l.b16 %v294
  %v1253 = vunpack.c.l.b16 %v295
  %v1254 = vunpack.c.h.b16 %v295
  %v1255 = vunpack.c.l.b16 %v296
  %v1256 = vunpack.c.l.b16 %v297
  %v1257 = vunpack.c.h.b16 %v297
  %v1258 = vunpack.c.l.b16 %v298
  %v1259 = vunpack.c.l.b16 %v299
  %v1260 = vunpack.c.h.b16 %v299
  %v1261 = vunpack.c.l.b16 %v300
  %v1262 = vunpack.c.l.b16 %v301
  %v1263 = vunpack.c.h.b16 %v301
  %v1264 = vunpack.c.l.b16 %v302
  %v1265 = vunpack.c.l.b16 %v303
  %v1266 = vunpack.c.h.b16 %v303
  %v1267 = vunpack.c.l.b16 %v304
  %v1268 = vunpack.c.l.b16 %v305
  %v1269 = vunpack.c.h.b16 %v305
  %v1270 = vunpack.c.l.b16 %v306
  %v1271 = vunpack.c.l.b16 %v307
  %v1272 = vunpack.c.h.b16 %v307
  %v1273 = vunpack.c.l.b16 %v308
  %v1274 = vunpack.c.l.b16 %v309
  %v1275 = vunpack.c.h.b16 %v309
  %v1276 = vunpack.c.l.b16 %v310
  %v1277 = vunpack.c.l.b16 %v311
  %v1278 = vunpack.c.h.b16 %v311
  %v1279 = vunpack.c.l.b16 %v312
  %v1280 = vunpack.c.l.b16 %v313
  %v1281 = vunpack.c.h.b16 %v313
  %v1282 = vunpack.c.l.b16 %v314
  %v1283 = vunpack.c.l.b16 %v315
  %v1284 = vunpack.c.h.b16 %v315
  %v1285 = vunpack.c.l.b16 %v316
  %v1286 = vunpack.c.l.b16 %v317
  %v1287 = vunpack.c.h.b16 %v317
  %v1288 = vunpack.c.l.b16 %v318
  %v1289 = vunpack.c.l.b16 %v319
  %v1290 = vunpack.c.h.b16 %v319
  %v1291 = vunpack.c.l.b16 %v320
  %v1292 = vunpack.c.l.b16 %v321
  %v1293 = vunpack.c.h.b16 %v321
  %v1294 = vunpack.c.l.b16 %v322
  %v1295 = vunpack.c.l.b16 %v323
  %v1296 = vunpack.c.h.b16 %v323
  %v1297 = vunpack.c.l.b16 %v324
  %v1298 = vunpack.c.l.b16 %v325
  %v1299 = vunpack.c.h.b16 %v325
  %v1300 = vunpack.c.l.b16 %v326
  %v1301 = vunpack.c.l.b16 %v327
  %v1302 = vunpack.c.h.b16 %v327
  %v1303 = vunpack.c.l.b16 %v328
  %v1304 = vunpack.c.l.b16 %v329
  %v1305 = vunpack.c.h.b16 %v329
  %v1306 = vunpack.c.l.b16 %v330
  %v1307 = vunpack.c.l.b16 %v331
  %v1308 = vunpack.c.h.b16 %v331
  %v1309 = vunpack.c.l.b16 %v332
  %v1310 = vunpack.c.l.b16 %v333
  %v1311 = vunpack.c.h.b16 %v333
  %v1312 = vunpack.c.l.b16 %v334
  %v1313 = vunpack.c.l.b16 %v335
  %v1314 = vunpack.c.h.b16 %v335
  %v1315 = vunpack.c.l.b16 %v336
  %v1316 = vunpack.c.l.b16 %v337
  %v1317 = vunpack.c.h.b16 %v337
  %v1318 = vunpack.c.l.b16 %v338
  %v1319 = vunpack.c.l.b16 %v339
  %v1320 = vunpack.c.h.b16 %v339
  %v1321 = vunpack.c.l.b16 %v340
  %v1322 = vunpack.c.l.b16 %v341
  %v1323 = vunpack.c.h.b16 %v341
  %v1324 = vunpack.c.l.b16 %v342
  %v1325 = vunpack.c.l.b16 %v343
  %v1326 = vunpack.c.h.b16 %v343
  %v1327 = vunpack.c.l.b16 %v344
  %v1328 = vunpack.c.l.b16 %v345
  %v1329 = vunpack.c.h.b16 %v345
  %v1330 = vunpack.c.l.b16 %v346
  %v1331 = vunpack.c.l.b16 %v347
  %v1332 = vunpack.c.h.b16 %v347
  %v1333 = vunpack.c.l.b16 %v348
  %v1334 = vunpack.c.l.b16 %v349
  %v1335 = vunpack.c.h.b16 %v349
  %v1336 = vunpack.c.l.b16 %v350
  %v1337 = vunpack.c.l.b16 %v351
  %v1338 = vunpack.c.h.b16 %v351
  %v1339 = vunpack.c.l.b16 %v352
  %v1340 = vunpack.c.l.b16 %v353
  %v1341 = vunpack.c.h.b16 %v353
  %v1342 = vunpack.c.l.b16 %v354
  %v1343 = vunpack.c.l.b16 %v355
  %v1344 = vunpack.c.h.b16 %v355
  %v1345 = vunpack.c.l.b16 %v356
  %v1346 = vunpack.c.l.b16 %v357
  %v1347 = vunpack.c.h.b16 %v357
  %v1348 = vunpack.c.l.b16 %v358
  %v1349 = vunpack.c.l.b16 %v359
  %v1350 = vunpack.c.h.b16 %v359
  %v1351 = vunpack.c.l.b16 %v360
  %v1352 = vunpack.c.l.b16 %v361
  %v1353 = vunpack.c.h.b16 %v361
  %v1354 = vunpack.c.l.b16 %v362
  %v1355 = vunpack.c.l.b16 %v363
  %v1356 = vunpack.c.h.b16 %v363
  %v1357 = vunpack.c.l.b16 %v364
  %v1358 = vunpack.c.l.b16 %v365
  %v1359 = vunpack.c.h.b16 %v365
  %v1360 = vunpack.c.l.b16 %v366
  %v1361 = vunpack.c.l.b16 %v367
  %v1362 = vunpack.c.h.b16 %v367
  %v1363 = vunpack.c.l.b16 %v368
  %v1364 = vunpack.c.l.b16 %v369
  %v1365 = vunpack.c.h.b16 %v369
  %v1366 = vunpack.c.l.b16 %v370
  %v1367 = vunpack.c.l.b16 %v371
  %v1368 = vunpack.c.h.b16 %v371
  %v1369 = vunpack.c.l.b16 %v372
  %v1370 = vunpack.c.l.b16 %v373
  %v1371 = vunpack.c.h.b16 %v373
  %v1372 = vunpack.c.l.b16 %v374
  %v1373 = vunpack.c.l.b16 %v375
  %v1374 = vunpack.c.h.b16 %v375
  %v1375 = vunpack.c.l.b16 %v376
  %v1376 = vunpack.c.l.b16 %v377
  %v1377 = vunpack.c.h.b16 %v377
  %v1378 = vunpack.c.l.b16 %v378
  %v1379 = vunpack.c.l.b16 %v379
  %v1380 = vunpack.c.h.b16 %v379
  %v1381 = vunpack.c.l.b16 %v380
  %v1382 = vunpack.c.l.b16 %v381
  %v1383 = vunpack.c.h.b16 %v381
  %v1384 = vunpack.c.l.b16 %v382
  %v1385 = vunpack.c.l.b16 %v383
  %v1386 = vunpack.c.h.b16 %v383
  %v1387 = vunpack.c.l.b16 %v384
  %v1388 = vunpack.c.l.b16 %v385
  %v1389 = vunpack.c.h.b16 %v385
  %v1390 = vunpack.c.l.b16 %v386
  %v1391 = vunpack.c.l.b16 %v387
  %v1392 = vunpack.c.h.b16 %v387
  %v1393 = vunpack.c.l.b16 %v388
  %v1394 = vunpack.c.l.b16 %v389
  %v1395 = vunpack.c.h.b16 %v389
  %v1396 = vunpack.c.l.b16 %v390
  %v1397 = vunpack.c.l.b16 %v391
  %v1398 = vunpack.c.h.b16 %v391
  %v1399 = vunpack.c.l.b16 %v392
  %v1400 = vunpack.c.l.b16 %v393
  %v1401 = vunpack.c.h.b16 %v393
  %v1402 = vunpack.c.l.b16 %v394
  %v1403 = vunpack.c.l.b16 %v395
  %v1404 = vunpack.c.h.b16 %v395
  %v1405 = vunpack.c.l.b16 %v396
  %v1406 = vunpack.c.l.b16 %v397
  %v1407 = vunpack.c.h.b16 %v397
  %v1408 = vunpack.c.l.b16 %v398
  %v1409 = vunpack.c.l.b16 %v399
  %v1410 = vunpack.c.h.b16 %v399
  %v1411 = vunpack.c.l.b16 %v400
  %v1412 = vunpack.c.l.b16 %v401
  %v1413 = vunpack.c.h.b16 %v401
  %v1414 = vunpack.c.l.b16 %v402
  %v1415 = vunpack.c.l.b16 %v403
  %v1416 = vunpack.c.h.b16 %v403
  %v1417 = vunpack.c.l.b16 %v404
  %v1418 = vunpack.c.l.b16 %v405
  %v1419 = vunpack.c.h.b16 %v405
  %v1420 = vunpack.c.l.b16 %v406
  %v1421 = vunpack.c.l.b16 %v407
  %v1422 = vunpack.c.h.b16 %v407
  %v1423 = vunpack.c.l.b16 %v408
  %v1424 = vunpack.c.l.b16 %v409
  %v1425 = vunpack.c.h.b16 %v409
  %v1426 = vunpack.c.l.b16 %v410
  %v1427 = vunpack.c.l.b16 %v411
  %v1428 = vunpack.c.h.b16 %v411
  %v1429 = vunpack.c.l.b16 %v412
  %v1430 = vunpack.c.l.b16 %v413
  %v1431 = vunpack.c.h.b16 %v413
  %v1432 = vunpack.c.l.b16 %v414
  %v1433 = vunpack.c.l.b16 %v415
  %v1434 = vunpack.c.h.b16 %v415
  %v1435 = vunpack.c.l.b16 %v416
  %v1436 = vpack.c.b16 %v863, %v860
  %v1437 = vpack.c.b16 %v864, %v861
  %v1438 = vpack.c.b16 %v865, %v862
  %v1439 = vpack.c.b16 %v869, %v866
  %v1440 = vpack.c.b16 %v870, %v867
  %v1441 = vpack.c.b16 %v871, %v868
  %v1442 = vpack.c.b16 %v875, %v872
  %v1443 = vpack.c.b16 %v876, %v873
  %v1444 = vpack.c.b16 %v877, %v874
  %v1445 = vpack.c.b16 %v881, %v878
  %v1446 = vpack.c.b16 %v882, %v879
  %v1447 = vpack.c.b16 %v883, %v880
  %v1448 = vpack.c.b16 %v887, %v884
  %v1449 = vpack.c.b16 %v888, %v885
  %v1450 = vpack.c.b16 %v889, %v886
  %v1451 = vpack.c.b16 %v893, %v890
  %v1452 = vpack.c.b16 %v894, %v891
  %v1453 = vpack.c.b16 %v895, %v892
  %v1454 = vpack.c.b16 %v899, %v896
  %v1455 = vpack.c.b16 %v900, %v897
  %v1456 = vpack.c.b16 %v901, %v898
  %v1457 = vpack.c.b16 %v905, %v902
  %v1458 = vpack.c.b16 %v906, %v903
  %v1459 = vpack.c.b16 %v907, %v904
  %v1460 = vpack.c.b16 %v911, %v908
  %v1461 = vpack.c.b16 %v912, %v909
  %v1462 = vpack.c.b16 %v913, %v910
  %v1463 = vpack.c.b16 %v917, %v914
  %v1464 = vpack.c.b16 %v918, %v915
  %v1465 = vpack.c.b16 %v919, %v916
  %v1466 = vpack.c.b16 %v923, %v920
  %v1467 = vpack.c.b16 %v924, %v921
  %v1468 = vpack.c.b16 %v925, %v922
  %v1469 = vpack.c.b16 %v929, %v926
  %v1470 = vpack.c.b16 %v930, %v927
  %v1471 = vpack.c.b16 %v931, %v928
  %v1472 = vpack.c.b16 %v935, %v932
  %v1473 = vpack.c.b16 %v936, %v933
  %v1474 = vpack.c.b16 %v937, %v934
  %v1475 = vpack.c.b16 %v941, %v938
  %v1476 = vpack.c.b16 %v942, %v939
  %v1477 = vpack.c.b16 %v943, %v940
  %v1478 = vpack.c.b16 %v947, %v944
  %v1479 = vpack.c.b16 %v948, %v945
  %v1480 = vpack.c.b16 %v949, %v946
  %v1481 = vpack.c.b16 %v953, %v950
  %v1482 = vpack.c.b16 %v954, %v951
  %v1483 = vpack.c.b16 %v955, %v952
  %v1484 = vpack.c.b16 %v959, %v956
  %v1485 = vpack.c.b16 %v960, %v957
  %v1486 = vpack.c.b16 %v961, %v958
  %v1487 = vpack.c.b16 %v965, %v962
  %v1488 = vpack.c.b16 %v966, %v963
  %v1489 = vpack.c.b16 %v967, %v964
  %v1490 = vpack.c.b16 %v971, %v968
  %v1491 = vpack.c.b16 %v972, %v969
  %v1492 = vpack.c.b16 %v973, %v970
  %v1493 = vpack.c.b16 %v977, %v974
  %v1494 = vpack.c.b16 %v978, %v975
  %v1495 = vpack.c.b16 %v979, %v976
  %v1496 = vpack.c.b16 %v983, %v980
  %v1497 = vpack.c.b16 %v984, %v981
  %v1498 = vpack.c.b16 %v985, %v982
  %v1499 = vpack.c.b16 %v989, %v986
  %v1500 = vpack.c.b16 %v990, %v987
  %v1501 = vpack.c.b16 %v991, %v988
  %v1502 = vpack.c.b16 %v995, %v992
  %v1503 = vpack.c.b16 %v996, %v993
  %v1504 = vpack.c.b16 %v997, %v994
  %v1505 = vpack.c.b16 %v1001, %v998
  %v1506 = vpack.c.b16 %v1002, %v999
  %v1507 = vpack.c.b16 %v1003, %v1000
  %v1508 = vpack.c.b16 %v1007, %v1004
  %v1509 = vpack.c.b16 %v1008, %v1005
  %v1510 = vpack.c.b16 %v1009, %v1006
  %v1511 = vpack.c.b16 %v1013, %v1010
  %v1512 = vpack.c.b16 %v1014, %v1011
  %v1513 = vpack.c.b16 %v1015, %v1012
  %v1514 = vpack.c.b16 %v1019, %v1016
  %v1515 = vpack.c.b16 %v1020, %v1017
  %v1516 = vpack.c.b16 %v1021, %v1018
  %v1517 = vpack.c.b16 %v1025, %v1022
  %v1518 = vpack.c.b16 %v1026, %v1023
  %v1519 = vpack.c.b16 %v1027, %v1024
  %v1520 = vpack.c.b16 %v1031, %v1028
  %v1521 = vpack.c.b16 %v1032, %v1029
  %v1522 = vpack.c.b16 %v1033, %v1030
  %v1523 = vpack.c.b16 %v1037, %v1034
  %v1524 = vpack.c.b16 %v1038, %v1035
  %v1525 = vpack.c.b16 %v1039, %v1036
  %v1526 = vpack.c.b16 %v1043, %v1040
  %v1527 = vpack.c.b16 %v1044, %v1041
  %v1528 = vpack.c.b16 %v1045, %v1042
  %v1529 = vpack.c.b16 %v1049, %v1046
  %v1530 = vpack.c.b16 %v1050, %v1047
  %v1531 = vpack.c.b16 %v1051, %v1048
  %v1532 = vpack.c.b16 %v1055, %v1052
  %v1533 = vpack.c.b16 %v1056, %v1053
  %v1534 = vpack.c.b16 %v1057, %v1054
  %v1535 = vpack.c.b16 %v1061, %v1058
  %v1536 = vpack.c.b16 %v1062, %v1059
  %v1537 = vpack.c.b16 %v1063, %v1060
  %v1538 = vpack.c.b16 %v1067, %v1064
  %v1539 = vpack.c.b16 %v1068, %v1065
  %v1540 = vpack.c.b16 %v1069, %v1066
  %v1541 = vpack.c.b16 %v1073, %v1070
  %v1542 = vpack.c.b16 %v1074, %v1071
  %v1543 = vpack.c.b16 %v1075, %v1072
  %v1544 = vpack.c.b16 %v1079, %v1076
  %v1545 = vpack.c.b16 %v1080, %v1077
  %v1546 = vpack.c.b16 %v1081, %v1078
  %v1547 = vpack.c.b16 %v1085, %v1082
  %v1548 = vpack.c.b16 %v1086, %v1083
  %v1549 = vpack.c.b16 %v1087, %v1084
  %v1550 = vpack.c.b16 %v1091, %v1088
  %v1551 = vpack.c.b16 %v1092, %v1089
  %v1552 = vpack.c.b16 %v1093, %v1090
  %v1553 = vpack.c.b16 %v1097, %v1094
  %v1554 = vpack.c.b16 %v1098, %v1095
  %v1555 = vpack.c.b16 %v1099, %v1096
  %v1556 = vpack.c.b16 %v1103, %v1100
  %v1557 = vpack.c.b16 %v1104, %v1101
  %v1558 = vpack.c.b16 %v1105, %v1102
  %v1559 = vpack.c.b16 %v1109, %v1106
  %v1560 = vpack.c.b16 %v1110, %v1107
  %v1561 = vpack.c.b16 %v1111, %v1108
  %v1562 = vpack.c.b16 %v1115, %v1112
  %v1563 = vpack.c.b16 %v1116, %v1113
  %v1564 = vpack.c.b16 %v1117, %v1114
  %v1565 = vpack.c.b16 %v1121, %v1118
  %v1566 = vpack.c.b16 %v1122, %v1119
  %v1567 = vpack.c.b16 %v1123, %v1120
  %v1568 = vpack.c.b16 %v1127, %v1124
  %v1569 = vpack.c.b16 %v1128, %v1125
  %v1570 = vpack.c.b16 %v1129, %v1126
  %v1571 = vpack.c.b16 %v1133, %v1130
  %v1572 = vpack.c.b16 %v1134, %v1131
  %v1573 = vpack.c.b16 %v1135, %v1132
  %v1574 = vpack.c.b16 %v1139, %v1136
  %v1575 = vpack.c.b16 %v1140, %v1137
  %v1576 = vpack.c.b16 %v1141, %v1138
  %v1577 = vpack.c.b16 %v1145, %v1142
  %v1578 = vpack.c.b16 %v1146, %v1143
  %v1579 = vpack.c.b16 %v1147, %v1144
  %v1580 = vpack.c.b16 %v1151, %v1148
  %v1581 = vpack.c.b16 %v1152, %v1149
  %v1582 = vpack.c.b16 %v1153, %v1150
  %v1583 = vpack.c.b16 %v1157, %v1154
  %v1584 = vpack.c.b16 %v1158, %v1155
  %v1585 = vpack.c.b16 %v1159, %v1156
  %v1586 = vpack.c.b16 %v1163, %v1160
  %v1587 = vpack.c.b16 %v1164, %v1161
  %v1588 = vpack.c.b16 %v1165, %v1162
  %v1589 = vpack.c.b16 %v1169, %v1166
  %v1590 = vpack.c.b16 %v1170, %v1167
  %v1591 = vpack.c.b16 %v1171, %v1168
  %v1592 = vpack.c.b16 %v1175, %v1172
  %v1593 = vpack.c.b16 %v1176, %v1173
  %v1594 = vpack.c.b16 %v1177, %v1174
  %v1595 = vpack.c.b16 %v1181, %v1178
  %v1596 = vpack.c.b16 %v1182, %v1179
  %v1597 = vpack.c.b16 %v1183, %v1180
  %v1598 = vpack.c.b16 %v1187, %v1184
  %v1599 = vpack.c.b16 %v1188, %v1185
  %v1600 = vpack.c.b16 %v1189, %v1186
  %v1601 = vpack.c.b16 %v1193, %v1190
  %v1602 = vpack.c.b16 %v1194, %v1191
  %v1603 = vpack.c.b16 %v1195, %v1192
  %v1604 = vpack.c.b16 %v1199, %v1196
  %v1605 = vpack.c.b16 %v1200, %v1197
  %v1606 = vpack.c.b16 %v1201, %v1198
  %v1607 = vpack.c.b16 %v1205, %v1202
  %v1608 = vpack.c.b16 %v1206, %v1203
  %v1609 = vpack.c.b16 %v1207, %v1204
  %v1610 = vpack.c.b16 %v1211, %v1208
  %v1611 = vpack.c.b16 %v1212, %v1209
  %v1612 = vpack.c.b16 %v1213, %v1210
  %v1613 = vpack.c.b16 %v1217, %v1214
  %v1614 = vpack.c.b16 %v1218, %v1215
  %v1615 = vpack.c.b16 %v1219, %v1216
  %v1616 = vpack.c.b16 %v1223, %v1220
  %v1617 = vpack.c.b16 %v1224, %v1221
  %v1618 = vpack.c.b16 %v1225, %v1222
  %v1619 = vpack.c.b16 %v1229, %v1226
  %v1620 = vpack.c.b16 %v1230, %v1227
  %v1621 = vpack.c.b16 %v1231, %v1228
  %v1622 = vpack.c.b16 %v1235, %v1232
  %v1623 = vpack.c.b16 %v1236, %v1233
  %v1624 = vpack.c.b16 %v1237, %v1234
  %v1625 = vpack.c.b16 %v1241, %v1238
  %v1626 = vpack.c.b16 %v1242, %v1239
  %v1627 = vpack.c.b16 %v1243, %v1240
  %v1628 = vpack.c.b16 %v1247, %v1244
  %v1629 = vpack.c.b16 %v1248, %v1245
  %v1630 = vpack.c.b16 %v1249, %v1246
  %v1631 = vpack.c.b16 %v1253, %v1250
  %v1632 = vpack.c.b16 %v1254, %v1251
  %v1633 = vpack.c.b16 %v1255, %v1252
  %v1634 = vpack.c.b16 %v1259, %v1256
  %v1635 = vpack.c.b16 %v1260, %v1257
  %v1636 = vpack.c.b16 %v1261, %v1258
  %v1637 = vpack.c.b16 %v1265, %v1262
  %v1638 = vpack.c.b16 %v1266, %v1263
  %v1639 = vpack.c.b16 %v1267, %v1264
  %v1640 = vpack.c.b16 %v1271, %v1268
  %v1641 = vpack.c.b16 %v1272, %v1269
  %v1642 = vpack.c.b16 %v1273, %v1270
  %v1643 = vpack.c.b16 %v1277, %v1274
  %v1644 = vpack.c.b16 %v1278, %v1275
  %v1645 = vpack.c.b16 %v1279, %v1276
  %v1646 = vpack.c.b16 %v1283, %v1280
  %v1647 = vpack.c.b16 %v1284, %v1281
  %v1648 = vpack.c.b16 %v1285, %v1282
  %v1649 = vpack.c.b16 %v1289, %v1286
  %v1650 = vpack.c.b16 %v1290, %v1287
  %v1651 = vpack.c.b16 %v1291, %v1288
  %v1652 = vpack.c.b16 %v1295, %v1292
  %v1653 = vpack.c.b16 %v1296, %v1293
  %v1654 = vpack.c.b16 %v1297, %v1294
  %v1655 = vpack.c.b16 %v1301, %v1298
  %v1656 = vpack.c.b16 %v1302, %v1299
  %v1657 = vpack.c.b16 %v1303, %v1300
  %v1658 = vpack.c.b16 %v1307, %v1304
  %v1659 = vpack.c.b16 %v1308, %v1305
  %v1660 = vpack.c.b16 %v1309, %v1306
  %v1661 = vpack.c.b16 %v1313, %v1310
  %v1662 = vpack.c.b16 %v1314, %v1311
  %v1663 = vpack.c.b16 %v1315, %v1312
  %v1664 = vpack.c.b16 %v1319, %v1316
  %v1665 = vpack.c.b16 %v1320, %v1317
  %v1666 = vpack.c.b16 %v1321, %v1318
  %v1667 = vpack.c.b16 %v1325, %v1322
  %v1668 = vpack.c.b16 %v1326, %v1323
  %v1669 = vpack.c.b16 %v1327, %v1324
  %v1670 = vpack.c.b16 %v1331, %v1328
  %v1671 = vpack.c.b16 %v1332, %v1329
  %v1672 = vpack.c.b16 %v1333, %v1330
  %v1673 = vpack.c.b16 %v1337, %v1334
  %v1674 = vpack.c.b16 %v1338, %v1335
  %v1675 = vpack.c.b16 %v1339, %v1336
  %v1676 = vpack.c.b16 %v1343, %v1340
  %v1677 = vpack.c.b16 %v1344, %v1341
  %v1678 = vpack.c.b16 %v1345, %v1342
  %v1679 = vpack.c.b16 %v1349, %v1346
  %v1680 = vpack.c.b16 %v1350, %v1347
  %v1681 = vpack.c.b16 %v1351, %v1348
  %v1682 = vpack.c.b16 %v1355, %v1352
  %v1683 = vpack.c.b16 %v1356, %v1353
  %v1684 = vpack.c.b16 %v1357, %v1354
  %v1685 = vpack.c.b16 %v1361, %v1358
  %v1686 = vpack.c.b16 %v1362, %v1359
  %v1687 = vpack.c.b16 %v1363, %v1360
  %v1688 = vpack.c.b16 %v1367, %v1364
  %v1689 = vpack.c.b16 %v1368, %v1365
  %v1690 = vpack.c.b16 %v1369, %v1366
  %v1691 = vpack.c.b16 %v1373, %v1370
  %v1692 = vpack.c.b16 %v1374, %v1371
  %v1693 = vpack.c.b16 %v1375, %v1372
  %v1694 = vpack.c.b16 %v1379, %v1376
  %v1695 = vpack.c.b16 %v1380, %v1377
  %v1696 = vpack.c.b16 %v1381, %v1378
  %v1697 = vpack.c.b16 %v1385, %v1382
  %v1698 = vpack.c.b16 %v1386, %v1383
  %v1699 = vpack.c.b16 %v1387, %v1384
  %v1700 = vpack.c.b16 %v1391, %v1388
  %v1701 = vpack.c.b16 %v1392, %v1389
  %v1702 = vpack.c.b16 %v1393, %v1390
  %v1703 = vpack.c.b16 %v1397, %v1394
  %v1704 = vpack.c.b16 %v1398, %v1395
  %v1705 = vpack.c.b16 %v1399, %v1396
  %v1706 = vpack.c.b16 %v1403, %v1400
  %v1707 = vpack.c.b16 %v1404, %v1401
  %v1708 = vpack.c.b16 %v1405, %v1402
  %v1709 = vpack.c.b16 %v1409, %v1406
  %v1710 = vpack.c.b16 %v1410, %v1407
  %v1711 = vpack.c.b16 %v1411, %v1408
  %v1712 = vpack.c.b16 %v1415, %v1412
  %v1713 = vpack.c.b16 %v1416, %v1413
  %v1714 = vpack.c.b16 %v1417, %v1414
  %v1715 = vpack.c.b16 %v1421, %v1418
  %v1716 = vpack.c.b16 %v1422, %v1419
  %v1717 = vpack.c.b16 %v1423, %v1420
  %v1718 = vpack.c.b16 %v1427, %v1424
  %v1719 = vpack.c.b16 %v1428, %v1425
  %v1720 = vpack.c.b16 %v1429, %v1426
  %v1721 = vpack.c.b16 %v1433, %v1430
  %v1722 = vpack.c.b16 %v1434, %v1431
  %v1723 = vpack.c.b16 %v1435, %v1432
  %2012 = vmatprep.subr.bf16.mxu0 %v1437
  %2013 = vmatpush1.bf16.msra.mxu0 %v1436
  %2014 = vmatprep.subr.bf16.mxu0 %v1440
  %2015 = vmatpush1.bf16.msra.mxu0 %v1439
  %2016 = vmatprep.subr.bf16.mxu0 %v1443
  %2017 = vmatpush1.bf16.msra.mxu0 %v1442
  %2018 = vmatprep.subr.bf16.mxu0 %v1446
  %2019 = vmatpush1.bf16.msra.mxu0 %v1445
  %2020 = vmatprep.subr.bf16.mxu0 %v1449
  %2021 = vmatpush1.bf16.msra.mxu0 %v1448
  %2022 = vmatprep.subr.bf16.mxu0 %v1452
  %2023 = vmatpush1.bf16.msra.mxu0 %v1451
  %2024 = vmatprep.subr.bf16.mxu0 %v1455
  %2025 = vmatpush1.bf16.msra.mxu0 %v1454
  %2026 = vmatprep.subr.bf16.mxu0 %v1458
  %2027 = vmatpush1.bf16.msra.mxu0 %v1457
  %2028 = vmatprep.subr.bf16.mxu0 %v1461
  %2029 = vmatpush1.bf16.msra.mxu0 %v1460
  %2030 = vmatprep.subr.bf16.mxu0 %v1464
  %2031 = vmatpush1.bf16.msra.mxu0 %v1463
  %2032 = vmatprep.subr.bf16.mxu0 %v1467
  %2033 = vmatpush1.bf16.msra.mxu0 %v1466
  %2034 = vmatprep.subr.bf16.mxu0 %v1470
  %2035 = vmatpush1.bf16.msra.mxu0 %v1469
  %2036 = vmatprep.subr.bf16.mxu0 %v1473
  %2037 = vmatpush1.bf16.msra.mxu0 %v1472
  %2038 = vmatprep.subr.bf16.mxu0 %v1476
  %2039 = vmatpush1.bf16.msra.mxu0 %v1475
  %2040 = vmatprep.subr.bf16.mxu0 %v1479
  %2041 = vmatpush1.bf16.msra.mxu0 %v1478
  %2042 = vmatprep.subr.bf16.mxu0 %v1482
  %2043 = vmatpush1.bf16.msra.mxu0 %v1481
  %2044 = vmatprep.mubr.bf16.mxu0 %v453
  %2045 = vmatmul.mubr.bf16.gmra.mrb[0].mxu0 %v452
  %v2046 = vpop.f32.mrb[0].mxu0
  %v2047 = vadd.f32 %v422, %v2046
  %v2048 = vpop.f32.mrb[0].mxu0
  %v2049 = vadd.f32 %v426, %v2048
  %v2050 = vpop.f32.mrb[0].mxu0
  %v2051 = vpop.f32.mrb[0].mxu0
  %2052 = vdwg.mxu0
  %2053 = vmatprep.subr.bf16.mxu0 %v1485
  %2054 = vmatpush1.bf16.msra.mxu0 %v1484
  %2055 = vmatprep.subr.bf16.mxu0 %v1488
  %2056 = vmatpush1.bf16.msra.mxu0 %v1487
  %2057 = vmatprep.subr.bf16.mxu0 %v1491
  %2058 = vmatpush1.bf16.msra.mxu0 %v1490
  %2059 = vmatprep.subr.bf16.mxu0 %v1494
  %2060 = vmatpush1.bf16.msra.mxu0 %v1493
  %2061 = vmatprep.subr.bf16.mxu0 %v1497
  %2062 = vmatpush1.bf16.msra.mxu0 %v1496
  %2063 = vmatprep.subr.bf16.mxu0 %v1500
  %2064 = vmatpush1.bf16.msra.mxu0 %v1499
  %2065 = vmatprep.subr.bf16.mxu0 %v1503
  %2066 = vmatpush1.bf16.msra.mxu0 %v1502
  %2067 = vmatprep.subr.bf16.mxu0 %v1506
  %2068 = vmatpush1.bf16.msra.mxu0 %v1505
  %2069 = vmatprep.subr.bf16.mxu0 %v1509
  %2070 = vmatpush1.bf16.msra.mxu0 %v1508
  %2071 = vmatprep.subr.bf16.mxu0 %v1512
  %2072 = vmatpush1.bf16.msra.mxu0 %v1511
  %2073 = vmatprep.subr.bf16.mxu0 %v1515
  %2074 = vmatpush1.bf16.msra.mxu0 %v1514
  %2075 = vmatprep.subr.bf16.mxu0 %v1518
  %2076 = vmatpush1.bf16.msra.mxu0 %v1517
  %2077 = vmatprep.subr.bf16.mxu0 %v1521
  %2078 = vmatpush1.bf16.msra.mxu0 %v1520
  %2079 = vmatprep.subr.bf16.mxu0 %v1524
  %2080 = vmatpush1.bf16.msra.mxu0 %v1523
  %2081 = vmatprep.subr.bf16.mxu0 %v1527
  %2082 = vmatpush1.bf16.msra.mxu0 %v1526
  %2083 = vmatprep.subr.bf16.mxu0 %v1530
  %2084 = vmatpush1.bf16.msra.mxu0 %v1529
  %2085 = vmatprep.mubr.bf16.mxu0 %v455
  %2086 = vmatmul.mubr.bf16.gmra.mrb[0].mxu0 %v454
  %v2087 = vpop.f32.mrb[0].mxu0
  %v2088 = vadd.f32 %v2047, %v2087
  %v2089 = vpop.f32.mrb[0].mxu0
  %v2090 = vadd.f32 %v2049, %v2089
  %v2091 = vpop.f32.mrb[0].mxu0
  %v2092 = vpop.f32.mrb[0].mxu0
  %2093 = vdwg.mxu0
  %2094 = vmatprep.subr.bf16.mxu0 %v1533
  %2095 = vmatpush1.bf16.msra.mxu0 %v1532
  %2096 = vmatprep.subr.bf16.mxu0 %v1536
  %2097 = vmatpush1.bf16.msra.mxu0 %v1535
  %2098 = vmatprep.subr.bf16.mxu0 %v1539
  %2099 = vmatpush1.bf16.msra.mxu0 %v1538
  %2100 = vmatprep.subr.bf16.mxu0 %v1542
  %2101 = vmatpush1.bf16.msra.mxu0 %v1541
  %2102 = vmatprep.subr.bf16.mxu0 %v1545
  %2103 = vmatpush1.bf16.msra.mxu0 %v1544
  %2104 = vmatprep.subr.bf16.mxu0 %v1548
  %2105 = vmatpush1.bf16.msra.mxu0 %v1547
  %2106 = vmatprep.subr.bf16.mxu0 %v1551
  %2107 = vmatpush1.bf16.msra.mxu0 %v1550
  %2108 = vmatprep.subr.bf16.mxu0 %v1554
  %2109 = vmatpush1.bf16.msra.mxu0 %v1553
  %2110 = vmatprep.subr.bf16.mxu0 %v1557
  %2111 = vmatpush1.bf16.msra.mxu0 %v1556
  %2112 = vmatprep.subr.bf16.mxu0 %v1560
  %2113 = vmatpush1.bf16.msra.mxu0 %v1559
  %2114 = vmatprep.subr.bf16.mxu0 %v1563
  %2115 = vmatpush1.bf16.msra.mxu0 %v1562
  %2116 = vmatprep.subr.bf16.mxu0 %v1566
  %2117 = vmatpush1.bf16.msra.mxu0 %v1565
  %2118 = vmatprep.subr.bf16.mxu0 %v1569
  %2119 = vmatpush1.bf16.msra.mxu0 %v1568
  %2120 = vmatprep.subr.bf16.mxu0 %v1572
  %2121 = vmatpush1.bf16.msra.mxu0 %v1571
  %2122 = vmatprep.subr.bf16.mxu0 %v1575
  %2123 = vmatpush1.bf16.msra.mxu0 %v1574
  %2124 = vmatprep.subr.bf16.mxu0 %v1578
  %2125 = vmatpush1.bf16.msra.mxu0 %v1577
  %2126 = vmatprep.mubr.bf16.mxu0 %v457
  %2127 = vmatmul.mubr.bf16.gmra.mrb[0].mxu0 %v456
  %v2128 = vpop.f32.mrb[0].mxu0
  %v2129 = vadd.f32 %v2088, %v2128
  %v2130 = vpop.f32.mrb[0].mxu0
  %v2131 = vadd.f32 %v2090, %v2130
  %v2132 = vpop.f32.mrb[0].mxu0
  %v2133 = vpop.f32.mrb[0].mxu0
  %2134 = vdwg.mxu0
  %2135 = vmatprep.subr.bf16.mxu0 %v1581
  %2136 = vmatpush1.bf16.msra.mxu0 %v1580
  %2137 = vmatprep.subr.bf16.mxu0 %v1584
  %2138 = vmatpush1.bf16.msra.mxu0 %v1583
  %2139 = vmatprep.subr.bf16.mxu0 %v1587
  %2140 = vmatpush1.bf16.msra.mxu0 %v1586
  %2141 = vmatprep.subr.bf16.mxu0 %v1590
  %2142 = vmatpush1.bf16.msra.mxu0 %v1589
  %2143 = vmatprep.subr.bf16.mxu0 %v1593
  %2144 = vmatpush1.bf16.msra.mxu0 %v1592
  %2145 = vmatprep.subr.bf16.mxu0 %v1596
  %2146 = vmatpush1.bf16.msra.mxu0 %v1595
  %2147 = vmatprep.subr.bf16.mxu0 %v1599
  %2148 = vmatpush1.bf16.msra.mxu0 %v1598
  %2149 = vmatprep.subr.bf16.mxu0 %v1602
  %2150 = vmatpush1.bf16.msra.mxu0 %v1601
  %2151 = vmatprep.subr.bf16.mxu0 %v1605
  %2152 = vmatpush1.bf16.msra.mxu0 %v1604
  %2153 = vmatprep.subr.bf16.mxu0 %v1608
  %2154 = vmatpush1.bf16.msra.mxu0 %v1607
  %2155 = vmatprep.subr.bf16.mxu0 %v1611
  %2156 = vmatpush1.bf16.msra.mxu0 %v1610
  %2157 = vmatprep.subr.bf16.mxu0 %v1614
  %2158 = vmatpush1.bf16.msra.mxu0 %v1613
  %2159 = vmatprep.subr.bf16.mxu0 %v1617
  %2160 = vmatpush1.bf16.msra.mxu0 %v1616
  %2161 = vmatprep.subr.bf16.mxu0 %v1620
  %2162 = vmatpush1.bf16.msra.mxu0 %v1619
  %2163 = vmatprep.subr.bf16.mxu0 %v1623
  %2164 = vmatpush1.bf16.msra.mxu0 %v1622
  %2165 = vmatprep.subr.bf16.mxu0 %v1626
  %2166 = vmatpush1.bf16.msra.mxu0 %v1625
  %2167 = vmatprep.mubr.bf16.mxu0 %v459
  %2168 = vmatmul.mubr.bf16.gmra.mrb[0].mxu0 %v458
  %v2169 = vpop.f32.mrb[0].mxu0
  %v2170 = vadd.f32 %v2129, %v2169
  %v2171 = vpop.f32.mrb[0].mxu0
  %v2172 = vadd.f32 %v2131, %v2171
  %v2173 = vpop.f32.mrb[0].mxu0
  %v2174 = vpop.f32.mrb[0].mxu0
  %2175 = vdwg.mxu0
  %2176 = vmatprep.subr.bf16.mxu0 %v1629
  %2177 = vmatpush1.bf16.msra.mxu0 %v1628
  %2178 = vmatprep.subr.bf16.mxu0 %v1632
  %2179 = vmatpush1.bf16.msra.mxu0 %v1631
  %2180 = vmatprep.subr.bf16.mxu0 %v1635
  %2181 = vmatpush1.bf16.msra.mxu0 %v1634
  %2182 = vmatprep.subr.bf16.mxu0 %v1638
  %2183 = vmatpush1.bf16.msra.mxu0 %v1637
  %2184 = vmatprep.subr.bf16.mxu0 %v1641
  %2185 = vmatpush1.bf16.msra.mxu0 %v1640
  %2186 = vmatprep.subr.bf16.mxu0 %v1644
  %2187 = vmatpush1.bf16.msra.mxu0 %v1643
  %2188 = vmatprep.subr.bf16.mxu0 %v1647
  %2189 = vmatpush1.bf16.msra.mxu0 %v1646
  %2190 = vmatprep.subr.bf16.mxu0 %v1650
  %2191 = vmatpush1.bf16.msra.mxu0 %v1649
  %2192 = vmatprep.subr.bf16.mxu0 %v1653
  %2193 = vmatpush1.bf16.msra.mxu0 %v1652
  %2194 = vmatprep.subr.bf16.mxu0 %v1656
  %2195 = vmatpush1.bf16.msra.mxu0 %v1655
  %2196 = vmatprep.subr.bf16.mxu0 %v1659
  %2197 = vmatpush1.bf16.msra.mxu0 %v1658
  %2198 = vmatprep.subr.bf16.mxu0 %v1662
  %2199 = vmatpush1.bf16.msra.mxu0 %v1661
  %2200 = vmatprep.subr.bf16.mxu0 %v1665
  %2201 = vmatpush1.bf16.msra.mxu0 %v1664
  %2202 = vmatprep.subr.bf16.mxu0 %v1668
  %2203 = vmatpush1.bf16.msra.mxu0 %v1667
  %2204 = vmatprep.subr.bf16.mxu0 %v1671
  %2205 = vmatpush1.bf16.msra.mxu0 %v1670
  %2206 = vmatprep.subr.bf16.mxu0 %v1674
  %2207 = vmatpush1.bf16.msra.mxu0 %v1673
  %2208 = vmatprep.mubr.bf16.mxu0 %v461
  %2209 = vmatmul.mubr.bf16.gmra.mrb[0].mxu0 %v460
  %v2210 = vpop.f32.mrb[0].mxu0
  %v2211 = vadd.f32 %v2170, %v2210
  %v2212 = vpop.f32.mrb[0].mxu0
  %v2213 = vadd.f32 %v2172, %v2212
  %v2214 = vpop.f32.mrb[0].mxu0
  %v2215 = vpop.f32.mrb[0].mxu0
  %2216 = vdwg.mxu0
  %2217 = vmatprep.subr.bf16.mxu0 %v1677
  %2218 = vmatpush1.bf16.msra.mxu0 %v1676
  %2219 = vmatprep.subr.bf16.mxu0 %v1680
  %2220 = vmatpush1.bf16.msra.mxu0 %v1679
  %2221 = vmatprep.subr.bf16.mxu0 %v1683
  %2222 = vmatpush1.bf16.msra.mxu0 %v1682
  %2223 = vmatprep.subr.bf16.mxu0 %v1686
  %2224 = vmatpush1.bf16.msra.mxu0 %v1685
  %2225 = vmatprep.subr.bf16.mxu0 %v1689
  %2226 = vmatpush1.bf16.msra.mxu0 %v1688
  %2227 = vmatprep.subr.bf16.mxu0 %v1692
  %2228 = vmatpush1.bf16.msra.mxu0 %v1691
  %2229 = vmatprep.subr.bf16.mxu0 %v1695
  %2230 = vmatpush1.bf16.msra.mxu0 %v1694
  %2231 = vmatprep.subr.bf16.mxu0 %v1698
  %2232 = vmatpush1.bf16.msra.mxu0 %v1697
  %2233 = vmatprep.subr.bf16.mxu0 %v1701
  %2234 = vmatpush1.bf16.msra.mxu0 %v1700
  %2235 = vmatprep.subr.bf16.mxu0 %v1704
  %2236 = vmatpush1.bf16.msra.mxu0 %v1703
  %2237 = vmatprep.subr.bf16.mxu0 %v1707
  %2238 = vmatpush1.bf16.msra.mxu0 %v1706
  %2239 = vmatprep.subr.bf16.mxu0 %v1710
  %2240 = vmatpush1.bf16.msra.mxu0 %v1709
  %2241 = vmatprep.subr.bf16.mxu0 %v1713
  %2242 = vmatpush1.bf16.msra.mxu0 %v1712
  %2243 = vmatprep.subr.bf16.mxu0 %v1716
  %2244 = vmatpush1.bf16.msra.mxu0 %v1715
  %2245 = vmatprep.subr.bf16.mxu0 %v1719
  %2246 = vmatpush1.bf16.msra.mxu0 %v1718
  %2247 = vmatprep.subr.bf16.mxu0 %v1722
  %2248 = vmatpush1.bf16.msra.mxu0 %v1721
  %2249 = vmatprep.mubr.bf16.mxu0 %v463
  %2250 = vmatmul.mubr.bf16.gmra.mrb[0].mxu0 %v462
  %v2251 = vpop.f32.mrb[0].mxu0
  %v2252 = vadd.f32 %v2211, %v2251
  %v2253 = vpop.f32.mrb[0].mxu0
  %v2254 = vadd.f32 %v2213, %v2253
  %v2255 = vpop.f32.mrb[0].mxu0
  %v2256 = vpop.f32.mrb[0].mxu0
  %2257 = vdwg.mxu0
  %2258 = vmatprep.subr.bf16.mxu0 0
  %2259 = vmatpush1.bf16.msra.mxu0 %v1438
  %2260 = vmatprep.subr.bf16.mxu0 0
  %2261 = vmatpush1.bf16.msra.mxu0 %v1441
  %2262 = vmatprep.subr.bf16.mxu0 0
  %2263 = vmatpush1.bf16.msra.mxu0 %v1444
  %2264 = vmatprep.subr.bf16.mxu0 0
  %2265 = vmatpush1.bf16.msra.mxu0 %v1447
  %2266 = vmatprep.subr.bf16.mxu0 0
  %2267 = vmatpush1.bf16.msra.mxu0 %v1450
  %2268 = vmatprep.subr.bf16.mxu0 0
  %2269 = vmatpush1.bf16.msra.mxu0 %v1453
  %2270 = vmatprep.subr.bf16.mxu0 0
  %2271 = vmatpush1.bf16.msra.mxu0 %v1456
  %2272 = vmatprep.subr.bf16.mxu0 0
  %2273 = vmatpush1.bf16.msra.mxu0 %v1459
  %2274 = vmatprep.subr.bf16.mxu0 0
  %2275 = vmatpush1.bf16.msra.mxu0 %v1462
  %2276 = vmatprep.subr.bf16.mxu0 0
  %2277 = vmatpush1.bf16.msra.mxu0 %v1465
  %2278 = vmatprep.subr.bf16.mxu0 0
  %2279 = vmatpush1.bf16.msra.mxu0 %v1468
  %2280 = vmatprep.subr.bf16.mxu0 0
  %2281 = vmatpush1.bf16.msra.mxu0 %v1471
  %2282 = vmatprep.subr.bf16.mxu0 0
  %2283 = vmatpush1.bf16.msra.mxu0 %v1474
  %2284 = vmatprep.subr.bf16.mxu0 0
  %2285 = vmatpush1.bf16.msra.mxu0 %v1477
  %2286 = vmatprep.subr.bf16.mxu0 0
  %2287 = vmatpush1.bf16.msra.mxu0 %v1480
  %2288 = vmatprep.subr.bf16.mxu0 0
  %2289 = vmatpush1.bf16.msra.mxu0 %v1483
  %2290 = vmatprep.mubr.bf16.mxu0 %v453
  %2291 = vmatmul.mubr.bf16.gmra.mrb[0].mxu0 %v452
  %v2292 = vpop.f32.mrb[0].mxu0
  %v2293 = vadd.f32 %v430, %v2292
  %v2294 = vpop.f32.mrb[0].mxu0
  %v2295 = vpop.f32.mrb[0].mxu0
  %v2296 = vpop.f32.mrb[0].mxu0
  %2297 = vdwg.mxu0
  %2298 = vmatprep.subr.bf16.mxu0 0
  %2299 = vmatpush1.bf16.msra.mxu0 %v1486
  %2300 = vmatprep.subr.bf16.mxu0 0
  %2301 = vmatpush1.bf16.msra.mxu0 %v1489
  %2302 = vmatprep.subr.bf16.mxu0 0
  %2303 = vmatpush1.bf16.msra.mxu0 %v1492
  %2304 = vmatprep.subr.bf16.mxu0 0
  %2305 = vmatpush1.bf16.msra.mxu0 %v1495
  %2306 = vmatprep.subr.bf16.mxu0 0
  %2307 = vmatpush1.bf16.msra.mxu0 %v1498
  %2308 = vmatprep.subr.bf16.mxu0 0
  %2309 = vmatpush1.bf16.msra.mxu0 %v1501
  %2310 = vmatprep.subr.bf16.mxu0 0
  %2311 = vmatpush1.bf16.msra.mxu0 %v1504
  %2312 = vmatprep.subr.bf16.mxu0 0
  %2313 = vmatpush1.bf16.msra.mxu0 %v1507
  %2314 = vmatprep.subr.bf16.mxu0 0
  %2315 = vmatpush1.bf16.msra.mxu0 %v1510
  %2316 = vmatprep.subr.bf16.mxu0 0
  %2317 = vmatpush1.bf16.msra.mxu0 %v1513
  %2318 = vmatprep.subr.bf16.mxu0 0
  %2319 = vmatpush1.bf16.msra.mxu0 %v1516
  %2320 = vmatprep.subr.bf16.mxu0 0
  %2321 = vmatpush1.bf16.msra.mxu0 %v1519
  %2322 = vmatprep.subr.bf16.mxu0 0
  %2323 = vmatpush1.bf16.msra.mxu0 %v1522
  %2324 = vmatprep.subr.bf16.mxu0 0
  %2325 = vmatpush1.bf16.msra.mxu0 %v1525
  %2326 = vmatprep.subr.bf16.mxu0 0
  %2327 = vmatpush1.bf16.msra.mxu0 %v1528
  %2328 = vmatprep.subr.bf16.mxu0 0
  %2329 = vmatpush1.bf16.msra.mxu0 %v1531
  %2330 = vmatprep.mubr.bf16.mxu0 %v455
  %2331 = vmatmul.mubr.bf16.gmra.mrb[0].mxu0 %v454
  %v2332 = vpop.f32.mrb[0].mxu0
  %v2333 = vadd.f32 %v2293, %v2332
  %v2334 = vpop.f32.mrb[0].mxu0
  %v2335 = vpop.f32.mrb[0].mxu0
  %v2336 = vpop.f32.mrb[0].mxu0
  %2337 = vdwg.mxu0
  %2338 = vmatprep.subr.bf16.mxu0 0
  %2339 = vmatpush1.bf16.msra.mxu0 %v1534
  %2340 = vmatprep.subr.bf16.mxu0 0
  %2341 = vmatpush1.bf16.msra.mxu0 %v1537
  %2342 = vmatprep.subr.bf16.mxu0 0
  %2343 = vmatpush1.bf16.msra.mxu0 %v1540
  %2344 = vmatprep.subr.bf16.mxu0 0
  %2345 = vmatpush1.bf16.msra.mxu0 %v1543
  %2346 = vmatprep.subr.bf16.mxu0 0
  %2347 = vmatpush1.bf16.msra.mxu0 %v1546
  %2348 = vmatprep.subr.bf16.mxu0 0
  %2349 = vmatpush1.bf16.msra.mxu0 %v1549
  %2350 = vmatprep.subr.bf16.mxu0 0
  %2351 = vmatpush1.bf16.msra.mxu0 %v1552
  %2352 = vmatprep.subr.bf16.mxu0 0
  %2353 = vmatpush1.bf16.msra.mxu0 %v1555
  %2354 = vmatprep.subr.bf16.mxu0 0
  %2355 = vmatpush1.bf16.msra.mxu0 %v1558
  %2356 = vmatprep.subr.bf16.mxu0 0
  %2357 = vmatpush1.bf16.msra.mxu0 %v1561
  %2358 = vmatprep.subr.bf16.mxu0 0
  %2359 = vmatpush1.bf16.msra.mxu0 %v1564
  %2360 = vmatprep.subr.bf16.mxu0 0
  %2361 = vmatpush1.bf16.msra.mxu0 %v1567
  %2362 = vmatprep.subr.bf16.mxu0 0
  %2363 = vmatpush1.bf16.msra.mxu0 %v1570
  %2364 = vmatprep.subr.bf16.mxu0 0
  %2365 = vmatpush1.bf16.msra.mxu0 %v1573
  %2366 = vmatprep.subr.bf16.mxu0 0
  %2367 = vmatpush1.bf16.msra.mxu0 %v1576
  %2368 = vmatprep.subr.bf16.mxu0 0
  %2369 = vmatpush1.bf16.msra.mxu0 %v1579
  %2370 = vmatprep.mubr.bf16.mxu0 %v457
  %2371 = vmatmul.mubr.bf16.gmra.mrb[0].mxu0 %v456
  %v2372 = vpop.f32.mrb[0].mxu0
  %v2373 = vadd.f32 %v2333, %v2372
  %v2374 = vpop.f32.mrb[0].mxu0
  %v2375 = vpop.f32.mrb[0].mxu0
  %v2376 = vpop.f32.mrb[0].mxu0
  %2377 = vdwg.mxu0
  %2378 = vmatprep.subr.bf16.mxu0 0
  %2379 = vmatpush1.bf16.msra.mxu0 %v1582
  %2380 = vmatprep.subr.bf16.mxu0 0
  %2381 = vmatpush1.bf16.msra.mxu0 %v1585
  %2382 = vmatprep.subr.bf16.mxu0 0
  %2383 = vmatpush1.bf16.msra.mxu0 %v1588
  %2384 = vmatprep.subr.bf16.mxu0 0
  %2385 = vmatpush1.bf16.msra.mxu0 %v1591
  %2386 = vmatprep.subr.bf16.mxu0 0
  %2387 = vmatpush1.bf16.msra.mxu0 %v1594
  %2388 = vmatprep.subr.bf16.mxu0 0
  %2389 = vmatpush1.bf16.msra.mxu0 %v1597
  %2390 = vmatprep.subr.bf16.mxu0 0
  %2391 = vmatpush1.bf16.msra.mxu0 %v1600
  %2392 = vmatprep.subr.bf16.mxu0 0
  %2393 = vmatpush1.bf16.msra.mxu0 %v1603
  %2394 = vmatprep.subr.bf16.mxu0 0
  %2395 = vmatpush1.bf16.msra.mxu0 %v1606
  %2396 = vmatprep.subr.bf16.mxu0 0
  %2397 = vmatpush1.bf16.msra.mxu0 %v1609
  %2398 = vmatprep.subr.bf16.mxu0 0
  %2399 = vmatpush1.bf16.msra.mxu0 %v1612
  %2400 = vmatprep.subr.bf16.mxu0 0
  %2401 = vmatpush1.bf16.msra.mxu0 %v1615
  %2402 = vmatprep.subr.bf16.mxu0 0
  %2403 = vmatpush1.bf16.msra.mxu0 %v1618
  %2404 = vmatprep.subr.bf16.mxu0 0
  %2405 = vmatpush1.bf16.msra.mxu0 %v1621
  %2406 = vmatprep.subr.bf16.mxu0 0
  %2407 = vmatpush1.bf16.msra.mxu0 %v1624
  %2408 = vmatprep.subr.bf16.mxu0 0
  %2409 = vmatpush1.bf16.msra.mxu0 %v1627
  %2410 = vmatprep.mubr.bf16.mxu0 %v459
  %2411 = vmatmul.mubr.bf16.gmra.mrb[0].mxu0 %v458
  %v2412 = vpop.f32.mrb[0].mxu0
  %v2413 = vadd.f32 %v2373, %v2412
  %v2414 = vpop.f32.mrb[0].mxu0
  %v2415 = vpop.f32.mrb[0].mxu0
  %v2416 = vpop.f32.mrb[0].mxu0
  %2417 = vdwg.mxu0
  %2418 = vmatprep.subr.bf16.mxu0 0
  %2419 = vmatpush1.bf16.msra.mxu0 %v1630
  %2420 = vmatprep.subr.bf16.mxu0 0
  %2421 = vmatpush1.bf16.msra.mxu0 %v1633
  %2422 = vmatprep.subr.bf16.mxu0 0
  %2423 = vmatpush1.bf16.msra.mxu0 %v1636
  %2424 = vmatprep.subr.bf16.mxu0 0
  %2425 = vmatpush1.bf16.msra.mxu0 %v1639
  %2426 = vmatprep.subr.bf16.mxu0 0
  %2427 = vmatpush1.bf16.msra.mxu0 %v1642
  %2428 = vmatprep.subr.bf16.mxu0 0
  %2429 = vmatpush1.bf16.msra.mxu0 %v1645
  %2430 = vmatprep.subr.bf16.mxu0 0
  %2431 = vmatpush1.bf16.msra.mxu0 %v1648
  %2432 = vmatprep.subr.bf16.mxu0 0
  %2433 = vmatpush1.bf16.msra.mxu0 %v1651
  %2434 = vmatprep.subr.bf16.mxu0 0
  %2435 = vmatpush1.bf16.msra.mxu0 %v1654
  %2436 = vmatprep.subr.bf16.mxu0 0
  %2437 = vmatpush1.bf16.msra.mxu0 %v1657
  %2438 = vmatprep.subr.bf16.mxu0 0
  %2439 = vmatpush1.bf16.msra.mxu0 %v1660
  %2440 = vmatprep.subr.bf16.mxu0 0
  %2441 = vmatpush1.bf16.msra.mxu0 %v1663
  %2442 = vmatprep.subr.bf16.mxu0 0
  %2443 = vmatpush1.bf16.msra.mxu0 %v1666
  %2444 = vmatprep.subr.bf16.mxu0 0
  %2445 = vmatpush1.bf16.msra.mxu0 %v1669
  %2446 = vmatprep.subr.bf16.mxu0 0
  %2447 = vmatpush1.bf16.msra.mxu0 %v1672
  %2448 = vmatprep.subr.bf16.mxu0 0
  %2449 = vmatpush1.bf16.msra.mxu0 %v1675
  %2450 = vmatprep.mubr.bf16.mxu0 %v461
  %2451 = vmatmul.mubr.bf16.gmra.mrb[0].mxu0 %v460
  %v2452 = vpop.f32.mrb[0].mxu0
  %v2453 = vadd.f32 %v2413, %v2452
  %v2454 = vpop.f32.mrb[0].mxu0
  %v2455 = vpop.f32.mrb[0].mxu0
  %v2456 = vpop.f32.mrb[0].mxu0
  %2457 = vdwg.mxu0
  %2458 = vmatprep.subr.bf16.mxu0 0
  %2459 = vmatpush1.bf16.msra.mxu0 %v1678
  %2460 = vmatprep.subr.bf16.mxu0 0
  %2461 = vmatpush1.bf16.msra.mxu0 %v1681
  %2462 = vmatprep.subr.bf16.mxu0 0
  %2463 = vmatpush1.bf16.msra.mxu0 %v1684
  %2464 = vmatprep.subr.bf16.mxu0 0
  %2465 = vmatpush1.bf16.msra.mxu0 %v1687
  %2466 = vmatprep.subr.bf16.mxu0 0
  %2467 = vmatpush1.bf16.msra.mxu0 %v1690
  %2468 = vmatprep.subr.bf16.mxu0 0
  %2469 = vmatpush1.bf16.msra.mxu0 %v1693
  %2470 = vmatprep.subr.bf16.mxu0 0
  %2471 = vmatpush1.bf16.msra.mxu0 %v1696
  %2472 = vmatprep.subr.bf16.mxu0 0
  %2473 = vmatpush1.bf16.msra.mxu0 %v1699
  %2474 = vmatprep.subr.bf16.mxu0 0
  %2475 = vmatpush1.bf16.msra.mxu0 %v1702
  %2476 = vmatprep.subr.bf16.mxu0 0
  %2477 = vmatpush1.bf16.msra.mxu0 %v1705
  %2478 = vmatprep.subr.bf16.mxu0 0
  %2479 = vmatpush1.bf16.msra.mxu0 %v1708
  %2480 = vmatprep.subr.bf16.mxu0 0
  %2481 = vmatpush1.bf16.msra.mxu0 %v1711
  %2482 = vmatprep.subr.bf16.mxu0 0
  %2483 = vmatpush1.bf16.msra.mxu0 %v1714
  %2484 = vmatprep.subr.bf16.mxu0 0
  %2485 = vmatpush1.bf16.msra.mxu0 %v1717
  %2486 = vmatprep.subr.bf16.mxu0 0
  %2487 = vmatpush1.bf16.msra.mxu0 %v1720
  %2488 = vmatprep.subr.bf16.mxu0 0
  %2489 = vmatpush1.bf16.msra.mxu0 %v1723
  %2490 = vmatprep.mubr.bf16.mxu0 %v463
  %2491 = vmatmul.mubr.bf16.gmra.mrb[0].mxu0 %v462
  %v2492 = vpop.f32.mrb[0].mxu0
  %v2493 = vadd.f32 %v2453, %v2492
  %v2494 = vpop.f32.mrb[0].mxu0
  %v2495 = vpop.f32.mrb[0].mxu0
  %v2496 = vpop.f32.mrb[0].mxu0
  %2497 = vdwg.mxu0
  %v2498 = vmax.f32 %v2252, 0.0
  %v2499 = vmax.f32 %v2254, 0.0
  %v2500 = vmax.f32 %v2493, 0.0
  %v2501 = vpack.c.bf16 %v2498, %v2498
  %v2502 = vpack.c.bf16 %v2499, %v2499
  %v2503 = vpack.c.bf16 %v2500, %v2500
  %v2504 = vld [vmem:[%s3] sm:$0xf]
  %v2505 = vld [vmem:[%s3 + $0x4] sm:$0xf]
  %v2506 = vld [vmem:[%s3 + $0x8] sm:$0xf]
  %v2507 = vld [vmem:[%s3 + $0xc] sm:$0xf]
  %v2508 = vld [vmem:[%s3 + $0x10] sm:$0xf]
  %v2509 = vld [vmem:[%s3 + $0x14] sm:$0xf]
  %v2510 = vld [vmem:[%s3 + $0x18] sm:$0xf]
  %v2511 = vld [vmem:[%s3 + $0x1c] sm:$0xf]
  %v2512 = vld [vmem:[%s3 + $0x20] sm:$0xf]
  %v2513 = vld [vmem:[%s3 + $0x24] sm:$0xf]
  %v2514 = vld [vmem:[%s3 + $0x28] sm:$0xf]
  %v2515 = vld [vmem:[%s3 + $0x2c] sm:$0xf]
  %v2516 = vld [vmem:[%s3 + $0x30] sm:$0xf]
  %v2517 = vld [vmem:[%s3 + $0x34] sm:$0xf]
  %v2518 = vld [vmem:[%s3 + $0x38] sm:$0xf]
  %v2519 = vld [vmem:[%s3 + $0x3c] sm:$0xf]
  %v2520 = vld [vmem:[%s3 + $0x40] sm:$0xf]
  %v2521 = vld [vmem:[%s3 + $0x44] sm:$0xf]
  %v2522 = vld [vmem:[%s3 + $0x48] sm:$0xf]
  %v2523 = vld [vmem:[%s3 + $0x4c] sm:$0xf]
  %v2524 = vld [vmem:[%s3 + $0x50] sm:$0xf]
  %v2525 = vld [vmem:[%s3 + $0x54] sm:$0xf]
  %v2526 = vld [vmem:[%s3 + $0x58] sm:$0xf]
  %v2527 = vld [vmem:[%s3 + $0x5c] sm:$0xf]
  %v2528 = vld [vmem:[%s3 + $0x60] sm:$0xf]
  %v2529 = vld [vmem:[%s3 + $0x64] sm:$0xf]
  %v2530 = vld [vmem:[%s3 + $0x68] sm:$0xf]
  %v2531 = vld [vmem:[%s3 + $0x6c] sm:$0xf]
  %v2532 = vld [vmem:[%s3 + $0x70] sm:$0xf]
  %v2533 = vld [vmem:[%s3 + $0x74] sm:$0xf]
  %v2534 = vld [vmem:[%s3 + $0x78] sm:$0xf]
  %v2535 = vld [vmem:[%s3 + $0x7c] sm:$0xf]
  %v2536 = vld [vmem:[%s3 + $0x80] sm:$0xf]
  %v2537 = vld [vmem:[%s3 + $0x84] sm:$0xf]
  %v2538 = vld [vmem:[%s3 + $0x88] sm:$0xf]
  %v2539 = vld [vmem:[%s3 + $0x8c] sm:$0xf]
  %v2540 = vld [vmem:[%s3 + $0x90] sm:$0xf]
  %v2541 = vld [vmem:[%s3 + $0x94] sm:$0xf]
  %v2542 = vld [vmem:[%s3 + $0x98] sm:$0xf]
  %v2543 = vld [vmem:[%s3 + $0x9c] sm:$0xf]
  %v2544 = vld [vmem:[%s3 + $0xa0] sm:$0xf]
  %v2545 = vld [vmem:[%s3 + $0xa4] sm:$0xf]
  %v2546 = vld [vmem:[%s3 + $0xa8] sm:$0xf]
  %v2547 = vld [vmem:[%s3 + $0xac] sm:$0xf]
  %v2548 = vld [vmem:[%s3 + $0xb0] sm:$0xf]
  %v2549 = vld [vmem:[%s3 + $0xb4] sm:$0xf]
  %v2550 = vld [vmem:[%s3 + $0xb8] sm:$0xf]
  %v2551 = vld [vmem:[%s3 + $0xbc] sm:$0xf]
  %v2552 = vld [vmem:[%s4] sm:$0x1]
  %v2554 = vlaneseq
  %v2555 = vshrl.u32 %v2554, 7
  %v2556 = vsub.s32 0, %v2555
  %v2557 = vrot.slane %v2552, %v2556
  %v2607 = vunpack.c.l.b16 %v2504
  %v2608 = vunpack.c.l.b16 %v2505
  %v2609 = vunpack.c.l.b16 %v2506
  %v2610 = vunpack.c.l.b16 %v2507
  %v2611 = vunpack.c.l.b16 %v2508
  %v2612 = vunpack.c.l.b16 %v2509
  %v2613 = vunpack.c.l.b16 %v2510
  %v2614 = vunpack.c.l.b16 %v2511
  %v2615 = vunpack.c.l.b16 %v2512
  %v2616 = vunpack.c.l.b16 %v2513
  %v2617 = vunpack.c.l.b16 %v2514
  %v2618 = vunpack.c.l.b16 %v2515
  %v2619 = vunpack.c.l.b16 %v2516
  %v2620 = vunpack.c.l.b16 %v2517
  %v2621 = vunpack.c.l.b16 %v2518
  %v2622 = vunpack.c.l.b16 %v2519
  %v2623 = vunpack.c.l.b16 %v2520
  %v2624 = vunpack.c.l.b16 %v2521
  %v2625 = vunpack.c.l.b16 %v2522
  %v2626 = vunpack.c.l.b16 %v2523
  %v2627 = vunpack.c.l.b16 %v2524
  %v2628 = vunpack.c.l.b16 %v2525
  %v2629 = vunpack.c.l.b16 %v2526
  %v2630 = vunpack.c.l.b16 %v2527
  %v2631 = vunpack.c.l.b16 %v2528
  %v2632 = vunpack.c.l.b16 %v2529
  %v2633 = vunpack.c.l.b16 %v2530
  %v2634 = vunpack.c.l.b16 %v2531
  %v2635 = vunpack.c.l.b16 %v2532
  %v2636 = vunpack.c.l.b16 %v2533
  %v2637 = vunpack.c.l.b16 %v2534
  %v2638 = vunpack.c.l.b16 %v2535
  %v2639 = vunpack.c.l.b16 %v2536
  %v2640 = vunpack.c.l.b16 %v2537
  %v2641 = vunpack.c.l.b16 %v2538
  %v2642 = vunpack.c.l.b16 %v2539
  %v2643 = vunpack.c.l.b16 %v2540
  %v2644 = vunpack.c.l.b16 %v2541
  %v2645 = vunpack.c.l.b16 %v2542
  %v2646 = vunpack.c.l.b16 %v2543
  %v2647 = vunpack.c.l.b16 %v2544
  %v2648 = vunpack.c.l.b16 %v2545
  %v2649 = vunpack.c.l.b16 %v2546
  %v2650 = vunpack.c.l.b16 %v2547
  %v2651 = vunpack.c.l.b16 %v2548
  %v2652 = vunpack.c.l.b16 %v2549
  %v2653 = vunpack.c.l.b16 %v2550
  %v2654 = vunpack.c.l.b16 %v2551
  %v2655 = vpack.c.b16 %v2608, %v2607
  %v2656 = vpack.c.b16 %v2610, %v2609
  %v2657 = vpack.c.b16 %v2612, %v2611
  %v2658 = vpack.c.b16 %v2614, %v2613
  %v2659 = vpack.c.b16 %v2616, %v2615
  %v2660 = vpack.c.b16 %v2618, %v2617
  %v2661 = vpack.c.b16 %v2620, %v2619
  %v2662 = vpack.c.b16 %v2622, %v2621
  %v2663 = vpack.c.b16 %v2624, %v2623
  %v2664 = vpack.c.b16 %v2626, %v2625
  %v2665 = vpack.c.b16 %v2628, %v2627
  %v2666 = vpack.c.b16 %v2630, %v2629
  %v2667 = vpack.c.b16 %v2632, %v2631
  %v2668 = vpack.c.b16 %v2634, %v2633
  %v2669 = vpack.c.b16 %v2636, %v2635
  %v2670 = vpack.c.b16 %v2638, %v2637
  %v2671 = vpack.c.b16 %v2640, %v2639
  %v2672 = vpack.c.b16 %v2642, %v2641
  %v2673 = vpack.c.b16 %v2644, %v2643
  %v2674 = vpack.c.b16 %v2646, %v2645
  %v2675 = vpack.c.b16 %v2648, %v2647
  %v2676 = vpack.c.b16 %v2650, %v2649
  %v2677 = vpack.c.b16 %v2652, %v2651
  %v2678 = vpack.c.b16 %v2654, %v2653
  %2703 = vmatprep.subr.bf16.mxu0 0
  %2704 = vmatpush1.bf16.msra.mxu0 %v2655
  %2705 = vmatprep.subr.bf16.mxu0 0
  %2706 = vmatpush1.bf16.msra.mxu0 %v2656
  %2707 = vmatprep.subr.bf16.mxu0 0
  %2708 = vmatpush1.bf16.msra.mxu0 %v2657
  %2709 = vmatprep.subr.bf16.mxu0 0
  %2710 = vmatpush1.bf16.msra.mxu0 %v2658
  %2711 = vmatprep.subr.bf16.mxu0 0
  %2712 = vmatpush1.bf16.msra.mxu0 %v2659
  %2713 = vmatprep.subr.bf16.mxu0 0
  %2714 = vmatpush1.bf16.msra.mxu0 %v2660
  %2715 = vmatprep.subr.bf16.mxu0 0
  %2716 = vmatpush1.bf16.msra.mxu0 %v2661
  %2717 = vmatprep.subr.bf16.mxu0 0
  %2718 = vmatpush1.bf16.msra.mxu0 %v2662
  %2719 = vmatprep.subr.bf16.mxu0 0
  %2720 = vmatpush1.bf16.msra.mxu0 %v2663
  %2721 = vmatprep.subr.bf16.mxu0 0
  %2722 = vmatpush1.bf16.msra.mxu0 %v2664
  %2723 = vmatprep.subr.bf16.mxu0 0
  %2724 = vmatpush1.bf16.msra.mxu0 %v2665
  %2725 = vmatprep.subr.bf16.mxu0 0
  %2726 = vmatpush1.bf16.msra.mxu0 %v2666
  %2727 = vmatprep.subr.bf16.mxu0 0
  %2728 = vmatpush1.bf16.msra.mxu0 %v2667
  %2729 = vmatprep.subr.bf16.mxu0 0
  %2730 = vmatpush1.bf16.msra.mxu0 %v2668
  %2731 = vmatprep.subr.bf16.mxu0 0
  %2732 = vmatpush1.bf16.msra.mxu0 %v2669
  %2733 = vmatprep.subr.bf16.mxu0 0
  %2734 = vmatpush1.bf16.msra.mxu0 %v2670
  %2735 = vmatprep.mubr.bf16.mxu0 %v2502
  %2736 = vmatmul.mubr.bf16.gmra.mrb[0].mxu0 %v2501
  %v2737 = vpop.f32.mrb[0].mxu0
  %v2738 = vadd.f32 %v2557, %v2737
  %v2739 = vpop.f32.mrb[0].mxu0
  %v2740 = vpop.f32.mrb[0].mxu0
  %v2741 = vpop.f32.mrb[0].mxu0
  %2742 = vdwg.mxu0
  %2743 = vmatprep.subr.bf16.mxu0 0
  %2744 = vmatpush1.bf16.msra.mxu0 %v2671
  %2745 = vmatprep.subr.bf16.mxu0 0
  %2746 = vmatpush1.bf16.msra.mxu0 %v2672
  %2747 = vmatprep.subr.bf16.mxu0 0
  %2748 = vmatpush1.bf16.msra.mxu0 %v2673
  %2749 = vmatprep.subr.bf16.mxu0 0
  %2750 = vmatpush1.bf16.msra.mxu0 %v2674
  %2751 = vmatprep.subr.bf16.mxu0 0
  %2752 = vmatpush1.bf16.msra.mxu0 %v2675
  %2753 = vmatprep.subr.bf16.mxu0 0
  %2754 = vmatpush1.bf16.msra.mxu0 %v2676
  %2755 = vmatprep.subr.bf16.mxu0 0
  %2756 = vmatpush1.bf16.msra.mxu0 %v2677
  %2757 = vmatprep.subr.bf16.mxu0 0
  %2758 = vmatpush1.bf16.msra.mxu0 %v2678
  %2759 = vmatprep.subr.bf16.mxu0 0
  %2760 = vmatpush1.bf16.msra.mxu0 0
  %2761 = vmatprep.subr.bf16.mxu0 0
  %2762 = vmatpush1.bf16.msra.mxu0 0
  %2763 = vmatprep.subr.bf16.mxu0 0
  %2764 = vmatpush1.bf16.msra.mxu0 0
  %2765 = vmatprep.subr.bf16.mxu0 0
  %2766 = vmatpush1.bf16.msra.mxu0 0
  %2767 = vmatprep.subr.bf16.mxu0 0
  %2768 = vmatpush1.bf16.msra.mxu0 0
  %2769 = vmatprep.subr.bf16.mxu0 0
  %2770 = vmatpush1.bf16.msra.mxu0 0
  %2771 = vmatprep.subr.bf16.mxu0 0
  %2772 = vmatpush1.bf16.msra.mxu0 0
  %2773 = vmatprep.subr.bf16.mxu0 0
  %2774 = vmatpush1.bf16.msra.mxu0 0
  %2775 = vmatprep.mubr.bf16.mxu0 0
  %2776 = vmatmul.mubr.bf16.gmra.mrb[0].mxu0 %v2503
  %v2777 = vpop.f32.mrb[0].mxu0
  %v2778 = vadd.f32 %v2738, %v2777
  %v2779 = vpop.f32.mrb[0].mxu0
  %v2780 = vpop.f32.mrb[0].mxu0
  %v2781 = vpop.f32.mrb[0].mxu0
  %2782 = vdwg.mxu0
  %v2783 = vmax.f32 %v2778, 0.0
  %v2784 = vpack.c.bf16 %v2783, %v2783
  %v2785 = vld [vmem:[%s5] sm:$0xf]
  %v2786 = vld [vmem:[%s5 + $0x4] sm:$0xf]
  %v2787 = vld [vmem:[%s5 + $0x8] sm:$0xf]
  %v2788 = vld [vmem:[%s5 + $0xc] sm:$0xf]
  %v2789 = vld [vmem:[%s5 + $0x10] sm:$0xf]
  %v2790 = vld [vmem:[%s5 + $0x14] sm:$0xf]
  %v2791 = vld [vmem:[%s5 + $0x18] sm:$0xf]
  %v2792 = vld [vmem:[%s5 + $0x1c] sm:$0xf]
  %v2793 = vld [vmem:[%s5 + $0x20] sm:$0xf]
  %v2794 = vld [vmem:[%s5 + $0x24] sm:$0xf]
  %v2795 = vld [vmem:[%s5 + $0x28] sm:$0xf]
  %v2796 = vld [vmem:[%s5 + $0x2c] sm:$0xf]
  %v2797 = vld [vmem:[%s5 + $0x30] sm:$0xf]
  %v2798 = vld [vmem:[%s5 + $0x34] sm:$0xf]
  %v2799 = vld [vmem:[%s5 + $0x38] sm:$0xf]
  %v2800 = vld [vmem:[%s5 + $0x3c] sm:$0xf]
  %v2801 = vld [vmem:[%s6] sm:$0x1]
  %v2803 = vlaneseq
  %v2804 = vshrl.u32 %v2803, 7
  %v2805 = vsub.s32 0, %v2804
  %v2806 = vrot.slane %v2801, %v2805
  %v2824 = vunpack.c.l.b16 %v2785
  %v2825 = vunpack.c.l.b16 %v2786
  %v2826 = vunpack.c.l.b16 %v2787
  %v2827 = vunpack.c.l.b16 %v2788
  %v2828 = vunpack.c.l.b16 %v2789
  %v2829 = vunpack.c.l.b16 %v2790
  %v2830 = vunpack.c.l.b16 %v2791
  %v2831 = vunpack.c.l.b16 %v2792
  %v2832 = vunpack.c.l.b16 %v2793
  %v2833 = vunpack.c.l.b16 %v2794
  %v2834 = vunpack.c.l.b16 %v2795
  %v2835 = vunpack.c.l.b16 %v2796
  %v2836 = vunpack.c.l.b16 %v2797
  %v2837 = vunpack.c.l.b16 %v2798
  %v2838 = vunpack.c.l.b16 %v2799
  %v2839 = vunpack.c.l.b16 %v2800
  %v2840 = vpack.c.b16 %v2825, %v2824
  %v2841 = vpack.c.b16 %v2827, %v2826
  %v2842 = vpack.c.b16 %v2829, %v2828
  %v2843 = vpack.c.b16 %v2831, %v2830
  %v2844 = vpack.c.b16 %v2833, %v2832
  %v2845 = vpack.c.b16 %v2835, %v2834
  %v2846 = vpack.c.b16 %v2837, %v2836
  %v2847 = vpack.c.b16 %v2839, %v2838
  %2856 = vmatprep.subr.bf16.mxu0 0
  %2857 = vmatpush1.bf16.msra.mxu0 %v2840
  %2858 = vmatprep.subr.bf16.mxu0 0
  %2859 = vmatpush1.bf16.msra.mxu0 %v2841
  %2860 = vmatprep.subr.bf16.mxu0 0
  %2861 = vmatpush1.bf16.msra.mxu0 %v2842
  %2862 = vmatprep.subr.bf16.mxu0 0
  %2863 = vmatpush1.bf16.msra.mxu0 %v2843
  %2864 = vmatprep.subr.bf16.mxu0 0
  %2865 = vmatpush1.bf16.msra.mxu0 %v2844
  %2866 = vmatprep.subr.bf16.mxu0 0
  %2867 = vmatpush1.bf16.msra.mxu0 %v2845
  %2868 = vmatprep.subr.bf16.mxu0 0
  %2869 = vmatpush1.bf16.msra.mxu0 %v2846
  %2870 = vmatprep.subr.bf16.mxu0 0
  %2871 = vmatpush1.bf16.msra.mxu0 %v2847
  %2872 = vmatprep.subr.bf16.mxu0 0
  %2873 = vmatpush1.bf16.msra.mxu0 0
  %2874 = vmatprep.subr.bf16.mxu0 0
  %2875 = vmatpush1.bf16.msra.mxu0 0
  %2876 = vmatprep.subr.bf16.mxu0 0
  %2877 = vmatpush1.bf16.msra.mxu0 0
  %2878 = vmatprep.subr.bf16.mxu0 0
  %2879 = vmatpush1.bf16.msra.mxu0 0
  %2880 = vmatprep.subr.bf16.mxu0 0
  %2881 = vmatpush1.bf16.msra.mxu0 0
  %2882 = vmatprep.subr.bf16.mxu0 0
  %2883 = vmatpush1.bf16.msra.mxu0 0
  %2884 = vmatprep.subr.bf16.mxu0 0
  %2885 = vmatpush1.bf16.msra.mxu0 0
  %2886 = vmatprep.subr.bf16.mxu0 0
  %2887 = vmatpush1.bf16.msra.mxu0 0
  %2888 = vmatprep.mubr.bf16.mxu0 0
  %2889 = vmatmul.mubr.bf16.gmra.mrb[0].mxu0 %v2784
  %v2890 = vpop.f32.mrb[0].mxu0
  %v2891 = vadd.f32 %v2806, %v2890
  %v2892 = vpop.f32.mrb[0].mxu0
  %v2893 = vpop.f32.mrb[0].mxu0
  %v2894 = vpop.f32.mrb[0].mxu0
  %2895 = vdwg.mxu0
  %v2896 = vlaneseq
  %v2897 = vand.u32 %v2896, 127
  %vm2898 = vcmp.lt.s32.totalorder %v2897, 6
  %v2899 = vsel %vm2898, %v2891, -1e+30
  %2900 = vmax.xlane.f32.xlu0 %v2899
  %v2901 = vpop.xlane.xlu0 %2900
  %v2902 = vsub.f32 %v2899, %v2901
  %v2903 = vmul.f32 %v2902, 1.442695
  %v2904 = vpow.pop %v2903
  %2905 = vadd.xlane.f32.xlu0 %v2904
  %v2906 = vpop.xlane.xlu0 %2905
  %v2907 = vrcp.pop %v2906
  %v2908 = vmul.f32 %v2904, %v2907
  %2909 = vst [vmem:[%s7] sm:$0xff] %v2908
  // Predicated region
  $region30: #{conv_net_forward.7} parent=0 // pred_check
    _
  $region31: #{conv_net_forward.7} parent=0 // pred_check_branch
    %2911 = sbr.rel (0) target = $region33
  $region32: #{conv_net_forward.7} parent=0 // pred_region
    _
  $region33: #{conv_net_forward.7} parent=0 // pred_fallthru
    _
  // Predicated region
  $region34: #{conv_net_forward.7} parent=0 // pred_check
    _
  $region35: #{conv_net_forward.7} parent=0 // pred_check_branch
    %2913 = sbr.rel (0) target = $region37
  $region36: #{conv_net_forward.7} parent=0 // pred_region
    _
  $region37: #{conv_net_forward.7} parent=0 // pred_fallthru
    _

</llo_original>
